<compile_context>
chip_gen: v7x
topology: tpu7x:2x2x1
jax: 0.10.0
libtpu: 0.0.40
codegen_flags: <defaults>
</compile_context>

<pallas_src>
import math

import jax
import jax.numpy as jnp
from jax.experimental import pallas as pl
from jax.experimental.pallas import tpu as pltpu

# Pin matmuls to full f32 accuracy so the Pallas kernel and the XLA reference
# agree (XLA's DEFAULT f32 dot precision on TPU is bf16-grade).
jax.config.update("jax_default_matmul_precision", "highest")

# ---- model hyper-parameters (small, consistent with the module) -------------
SEQ = 8           # tokens per sequence
D_MODEL = 32
N_HEAD = 4
DIM_FF = 64
HEAD_DIM = D_MODEL // N_HEAD
LN_EPS = 1e-5
LEAKY_SLOPE = 0.01        # nn.LeakyReLU() default
MASK_NEG = -1e30          # finite "minus infinity" for off-block attention

# ---- packed parameter slab layout (rows x 3*D_MODEL lanes) -------------------
_W3 = 3 * D_MODEL                       # 96 lanes
_ROW_WQKV = 0                           # (D, 3D)
_ROW_WO = D_MODEL                       # (D, D)  in cols [0, D)
_ROW_W1 = 2 * D_MODEL                   # (D, F)  in cols [0, F)
_ROW_W2 = 3 * D_MODEL                   # (F, D)  in cols [0, D)
_ROW_BIAS = 3 * D_MODEL + DIM_FF        # 8 rows: b_qkv, bo, b1, b2, g1, be1, g2, be2
_SLAB_ROWS = _ROW_BIAS + 8              # 168 (multiple of 8 sublanes)


def _layernorm(x, gamma, beta):
    mu = jnp.mean(x, axis=-1, keepdims=True)
    var = jnp.mean((x - mu) * (x - mu), axis=-1, keepdims=True)   # biased, like PyTorch
    return (x - mu) * jax.lax.rsqrt(var + LN_EPS) * gamma + beta


def encoder_layer_kernel(x_ref, mask_ref, p_ref, o_ref):
    D, F, H, S, hd = D_MODEL, DIM_FF, N_HEAD, SEQ, HEAD_DIM
    BS = x_ref.shape[0]                  # B*S rows (batch folded into sublanes)
    x = x_ref[...]                       # (BS, D) f32

    # ---- static, sublane-aligned slices of the packed parameter slab ---------
    w_qkv = p_ref[_ROW_WQKV:_ROW_WQKV + D, :]            # (D, 3D), q cols pre-scaled
    wo = p_ref[_ROW_WO:_ROW_WO + D, 0:D]                 # (D, D)
    w1 = p_ref[_ROW_W1:_ROW_W1 + D, 0:F]                 # (D, F)
    w2 = p_ref[_ROW_W2:_ROW_W2 + F, 0:D]                 # (F, D)
    bias_blk = p_ref[_ROW_BIAS:_ROW_BIAS + 8, :]         # (8, 3D), one aligned load
    b_qkv = bias_blk[0:1, :]
    bo = bias_blk[1:2, 0:D]
    b1 = bias_blk[2:3, 0:F]
    b2 = bias_blk[3:4, 0:D]
    g1 = bias_blk[4:5, 0:D]
    be1 = bias_blk[5:6, 0:D]
    g2 = bias_blk[6:7, 0:D]
    be2 = bias_blk[7:8, 0:D]

    # ---- multi-head self attention (q = k = v = x), all batches at once ------
    # fused QKV projection over the whole (B*S, D) batch; 1/sqrt(head_dim) is
    # folded into the packed q weights/bias at pack time.
    qkv = jnp.dot(x, w_qkv, preferred_element_type=jnp.float32) + b_qkv   # (BS, 3D)
    q = qkv[:, 0:D]
    k = qkv[:, D:2 * D]
    v = qkv[:, 2 * D:3 * D]

    # stack (head, batch, seq) along sublanes -> (H*BS, hd) = (128, 8)
    q_s = jnp.concatenate([q[:, h * hd:(h + 1) * hd] for h in range(H)], axis=0)
    k_s = jnp.concatenate([k[:, h * hd:(h + 1) * hd] for h in range(H)], axis=0)
    v_s = jnp.concatenate([v[:, h * hd:(h + 1) * hd] for h in range(H)], axis=0)

    # one MXU push for all (batch, head) score blocks: (128,8) @ (8,128).
    # Contract the last dims directly (no explicit k transpose).
    s = jax.lax.dot_general(q_s, k_s, (((1,), (1,)), ((), ())),
                            preferred_element_type=jnp.float32)          # (128, 128)
    # block-diagonal additive mask (wrapper-built): attn_mask on same-(h,b)
    # blocks, -1e30 elsewhere -> exp underflows to exactly 0 off-block.
    s = s + mask_ref[...]

    # one full-width softmax; exact divide (EUP/VPU is not the bottleneck here)
    m = jnp.max(s, axis=-1, keepdims=True)
    e = jnp.exp(s - m)
    p = e / jnp.sum(e, axis=-1, keepdims=True)

    attn_s = jnp.dot(p, v_s, preferred_element_type=jnp.float32)         # (128, 8)

    # regroup heads back onto lanes -> (BS, D), then output projection
    attn = jnp.concatenate([attn_s[h * BS:(h + 1) * BS, :] for h in range(H)],
                           axis=-1)                                       # (BS, D)
    attn = jnp.dot(attn, wo, preferred_element_type=jnp.float32) + bo

    # inputs_are_labels=True: no residual around attention; dropout == identity (eval)
    x1 = _layernorm(attn, g1, be1)

    # ---- feed-forward block ---------------------------------------------------
    h1 = jnp.dot(x1, w1, preferred_element_type=jnp.float32) + b1
    h1 = jnp.where(h1 >= 0, h1, LEAKY_SLOPE * h1)         # LeakyReLU
    y = x1 + jnp.dot(h1, w2, preferred_element_type=jnp.float32) + b2
    y = _layernorm(y, g2, be2)

    # TODO(synk): output last dim is 32 (<128 lanes) -> masked vst; repacking y
    # into a lane-dense (BS*D/128, 128) slab needs an in-kernel relayout that
    # costs about as much as the 4 KiB store it would save, so it is skipped.
    # TODO(synk): bf16 MXU operands (perf review item) deferred to keep tight
    # numeric parity with the f32 reference.
    o_ref[...] = y


def pack_params(p):
    """Pack all 16 parameter arrays into a single (168, 96) f32 slab.

    Called ONCE (hoisted out of the forward path). The attention scale
    1/sqrt(head_dim) is folded into the q columns of w_qkv / b_qkv here.
    """
    D, F = D_MODEL, DIM_FF
    scale = 1.0 / math.sqrt(HEAD_DIM)
    slab = jnp.zeros((_SLAB_ROWS, _W3), jnp.float32)
    w_qkv = jnp.concatenate([p["wq"] * scale, p["wk"], p["wv"]], axis=1)   # (D, 3D)
    b_qkv = jnp.concatenate([p["bq"] * scale, p["bk"], p["bv"]], axis=1)   # (1, 3D)
    slab = slab.at[_ROW_WQKV:_ROW_WQKV + D, :].set(w_qkv)
    slab = slab.at[_ROW_WO:_ROW_WO + D, 0:D].set(p["wo"])
    slab = slab.at[_ROW_W1:_ROW_W1 + D, 0:F].set(p["w1"])
    slab = slab.at[_ROW_W2:_ROW_W2 + F, 0:D].set(p["w2"])
    r = _ROW_BIAS
    slab = slab.at[r + 0, :].set(b_qkv[0])
    slab = slab.at[r + 1, 0:D].set(p["bo"][0])
    slab = slab.at[r + 2, 0:F].set(p["b1"][0])
    slab = slab.at[r + 3, 0:D].set(p["b2"][0])
    slab = slab.at[r + 4, 0:D].set(p["g1"][0])
    slab = slab.at[r + 5, 0:D].set(p["be1"][0])
    slab = slab.at[r + 6, 0:D].set(p["g2"][0])
    slab = slab.at[r + 7, 0:D].set(p["be2"][0])
    return slab


def _block_diag_mask(attn_mask, n_head):
    """(B, S, S) additive mask -> (H*B*S, H*B*S) block-diagonal mask, (h, b) order."""
    B, S, _ = attn_mask.shape
    G = n_head * B
    tiled = jnp.tile(attn_mask.astype(jnp.float32), (n_head, 1, 1))       # (G, S, S)
    big = jnp.full((G, S, G, S), MASK_NEG, jnp.float32)
    idx = jnp.arange(G)
    big = big.at[idx, :, idx, :].set(tiled)
    return big.reshape(G * S, G * S)


def transformer_encoder_layer(x, attn_mask, slab):
    """x: (S, D) or (B, S, D) f32; attn_mask: (S, S) or (B, S, S) additive f32 mask."""
    squeeze = x.ndim == 2
    if squeeze:
        x = x[None]
        attn_mask = attn_mask[None]
    B, S, D = x.shape
    x2 = x.reshape(B * S, D)                       # batch folded into sublanes
    big_mask = _block_diag_mask(attn_mask, N_HEAD) # (H*B*S, H*B*S)
    G = N_HEAD * B * S

    out = pl.pallas_call(
        encoder_layer_kernel,
        out_shape=jax.ShapeDtypeStruct((B * S, D), jnp.float32),
        grid=(1,),                                              # one fat program
        in_specs=[
            pl.BlockSpec((B * S, D), lambda i: (0, 0)),         # all sequences at once
            pl.BlockSpec((G, G), lambda i: (0, 0)),             # block-diagonal mask
            pl.BlockSpec(slab.shape, lambda i: (0, 0)),         # packed params (one DMA)
        ],
        out_specs=pl.BlockSpec((B * S, D), lambda i: (0, 0)),
        compiler_params=pltpu.CompilerParams(
            dimension_semantics=("arbitrary",)),
    )(x2, big_mask, slab)
    out = out.reshape(B, S, D)
    return out[0] if squeeze else out


# ---- parameter init + pure-JAX reference -------------------------------------
def _init_params(key):
    ks = jax.random.split(key, 12)

    def w(k, shape, scale=0.1):
        return (scale * jax.random.normal(k, shape)).astype(jnp.float32)

    D, F = D_MODEL, DIM_FF
    return {
        "wq": w(ks[0], (D, D)), "bq": w(ks[1], (1, D)),
        "wk": w(ks[2], (D, D)), "bk": w(ks[3], (1, D)),
        "wv": w(ks[4], (D, D)), "bv": w(ks[5], (1, D)),
        "wo": w(ks[6], (D, D)), "bo": w(ks[7], (1, D)),
        "w1": w(ks[8], (D, F)), "b1": w(ks[9], (1, F)),
        "w2": w(ks[10], (F, D)), "b2": w(ks[11], (1, D)),
        "g1": jnp.ones((1, D), jnp.float32), "be1": jnp.zeros((1, D), jnp.float32),
        "g2": jnp.ones((1, D), jnp.float32), "be2": jnp.zeros((1, D), jnp.float32),
    }


def _reference(x, mask, p):
    """Pure-JAX reference mirroring the PyTorch forward (eval mode, batch=1)."""
    q = x @ p["wq"] + p["bq"]
    k = x @ p["wk"] + p["bk"]
    v = x @ p["wv"] + p["bv"]
    scale = 1.0 / math.sqrt(HEAD_DIM)
    outs = []
    for h in range(N_HEAD):
        sl = slice(h * HEAD_DIM, (h + 1) * HEAD_DIM)
        s = (q[:, sl] * scale) @ k[:, sl].T + mask
        pr = jax.nn.softmax(s, axis=-1)
        outs.append(pr @ v[:, sl])
    a = jnp.concatenate(outs, axis=-1) @ p["wo"] + p["bo"]
    x1 = _layernorm(a, p["g1"], p["be1"])
    h1 = x1 @ p["w1"] + p["b1"]
    h1 = jnp.where(h1 >= 0, h1, LEAKY_SLOPE * h1)
    y = x1 + (h1 @ p["w2"] + p["b2"])
    return _layernorm(y, p["g2"], p["be2"])


if __name__ == "__main__":
    key = jax.random.PRNGKey(0)
    kx, km, kp = jax.random.split(key, 3)
    B = 4
    src_labels = jax.random.normal(kx, (B, SEQ, D_MODEL), dtype=jnp.float32)
    attn_mask = (0.1 * jax.random.normal(km, (B, SEQ, SEQ))).astype(jnp.float32)
    params = _init_params(kp)
    slab = pack_params(params)   # hoisted: packed once, reused every forward call

    out = jax.block_until_ready(transformer_encoder_layer(src_labels, attn_mask, slab))

    ref = jnp.stack([_reference(src_labels[b], attn_mask[b], params) for b in range(B)])
    assert out.shape == (B, SEQ, D_MODEL)
    max_err = float(jnp.max(jnp.abs(out - ref)))
    assert jnp.allclose(out, ref, atol=2e-3, rtol=2e-3), (
        f"mismatch vs reference (max abs err {max_err})")
    print("KERNEL_OK")
</pallas_src>

<mosaic_0001>
module attributes {stable_mosaic.version = 11 : i64} {
  func.func @encoder_layer_kernel(%arg0: i32, %arg1: memref<32x32xf32, #tpu.memory_space<vmem>>, %arg2: memref<128x128xf32, #tpu.memory_space<vmem>>, %arg3: memref<168x96xf32, #tpu.memory_space<vmem>>, %arg4: memref<32x32xf32, #tpu.memory_space<vmem>>) attributes {dimension_semantics = [#tpu.dimension_semantics<arbitrary>], iteration_bounds = array<i64: 1>, scalar_prefetch = 0 : i64, scratch_operands = 0 : i64, tpu.core_type = #tpu.core_type<tc>, window_params = [{pipeline_mode = #tpu.pipeline_mode<synchronous>, transform_indices = @transform_0, window_bounds = array<i64: 32, 32>}, {pipeline_mode = #tpu.pipeline_mode<synchronous>, transform_indices = @transform_1, window_bounds = array<i64: 128, 128>}, {pipeline_mode = #tpu.pipeline_mode<synchronous>, transform_indices = @transform_2, window_bounds = array<i64: 168, 96>}, {pipeline_mode = #tpu.pipeline_mode<synchronous>, transform_indices = @transform_3, window_bounds = array<i64: 32, 32>}]} {
    %c0 = arith.constant 0 : index
    %c0_0 = arith.constant 0 : index
    %0 = vector.load %arg1[%c0, %c0_0] : memref<32x32xf32, #tpu.memory_space<vmem>>, vector<32x32xf32>
    %c0_1 = arith.constant 0 : index
    %c0_2 = arith.constant 0 : index
    %1 = vector.load %arg3[%c0_1, %c0_2] : memref<168x96xf32, #tpu.memory_space<vmem>>, vector<32x96xf32>
    %c32 = arith.constant 32 : index
    %c0_3 = arith.constant 0 : index
    %2 = vector.load %arg3[%c32, %c0_3] : memref<168x96xf32, #tpu.memory_space<vmem>>, vector<32x32xf32>
    %c64 = arith.constant 64 : index
    %c0_4 = arith.constant 0 : index
    %3 = vector.load %arg3[%c64, %c0_4] : memref<168x96xf32, #tpu.memory_space<vmem>>, vector<32x64xf32>
    %c96 = arith.constant 96 : index
    %c0_5 = arith.constant 0 : index
    %4 = vector.load %arg3[%c96, %c0_5] : memref<168x96xf32, #tpu.memory_space<vmem>>, vector<64x32xf32>
    %c160 = arith.constant 160 : index
    %c0_6 = arith.constant 0 : index
    %5 = vector.load %arg3[%c160, %c0_6] : memref<168x96xf32, #tpu.memory_space<vmem>>, vector<8x96xf32>
    %6 = vector.extract_strided_slice %5 {offsets = [0, 0], sizes = [1, 96], strides = [1, 1]} : vector<8x96xf32> to vector<1x96xf32>
    %7 = vector.extract_strided_slice %5 {offsets = [1, 0], sizes = [1, 32], strides = [1, 1]} : vector<8x96xf32> to vector<1x32xf32>
    %8 = vector.extract_strided_slice %5 {offsets = [2, 0], sizes = [1, 64], strides = [1, 1]} : vector<8x96xf32> to vector<1x64xf32>
    %9 = vector.extract_strided_slice %5 {offsets = [3, 0], sizes = [1, 32], strides = [1, 1]} : vector<8x96xf32> to vector<1x32xf32>
    %10 = vector.extract_strided_slice %5 {offsets = [4, 0], sizes = [1, 32], strides = [1, 1]} : vector<8x96xf32> to vector<1x32xf32>
    %11 = vector.extract_strided_slice %5 {offsets = [5, 0], sizes = [1, 32], strides = [1, 1]} : vector<8x96xf32> to vector<1x32xf32>
    %12 = vector.extract_strided_slice %5 {offsets = [6, 0], sizes = [1, 32], strides = [1, 1]} : vector<8x96xf32> to vector<1x32xf32>
    %13 = vector.extract_strided_slice %5 {offsets = [7, 0], sizes = [1, 32], strides = [1, 1]} : vector<8x96xf32> to vector<1x32xf32>
    %cst = arith.constant dense<0.000000e+00> : vector<32x96xf32>
    %14 = tpu.matmul %0, %1, %cst {dimension_numbers = #tpu.dot_dimension_numbers<[1], [0], [0], [1], [0, 0, 1, 1], [], []>, precision = #tpu.contract_precision<fp32>} : vector<32x32xf32>, vector<32x96xf32>, vector<32x96xf32> -> vector<32x96xf32>
    %15 = vector.broadcast %6 : vector<1x96xf32> to vector<32x96xf32>
    %16 = arith.addf %14, %15 : vector<32x96xf32>
    %17 = vector.extract_strided_slice %16 {offsets = [0, 0], sizes = [32, 32], strides = [1, 1]} : vector<32x96xf32> to vector<32x32xf32>
    %18 = vector.extract_strided_slice %16 {offsets = [0, 32], sizes = [32, 32], strides = [1, 1]} : vector<32x96xf32> to vector<32x32xf32>
    %19 = vector.extract_strided_slice %16 {offsets = [0, 64], sizes = [32, 32], strides = [1, 1]} : vector<32x96xf32> to vector<32x32xf32>
    %20 = vector.extract_strided_slice %17 {offsets = [0, 0], sizes = [32, 8], strides = [1, 1]} : vector<32x32xf32> to vector<32x8xf32>
    %21 = vector.extract_strided_slice %17 {offsets = [0, 8], sizes = [32, 8], strides = [1, 1]} : vector<32x32xf32> to vector<32x8xf32>
    %22 = vector.extract_strided_slice %17 {offsets = [0, 16], sizes = [32, 8], strides = [1, 1]} : vector<32x32xf32> to vector<32x8xf32>
    %23 = vector.extract_strided_slice %17 {offsets = [0, 24], sizes = [32, 8], strides = [1, 1]} : vector<32x32xf32> to vector<32x8xf32>
    %24 = tpu.concatenate %20, %21, %22, %23 in 0 : vector<32x8xf32>, vector<32x8xf32>, vector<32x8xf32>, vector<32x8xf32> -> vector<128x8xf32>
    %25 = vector.extract_strided_slice %18 {offsets = [0, 0], sizes = [32, 8], strides = [1, 1]} : vector<32x32xf32> to vector<32x8xf32>
    %26 = vector.extract_strided_slice %18 {offsets = [0, 8], sizes = [32, 8], strides = [1, 1]} : vector<32x32xf32> to vector<32x8xf32>
    %27 = vector.extract_strided_slice %18 {offsets = [0, 16], sizes = [32, 8], strides = [1, 1]} : vector<32x32xf32> to vector<32x8xf32>
    %28 = vector.extract_strided_slice %18 {offsets = [0, 24], sizes = [32, 8], strides = [1, 1]} : vector<32x32xf32> to vector<32x8xf32>
    %29 = tpu.concatenate %25, %26, %27, %28 in 0 : vector<32x8xf32>, vector<32x8xf32>, vector<32x8xf32>, vector<32x8xf32> -> vector<128x8xf32>
    %30 = vector.extract_strided_slice %19 {offsets = [0, 0], sizes = [32, 8], strides = [1, 1]} : vector<32x32xf32> to vector<32x8xf32>
    %31 = vector.extract_strided_slice %19 {offsets = [0, 8], sizes = [32, 8], strides = [1, 1]} : vector<32x32xf32> to vector<32x8xf32>
    %32 = vector.extract_strided_slice %19 {offsets = [0, 16], sizes = [32, 8], strides = [1, 1]} : vector<32x32xf32> to vector<32x8xf32>
    %33 = vector.extract_strided_slice %19 {offsets = [0, 24], sizes = [32, 8], strides = [1, 1]} : vector<32x32xf32> to vector<32x8xf32>
    %34 = tpu.concatenate %30, %31, %32, %33 in 0 : vector<32x8xf32>, vector<32x8xf32>, vector<32x8xf32>, vector<32x8xf32> -> vector<128x8xf32>
    %cst_7 = arith.constant dense<0.000000e+00> : vector<128x128xf32>
    %35 = tpu.matmul %24, %29, %cst_7 {dimension_numbers = #tpu.dot_dimension_numbers<[1], [1], [0], [0], [0, 0, 1, 0], [], []>, precision = #tpu.contract_precision<fp32>} : vector<128x8xf32>, vector<128x8xf32>, vector<128x128xf32> -> vector<128x128xf32>
    %c0_8 = arith.constant 0 : index
    %c0_9 = arith.constant 0 : index
    %36 = vector.load %arg2[%c0_8, %c0_9] : memref<128x128xf32, #tpu.memory_space<vmem>>, vector<128x128xf32>
    %37 = arith.addf %35, %36 : vector<128x128xf32>
    %cst_10 = arith.constant dense<0xFF800000> : vector<128xf32>
    %38 = vector.multi_reduction <maximumf>, %37, %cst_10 [1] : vector<128x128xf32> to vector<128xf32>
    %39 = vector.shape_cast %38 : vector<128xf32> to vector<128x1xf32>
    %40 = vector.broadcast %39 : vector<128x1xf32> to vector<128x128xf32>
    %41 = arith.subf %37, %40 : vector<128x128xf32>
    %42 = math.exp %41 : vector<128x128xf32>
    %cst_11 = arith.constant dense<0.000000e+00> : vector<128xf32>
    %43 = vector.multi_reduction <add>, %42, %cst_11 [1] : vector<128x128xf32> to vector<128xf32>
    %44 = vector.shape_cast %43 : vector<128xf32> to vector<128x1xf32>
    %45 = vector.broadcast %44 : vector<128x1xf32> to vector<128x128xf32>
    %46 = arith.divf %42, %45 : vector<128x128xf32>
    %cst_12 = arith.constant dense<0.000000e+00> : vector<128x8xf32>
    %47 = tpu.matmul %46, %34, %cst_12 {dimension_numbers = #tpu.dot_dimension_numbers<[1], [0], [0], [1], [0, 0, 1, 1], [], []>, precision = #tpu.contract_precision<fp32>} : vector<128x128xf32>, vector<128x8xf32>, vector<128x8xf32> -> vector<128x8xf32>
    %48 = vector.extract_strided_slice %47 {offsets = [0, 0], sizes = [32, 8], strides = [1, 1]} : vector<128x8xf32> to vector<32x8xf32>
    %49 = vector.extract_strided_slice %47 {offsets = [32, 0], sizes = [32, 8], strides = [1, 1]} : vector<128x8xf32> to vector<32x8xf32>
    %50 = vector.extract_strided_slice %47 {offsets = [64, 0], sizes = [32, 8], strides = [1, 1]} : vector<128x8xf32> to vector<32x8xf32>
    %51 = vector.extract_strided_slice %47 {offsets = [96, 0], sizes = [32, 8], strides = [1, 1]} : vector<128x8xf32> to vector<32x8xf32>
    %52 = tpu.concatenate %48, %49, %50, %51 in 1 : vector<32x8xf32>, vector<32x8xf32>, vector<32x8xf32>, vector<32x8xf32> -> vector<32x32xf32>
    %cst_13 = arith.constant dense<0.000000e+00> : vector<32x32xf32>
    %53 = tpu.matmul %52, %2, %cst_13 {dimension_numbers = #tpu.dot_dimension_numbers<[1], [0], [0], [1], [0, 0, 1, 1], [], []>, precision = #tpu.contract_precision<fp32>} : vector<32x32xf32>, vector<32x32xf32>, vector<32x32xf32> -> vector<32x32xf32>
    %54 = vector.broadcast %7 : vector<1x32xf32> to vector<32x32xf32>
    %55 = arith.addf %53, %54 : vector<32x32xf32>
    %cst_14 = arith.constant dense<0.000000e+00> : vector<32xf32>
    %56 = vector.multi_reduction <add>, %55, %cst_14 [1] : vector<32x32xf32> to vector<32xf32>
    %57 = vector.shape_cast %56 : vector<32xf32> to vector<32x1xf32>
    %cst_15 = arith.constant 3.200000e+01 : f32
    %58 = vector.broadcast %cst_15 : f32 to vector<32x1xf32>
    %59 = arith.divf %57, %58 : vector<32x1xf32>
    %60 = vector.broadcast %59 : vector<32x1xf32> to vector<32x32xf32>
    %61 = arith.subf %55, %60 : vector<32x32xf32>
    %62 = vector.broadcast %59 : vector<32x1xf32> to vector<32x32xf32>
    %63 = arith.subf %55, %62 : vector<32x32xf32>
    %64 = arith.mulf %61, %63 : vector<32x32xf32>
    %cst_16 = arith.constant dense<0.000000e+00> : vector<32xf32>
    %65 = vector.multi_reduction <add>, %64, %cst_16 [1] : vector<32x32xf32> to vector<32xf32>
    %66 = vector.shape_cast %65 : vector<32xf32> to vector<32x1xf32>
    %cst_17 = arith.constant 3.200000e+01 : f32
    %67 = vector.broadcast %cst_17 : f32 to vector<32x1xf32>
    %68 = arith.divf %66, %67 : vector<32x1xf32>
    %69 = vector.broadcast %59 : vector<32x1xf32> to vector<32x32xf32>
    %70 = arith.subf %55, %69 : vector<32x32xf32>
    %cst_18 = arith.constant 9.99999974E-6 : f32
    %71 = vector.broadcast %cst_18 : f32 to vector<32x1xf32>
    %72 = arith.addf %68, %71 : vector<32x1xf32>
    %73 = math.rsqrt %72 : vector<32x1xf32>
    %74 = vector.broadcast %73 : vector<32x1xf32> to vector<32x32xf32>
    %75 = arith.mulf %70, %74 : vector<32x32xf32>
    %76 = vector.broadcast %10 : vector<1x32xf32> to vector<32x32xf32>
    %77 = arith.mulf %75, %76 : vector<32x32xf32>
    %78 = vector.broadcast %11 : vector<1x32xf32> to vector<32x32xf32>
    %79 = arith.addf %77, %78 : vector<32x32xf32>
    %cst_19 = arith.constant dense<0.000000e+00> : vector<32x64xf32>
    %80 = tpu.matmul %79, %3, %cst_19 {dimension_numbers = #tpu.dot_dimension_numbers<[1], [0], [0], [1], [0, 0, 1, 1], [], []>, precision = #tpu.contract_precision<fp32>} : vector<32x32xf32>, vector<32x64xf32>, vector<32x64xf32> -> vector<32x64xf32>
    %81 = vector.broadcast %8 : vector<1x64xf32> to vector<32x64xf32>
    %82 = arith.addf %80, %81 : vector<32x64xf32>
    %cst_20 = arith.constant 0.000000e+00 : f32
    %83 = vector.broadcast %cst_20 : f32 to vector<32x64xf32>
    %84 = arith.cmpf oge, %82, %83 : vector<32x64xf32>
    %cst_21 = arith.constant 0.00999999977 : f32
    %85 = vector.broadcast %cst_21 : f32 to vector<32x64xf32>
    %86 = arith.mulf %85, %82 : vector<32x64xf32>
    %87 = arith.select %84, %82, %86 : vector<32x64xi1>, vector<32x64xf32>
    %cst_22 = arith.constant dense<0.000000e+00> : vector<32x32xf32>
    %88 = tpu.matmul %87, %4, %cst_22 {dimension_numbers = #tpu.dot_dimension_numbers<[1], [0], [0], [1], [0, 0, 1, 1], [], []>, precision = #tpu.contract_precision<fp32>} : vector<32x64xf32>, vector<64x32xf32>, vector<32x32xf32> -> vector<32x32xf32>
    %89 = arith.addf %79, %88 : vector<32x32xf32>
    %90 = vector.broadcast %9 : vector<1x32xf32> to vector<32x32xf32>
    %91 = arith.addf %89, %90 : vector<32x32xf32>
    %cst_23 = arith.constant dense<0.000000e+00> : vector<32xf32>
    %92 = vector.multi_reduction <add>, %91, %cst_23 [1] : vector<32x32xf32> to vector<32xf32>
    %93 = vector.shape_cast %92 : vector<32xf32> to vector<32x1xf32>
    %cst_24 = arith.constant 3.200000e+01 : f32
    %94 = vector.broadcast %cst_24 : f32 to vector<32x1xf32>
    %95 = arith.divf %93, %94 : vector<32x1xf32>
    %96 = vector.broadcast %95 : vector<32x1xf32> to vector<32x32xf32>
    %97 = arith.subf %91, %96 : vector<32x32xf32>
    %98 = vector.broadcast %95 : vector<32x1xf32> to vector<32x32xf32>
    %99 = arith.subf %91, %98 : vector<32x32xf32>
    %100 = arith.mulf %97, %99 : vector<32x32xf32>
    %cst_25 = arith.constant dense<0.000000e+00> : vector<32xf32>
    %101 = vector.multi_reduction <add>, %100, %cst_25 [1] : vector<32x32xf32> to vector<32xf32>
    %102 = vector.shape_cast %101 : vector<32xf32> to vector<32x1xf32>
    %cst_26 = arith.constant 3.200000e+01 : f32
    %103 = vector.broadcast %cst_26 : f32 to vector<32x1xf32>
    %104 = arith.divf %102, %103 : vector<32x1xf32>
    %105 = vector.broadcast %95 : vector<32x1xf32> to vector<32x32xf32>
    %106 = arith.subf %91, %105 : vector<32x32xf32>
    %cst_27 = arith.constant 9.99999974E-6 : f32
    %107 = vector.broadcast %cst_27 : f32 to vector<32x1xf32>
    %108 = arith.addf %104, %107 : vector<32x1xf32>
    %109 = math.rsqrt %108 : vector<32x1xf32>
    %110 = vector.broadcast %109 : vector<32x1xf32> to vector<32x32xf32>
    %111 = arith.mulf %106, %110 : vector<32x32xf32>
    %112 = vector.broadcast %12 : vector<1x32xf32> to vector<32x32xf32>
    %113 = arith.mulf %111, %112 : vector<32x32xf32>
    %114 = vector.broadcast %13 : vector<1x32xf32> to vector<32x32xf32>
    %115 = arith.addf %113, %114 : vector<32x32xf32>
    %c0_28 = arith.constant 0 : index
    %c0_29 = arith.constant 0 : index
    %116 = vector.load %arg4[%c0_28, %c0_29] : memref<32x32xf32, #tpu.memory_space<vmem>>, vector<32x32xf32>
    tpu.vector_store %arg4[%c0_28, %c0_29], %115 {strides = array<i32>} : memref<32x32xf32, #tpu.memory_space<vmem>>, vector<32x32xf32>,
    return
  }
  func.func @transform_0(%arg0: i32) -> (i32, i32) {
    %c0_i32 = arith.constant 0 : i32
    %c0_i32_0 = arith.constant 0 : i32
    %c0_i32_1 = arith.constant 0 : i32
    return %c0_i32, %c0_i32_0 : i32, i32
  }
  func.func @transform_1(%arg0: i32) -> (i32, i32) {
    %c0_i32 = arith.constant 0 : i32
    %c0_i32_0 = arith.constant 0 : i32
    %c0_i32_1 = arith.constant 0 : i32
    return %c0_i32, %c0_i32_0 : i32, i32
  }
  func.func @transform_2(%arg0: i32) -> (i32, i32) {
    %c0_i32 = arith.constant 0 : i32
    %c0_i32_0 = arith.constant 0 : i32
    %c0_i32_1 = arith.constant 0 : i32
    return %c0_i32, %c0_i32_0 : i32, i32
  }
  func.func @transform_3(%arg0: i32) -> (i32, i32) {
    %c0_i32 = arith.constant 0 : i32
    %c0_i32_0 = arith.constant 0 : i32
    %c0_i32_1 = arith.constant 0 : i32
    return %c0_i32, %c0_i32_0 : i32, i32
  }
}

</mosaic_0001>

<llo_original>
// kernel: tpu_custom_call.1
$region0: #{tpu_custom_call.1}
  #allocation0 [shape = 'u32[]', space=smem, size = 0x4, offset = 0x4, fixed_abs, tag = 'smem constant byte address 0x4 - core index']
  #allocation1 [shape = 'u32[144,128]{1,0:T(1,128)}', space=vmem, size = 0x12000, scoped, tag = 'internal scratch']
  %s0 = inlined_call_operand.hbm [shape: f32[32,32], index: 0, kind: input, shape index: {}]
  %s1 = inlined_call_operand.hbm [shape: f32[128,128], index: 1, kind: input, shape index: {}]
  %s2 = inlined_call_operand.hbm [shape: f32[168,96], index: 2, kind: input, shape index: {}]
  %s3 = inlined_call_operand.hbm [shape: f32[32,32], index: 3, kind: output, shape index: {}]
  %s4 = sld [smem:[#allocation0]]
  $region34: #{tpu_custom_call.1} parent=0
    _
  %s6 = ssub.s32 1, %s4
  %s7 = scalar_select 0, %s6, %s4
  $region1: #{tpu_custom_call.1} parent=0
    #allocation2 [shape = 'u8[16384]{0}', space=vmem, size = 0x4000, scoped, tag = 'input window, operand 0, single buffered']
    #allocation3 [shape = 's32[1]{0}', space=sflag, size = 0x4, scoped, tag = 'scoped memory for tpu_custom_call.1']
    #allocation4 [shape = 's32[1]{0}', space=sflag, size = 0x4, scoped, tag = 'scoped memory for tpu_custom_call.1']
    #allocation5 [shape = 'u8[65536]{0}', space=vmem, size = 0x10000, scoped, tag = 'input window, operand 1, single buffered']
    #allocation6 [shape = 's32[1]{0}', space=sflag, size = 0x4, scoped, tag = 'scoped memory for tpu_custom_call.1']
    #allocation7 [shape = 'u8[86016]{0}', space=vmem, size = 0x15000, scoped, tag = 'input window, operand 2, single buffered']
    #allocation8 [shape = 'u8[16384]{0}', space=vmem, size = 0x4000, scoped, tag = 'output window, operand 0, single buffered']
    %8 = vsyncpa [#allocation3], 0
    %9 = vsyncpa [#allocation6], 0
    %10 = vsyncpa [#allocation4], 0
    // Predicated region
    $region2: #{tpu_custom_call.1} parent=1 // pred_check
      _
    $region3: #{tpu_custom_call.1} parent=1 // pred_check_branch
      %12 = sbr.rel (0) target = $region5
    $region4: #{tpu_custom_call.1} parent=1 // pred_region
      %s14 = ssub.s32 512, 512
      %15 = vsyncadd [#allocation3], %s14
      %s16 = sshll.u32 [#allocation2], 4
      %s17 = int_to_ptr.vmem [resolvable:$true] %s16
      %22 = dma.hbm_to_vmem [thread:$0]  %s0, 512, %s17, [#allocation3], 128, 128, 8
    $region5: #{tpu_custom_call.1} parent=1 // pred_fallthru
      _
    // Predicated region
    $region6: #{tpu_custom_call.1} parent=1 // pred_check
      _
    $region7: #{tpu_custom_call.1} parent=1 // pred_check_branch
      %24 = sbr.rel (0) target = $region9
    $region8: #{tpu_custom_call.1} parent=1 // pred_region
      %s26 = ssub.s32 2048, 2048
      %27 = vsyncadd [#allocation6], %s26
      %s28 = sshll.u32 [#allocation5], 4
      %s29 = int_to_ptr.vmem [resolvable:$true] %s28
      %34 = dma.hbm_to_vmem [thread:$0]  %s1, 2048, %s29, [#allocation6], 128, 128, 8
    $region9: #{tpu_custom_call.1} parent=1 // pred_fallthru
      _
    // Predicated region
    $region10: #{tpu_custom_call.1} parent=1 // pred_check
      _
    $region11: #{tpu_custom_call.1} parent=1 // pred_check_branch
      %36 = sbr.rel (0) target = $region13
    $region12: #{tpu_custom_call.1} parent=1 // pred_region
      %s38 = ssub.s32 2688, 2688
      %39 = vsyncadd [#allocation6], %s38
      %s40 = sshll.u32 [#allocation7], 4
      %s41 = int_to_ptr.vmem [resolvable:$true] %s40
      %46 = dma.hbm_to_vmem [thread:$0]  %s2, 2688, %s41, [#allocation6], 128, 128, 8
    $region13: #{tpu_custom_call.1} parent=1 // pred_fallthru
      _
    // Predicated region
    $region14: #{tpu_custom_call.1} parent=1 // pred_check
      _
    $region15: #{tpu_custom_call.1} parent=1 // pred_check_branch
      %48 = sbr.rel (0) target = $region17
    $region16: #{tpu_custom_call.1} parent=1 // pred_region
      %49 = dma.done [#allocation3], 512
    $region17: #{tpu_custom_call.1} parent=1 // pred_fallthru
      _
    // Predicated region
    $region18: #{tpu_custom_call.1} parent=1 // pred_check
      _
    $region19: #{tpu_custom_call.1} parent=1 // pred_check_branch
      %51 = sbr.rel (0) target = $region21
    $region20: #{tpu_custom_call.1} parent=1 // pred_region
      %52 = dma.done [#allocation6], 2048
    $region21: #{tpu_custom_call.1} parent=1 // pred_fallthru
      _
    // Predicated region
    $region22: #{tpu_custom_call.1} parent=1 // pred_check
      _
    $region23: #{tpu_custom_call.1} parent=1 // pred_check_branch
      %54 = sbr.rel (0) target = $region25
    $region24: #{tpu_custom_call.1} parent=1 // pred_region
      %55 = dma.done [#allocation6], 2688
    $region25: #{tpu_custom_call.1} parent=1 // pred_fallthru
      _
    %v56 = vld [vmem:[#allocation2] sm:$0xff]
    %v57 = vld [vmem:[#allocation2 + $0x8] sm:$0xff]
    %v58 = vld [vmem:[#allocation2 + $0x10] sm:$0xff]
    %v59 = vld [vmem:[#allocation2 + $0x18] sm:$0xff]
    %v60 = vld [vmem:[#allocation7] sm:$0xff]
    %v61 = vld [vmem:[#allocation7 + $0x8] sm:$0xff]
    %v62 = vld [vmem:[#allocation7 + $0x10] sm:$0xff]
    %v63 = vld [vmem:[#allocation7 + $0x18] sm:$0xff]
    %v64 = vld [vmem:[#allocation7 + $0x20] sm:$0xff]
    %v65 = vld [vmem:[#allocation7 + $0x28] sm:$0xff]
    %v66 = vld [vmem:[#allocation7 + $0x30] sm:$0xff]
    %v67 = vld [vmem:[#allocation7 + $0x38] sm:$0xff]
    %v68 = vld [vmem:[#allocation7 + $0x40] sm:$0xff]
    %v69 = vld [vmem:[#allocation7 + $0x48] sm:$0xff]
    %v70 = vld [vmem:[#allocation7 + $0x50] sm:$0xff]
    %v71 = vld [vmem:[#allocation7 + $0x58] sm:$0xff]
    %v72 = vld [vmem:[#allocation7 + $0x60] sm:$0xff]
    %v73 = vld [vmem:[#allocation7 + $0x68] sm:$0xff]
    %v74 = vld [vmem:[#allocation7 + $0x70] sm:$0xff]
    %v75 = vld [vmem:[#allocation7 + $0x78] sm:$0xff]
    %v76 = vld [vmem:[#allocation7 + $0x80] sm:$0xff]
    %v77 = vld [vmem:[#allocation7 + $0x88] sm:$0xff]
    %v78 = vld [vmem:[#allocation7 + $0x90] sm:$0xff]
    %v79 = vld [vmem:[#allocation7 + $0x98] sm:$0xff]
    %v80 = vld [vmem:[#allocation7 + $0xa0] sm:$0xff]
    %v81 = vlaneseq
    %v82 = vshrl.u32 %v81, 7
    %v83 = vsub.s32 0, %v82
    %v84 = vrot.slane %v80, %v83
    %vm85 = vcmask 261120
    %v87 = vsel %vm85, %v56, 0
    %v90 = vsel %vm85, %v57, 0
    %v93 = vsel %vm85, %v58, 0
    %v96 = vsel %vm85, %v59, 0
    %98 = vmatprep.subr.mxu0 0.0
    %v99 = vand.u32 %v60, 4294901760
    %100 = vmatpush1.msra.mxu0 %v99
    %101 = vmatprep.subr.mxu0 0.0
    %v102 = vand.u32 %v61, 4294901760
    %103 = vmatpush1.msra.mxu0 %v102
    %104 = vmatprep.subr.mxu0 0.0
    %v105 = vand.u32 %v62, 4294901760
    %106 = vmatpush1.msra.mxu0 %v105
    %107 = vmatprep.subr.mxu0 0.0
    %v108 = vand.u32 %v63, 4294901760
    %109 = vmatpush1.msra.mxu0 %v108
    %110 = vmatprep.subr.mxu0 0.0
    %111 = vmatpush1.msra.mxu0 0.0
    %112 = vmatprep.subr.mxu0 0.0
    %113 = vmatpush1.msra.mxu0 0.0
    %114 = vmatprep.subr.mxu0 0.0
    %115 = vmatpush1.msra.mxu0 0.0
    %116 = vmatprep.subr.mxu0 0.0
    %117 = vmatpush1.msra.mxu0 0.0
    %118 = vmatprep.subr.mxu0 0.0
    %119 = vmatpush1.msra.mxu0 0.0
    %120 = vmatprep.subr.mxu0 0.0
    %121 = vmatpush1.msra.mxu0 0.0
    %122 = vmatprep.subr.mxu0 0.0
    %123 = vmatpush1.msra.mxu0 0.0
    %124 = vmatprep.subr.mxu0 0.0
    %125 = vmatpush1.msra.mxu0 0.0
    %126 = vmatprep.subr.mxu0 0.0
    %127 = vmatpush1.msra.mxu0 0.0
    %128 = vmatprep.subr.mxu0 0.0
    %129 = vmatpush1.msra.mxu0 0.0
    %130 = vmatprep.subr.mxu0 0.0
    %131 = vmatpush1.msra.mxu0 0.0
    %132 = vmatprep.subr.mxu0 0.0
    %133 = vmatpush1.msra.mxu0 0.0
    %134 = vmatprep.subr.mxu0 0.0
    %135 = vmatpush1.msra.mxu0 0.0
    %136 = vmatprep.subr.mxu0 0.0
    %137 = vmatpush1.msra.mxu0 0.0
    %138 = vmatprep.subr.mxu0 0.0
    %139 = vmatpush1.msra.mxu0 0.0
    %140 = vmatprep.subr.mxu0 0.0
    %141 = vmatpush1.msra.mxu0 0.0
    %142 = vmatprep.subr.mxu0 0.0
    %143 = vmatpush1.msra.mxu0 0.0
    %144 = vmatprep.subr.mxu0 0.0
    %145 = vmatpush1.msra.mxu0 0.0
    %146 = vmatprep.subr.mxu0 0.0
    %147 = vmatpush1.msra.mxu0 0.0
    %148 = vmatprep.subr.mxu0 0.0
    %149 = vmatpush1.msra.mxu0 0.0
    %150 = vmatprep.subr.mxu0 0.0
    %151 = vmatpush1.msra.mxu0 0.0
    %152 = vmatprep.subr.mxu0 0.0
    %153 = vmatpush1.msra.mxu0 0.0
    %154 = vmatprep.subr.mxu0 0.0
    %155 = vmatpush1.msra.mxu0 0.0
    %156 = vmatprep.subr.mxu0 0.0
    %157 = vmatpush1.msra.mxu0 0.0
    %158 = vmatprep.subr.mxu0 0.0
    %159 = vmatpush1.msra.mxu0 0.0
    %160 = vmatprep.subr.mxu0 0.0
    %161 = vmatpush1.msra.mxu0 0.0
    %162 = vmatprep.subr.mxu0 0.0
    %163 = vmatpush1.msra.mxu0 0.0
    %164 = vmatprep.subr.mxu0 0.0
    %165 = vmatpush1.msra.mxu0 0.0
    %166 = vmatprep.mubr.f32.mxu0 0.0
    %v167 = vand.u32 %v87, 4294901760
    %v168 = vsub.f32 %v87, %v167
    %v169 = vand.u32 %v168, 4294901760
    %v170 = vsub.f32 %v168, %v169
    %v171 = vand.u32 %v170, 4294901760
    %172 = vmatmul.mubr.f32.gmra.mrb[0].mxu0 %v171
    %v173 = vpop.f32.mrb[0].mxu0
    %v174 = vadd.f32 %v84, %v173
    %v175 = vpop.f32.mrb[0].mxu0
    %176 = vmatprep.mubr.f32.mxu0 0.0
    %v177 = vand.u32 %v90, 4294901760
    %v178 = vsub.f32 %v90, %v177
    %v179 = vand.u32 %v178, 4294901760
    %v180 = vsub.f32 %v178, %v179
    %v181 = vand.u32 %v180, 4294901760
    %182 = vmatmul.mubr.f32.gmra.mrb[0].mxu0 %v181
    %v183 = vpop.f32.mrb[0].mxu0
    %v184 = vadd.f32 %v84, %v183
    %v185 = vpop.f32.mrb[0].mxu0
    %186 = vmatprep.mubr.f32.mxu0 0.0
    %v187 = vand.u32 %v93, 4294901760
    %v188 = vsub.f32 %v93, %v187
    %v189 = vand.u32 %v188, 4294901760
    %v190 = vsub.f32 %v188, %v189
    %v191 = vand.u32 %v190, 4294901760
    %192 = vmatmul.mubr.f32.gmra.mrb[0].mxu0 %v191
    %v193 = vpop.f32.mrb[0].mxu0
    %v194 = vadd.f32 %v84, %v193
    %v195 = vpop.f32.mrb[0].mxu0
    %196 = vmatprep.mubr.f32.mxu0 0.0
    %v197 = vand.u32 %v96, 4294901760
    %v198 = vsub.f32 %v96, %v197
    %v199 = vand.u32 %v198, 4294901760
    %v200 = vsub.f32 %v198, %v199
    %v201 = vand.u32 %v200, 4294901760
    %202 = vmatmul.mubr.f32.gmra.mrb[0].mxu0 %v201
    %v203 = vpop.f32.mrb[0].mxu0
    %v204 = vadd.f32 %v84, %v203
    %v205 = vpop.f32.mrb[0].mxu0
    %206 = vdwg.mxu0
    %207 = vmatprep.subr.mxu0 0.0
    %v208 = vand.u32 %v60, 4294901760
    %v209 = vsub.f32 %v60, %v208
    %v210 = vand.u32 %v209, 4294901760
    %v211 = vsub.f32 %v209, %v210
    %v212 = vand.u32 %v211, 4294901760
    %213 = vmatpush1.msra.mxu0 %v212
    %214 = vmatprep.subr.mxu0 0.0
    %v215 = vand.u32 %v61, 4294901760
    %v216 = vsub.f32 %v61, %v215
    %v217 = vand.u32 %v216, 4294901760
    %v218 = vsub.f32 %v216, %v217
    %v219 = vand.u32 %v218, 4294901760
    %220 = vmatpush1.msra.mxu0 %v219
    %221 = vmatprep.subr.mxu0 0.0
    %v222 = vand.u32 %v62, 4294901760
    %v223 = vsub.f32 %v62, %v222
    %v224 = vand.u32 %v223, 4294901760
    %v225 = vsub.f32 %v223, %v224
    %v226 = vand.u32 %v225, 4294901760
    %227 = vmatpush1.msra.mxu0 %v226
    %228 = vmatprep.subr.mxu0 0.0
    %v229 = vand.u32 %v63, 4294901760
    %v230 = vsub.f32 %v63, %v229
    %v231 = vand.u32 %v230, 4294901760
    %v232 = vsub.f32 %v230, %v231
    %v233 = vand.u32 %v232, 4294901760
    %234 = vmatpush1.msra.mxu0 %v233
    %235 = vmatprep.subr.mxu0 0.0
    %236 = vmatpush1.msra.mxu0 0.0
    %237 = vmatprep.subr.mxu0 0.0
    %238 = vmatpush1.msra.mxu0 0.0
    %239 = vmatprep.subr.mxu0 0.0
    %240 = vmatpush1.msra.mxu0 0.0
    %241 = vmatprep.subr.mxu0 0.0
    %242 = vmatpush1.msra.mxu0 0.0
    %243 = vmatprep.subr.mxu0 0.0
    %244 = vmatpush1.msra.mxu0 0.0
    %245 = vmatprep.subr.mxu0 0.0
    %246 = vmatpush1.msra.mxu0 0.0
    %247 = vmatprep.subr.mxu0 0.0
    %248 = vmatpush1.msra.mxu0 0.0
    %249 = vmatprep.subr.mxu0 0.0
    %250 = vmatpush1.msra.mxu0 0.0
    %251 = vmatprep.subr.mxu0 0.0
    %252 = vmatpush1.msra.mxu0 0.0
    %253 = vmatprep.subr.mxu0 0.0
    %254 = vmatpush1.msra.mxu0 0.0
    %255 = vmatprep.subr.mxu0 0.0
    %256 = vmatpush1.msra.mxu0 0.0
    %257 = vmatprep.subr.mxu0 0.0
    %258 = vmatpush1.msra.mxu0 0.0
    %259 = vmatprep.subr.mxu0 0.0
    %260 = vmatpush1.msra.mxu0 0.0
    %261 = vmatprep.subr.mxu0 0.0
    %262 = vmatpush1.msra.mxu0 0.0
    %263 = vmatprep.subr.mxu0 0.0
    %264 = vmatpush1.msra.mxu0 0.0
    %265 = vmatprep.subr.mxu0 0.0
    %266 = vmatpush1.msra.mxu0 0.0
    %267 = vmatprep.subr.mxu0 0.0
    %268 = vmatpush1.msra.mxu0 0.0
    %269 = vmatprep.subr.mxu0 0.0
    %270 = vmatpush1.msra.mxu0 0.0
    %271 = vmatprep.subr.mxu0 0.0
    %272 = vmatpush1.msra.mxu0 0.0
    %273 = vmatprep.subr.mxu0 0.0
    %274 = vmatpush1.msra.mxu0 0.0
    %275 = vmatprep.subr.mxu0 0.0
    %276 = vmatpush1.msra.mxu0 0.0
    %277 = vmatprep.subr.mxu0 0.0
    %278 = vmatpush1.msra.mxu0 0.0
    %279 = vmatprep.subr.mxu0 0.0
    %280 = vmatpush1.msra.mxu0 0.0
    %281 = vmatprep.subr.mxu0 0.0
    %282 = vmatpush1.msra.mxu0 0.0
    %283 = vmatprep.subr.mxu0 0.0
    %284 = vmatpush1.msra.mxu0 0.0
    %285 = vmatprep.subr.mxu0 0.0
    %286 = vmatpush1.msra.mxu0 0.0
    %287 = vmatprep.subr.mxu0 0.0
    %288 = vmatpush1.msra.mxu0 0.0
    %289 = vmatprep.subr.mxu0 0.0
    %290 = vmatpush1.msra.mxu0 0.0
    %291 = vmatprep.mubr.f32.mxu0 0.0
    %v292 = vand.u32 %v87, 4294901760
    %293 = vmatmul.mubr.f32.gmra.mrb[0].mxu0 %v292
    %v294 = vpop.f32.mrb[0].mxu0
    %v295 = vadd.f32 %v174, %v294
    %v296 = vpop.f32.mrb[0].mxu0
    %297 = vmatprep.mubr.f32.mxu0 0.0
    %v298 = vand.u32 %v90, 4294901760
    %299 = vmatmul.mubr.f32.gmra.mrb[0].mxu0 %v298
    %v300 = vpop.f32.mrb[0].mxu0
    %v301 = vadd.f32 %v184, %v300
    %v302 = vpop.f32.mrb[0].mxu0
    %303 = vmatprep.mubr.f32.mxu0 0.0
    %v304 = vand.u32 %v93, 4294901760
    %305 = vmatmul.mubr.f32.gmra.mrb[0].mxu0 %v304
    %v306 = vpop.f32.mrb[0].mxu0
    %v307 = vadd.f32 %v194, %v306
    %v308 = vpop.f32.mrb[0].mxu0
    %309 = vmatprep.mubr.f32.mxu0 0.0
    %v310 = vand.u32 %v96, 4294901760
    %311 = vmatmul.mubr.f32.gmra.mrb[0].mxu0 %v310
    %v312 = vpop.f32.mrb[0].mxu0
    %v313 = vadd.f32 %v204, %v312
    %v314 = vpop.f32.mrb[0].mxu0
    %315 = vdwg.mxu0
    %316 = vmatprep.subr.mxu0 0.0
    %v317 = vand.u32 %v60, 4294901760
    %v318 = vsub.f32 %v60, %v317
    %319 = vmatpush1.msra.mxu0 %v318
    %320 = vmatprep.subr.mxu0 0.0
    %v321 = vand.u32 %v61, 4294901760
    %v322 = vsub.f32 %v61, %v321
    %323 = vmatpush1.msra.mxu0 %v322
    %324 = vmatprep.subr.mxu0 0.0
    %v325 = vand.u32 %v62, 4294901760
    %v326 = vsub.f32 %v62, %v325
    %327 = vmatpush1.msra.mxu0 %v326
    %328 = vmatprep.subr.mxu0 0.0
    %v329 = vand.u32 %v63, 4294901760
    %v330 = vsub.f32 %v63, %v329
    %331 = vmatpush1.msra.mxu0 %v330
    %332 = vmatprep.subr.mxu0 0.0
    %333 = vmatpush1.msra.mxu0 0.0
    %334 = vmatprep.subr.mxu0 0.0
    %335 = vmatpush1.msra.mxu0 0.0
    %336 = vmatprep.subr.mxu0 0.0
    %337 = vmatpush1.msra.mxu0 0.0
    %338 = vmatprep.subr.mxu0 0.0
    %339 = vmatpush1.msra.mxu0 0.0
    %340 = vmatprep.subr.mxu0 0.0
    %341 = vmatpush1.msra.mxu0 0.0
    %342 = vmatprep.subr.mxu0 0.0
    %343 = vmatpush1.msra.mxu0 0.0
    %344 = vmatprep.subr.mxu0 0.0
    %345 = vmatpush1.msra.mxu0 0.0
    %346 = vmatprep.subr.mxu0 0.0
    %347 = vmatpush1.msra.mxu0 0.0
    %348 = vmatprep.subr.mxu0 0.0
    %349 = vmatpush1.msra.mxu0 0.0
    %350 = vmatprep.subr.mxu0 0.0
    %351 = vmatpush1.msra.mxu0 0.0
    %352 = vmatprep.subr.mxu0 0.0
    %353 = vmatpush1.msra.mxu0 0.0
    %354 = vmatprep.subr.mxu0 0.0
    %355 = vmatpush1.msra.mxu0 0.0
    %356 = vmatprep.subr.mxu0 0.0
    %357 = vmatpush1.msra.mxu0 0.0
    %358 = vmatprep.subr.mxu0 0.0
    %359 = vmatpush1.msra.mxu0 0.0
    %360 = vmatprep.subr.mxu0 0.0
    %361 = vmatpush1.msra.mxu0 0.0
    %362 = vmatprep.subr.mxu0 0.0
    %363 = vmatpush1.msra.mxu0 0.0
    %364 = vmatprep.subr.mxu0 0.0
    %365 = vmatpush1.msra.mxu0 0.0
    %366 = vmatprep.subr.mxu0 0.0
    %367 = vmatpush1.msra.mxu0 0.0
    %368 = vmatprep.subr.mxu0 0.0
    %369 = vmatpush1.msra.mxu0 0.0
    %370 = vmatprep.subr.mxu0 0.0
    %371 = vmatpush1.msra.mxu0 0.0
    %372 = vmatprep.subr.mxu0 0.0
    %373 = vmatpush1.msra.mxu0 0.0
    %374 = vmatprep.subr.mxu0 0.0
    %375 = vmatpush1.msra.mxu0 0.0
    %376 = vmatprep.subr.mxu0 0.0
    %377 = vmatpush1.msra.mxu0 0.0
    %378 = vmatprep.subr.mxu0 0.0
    %379 = vmatpush1.msra.mxu0 0.0
    %380 = vmatprep.subr.mxu0 0.0
    %381 = vmatpush1.msra.mxu0 0.0
    %382 = vmatprep.subr.mxu0 0.0
    %383 = vmatpush1.msra.mxu0 0.0
    %384 = vmatprep.subr.mxu0 0.0
    %385 = vmatpush1.msra.mxu0 0.0
    %386 = vmatprep.subr.mxu0 0.0
    %387 = vmatpush1.msra.mxu0 0.0
    %388 = vmatprep.mubr.f32.mxu0 0.0
    %v389 = vand.u32 %v87, 4294901760
    %v390 = vsub.f32 %v87, %v389
    %391 = vmatmul.mubr.f32.gmra.mrb[0].mxu0 %v390
    %v392 = vpop.f32.mrb[0].mxu0
    %v393 = vadd.f32 %v295, %v392
    %v394 = vpop.f32.mrb[0].mxu0
    %395 = vmatprep.mubr.f32.mxu0 0.0
    %v396 = vand.u32 %v90, 4294901760
    %v397 = vsub.f32 %v90, %v396
    %398 = vmatmul.mubr.f32.gmra.mrb[0].mxu0 %v397
    %v399 = vpop.f32.mrb[0].mxu0
    %v400 = vadd.f32 %v301, %v399
    %v401 = vpop.f32.mrb[0].mxu0
    %402 = vmatprep.mubr.f32.mxu0 0.0
    %v403 = vand.u32 %v93, 4294901760
    %v404 = vsub.f32 %v93, %v403
    %405 = vmatmul.mubr.f32.gmra.mrb[0].mxu0 %v404
    %v406 = vpop.f32.mrb[0].mxu0
    %v407 = vadd.f32 %v307, %v406
    %v408 = vpop.f32.mrb[0].mxu0
    %409 = vmatprep.mubr.f32.mxu0 0.0
    %v410 = vand.u32 %v96, 4294901760
    %v411 = vsub.f32 %v96, %v410
    %412 = vmatmul.mubr.f32.gmra.mrb[0].mxu0 %v411
    %v413 = vpop.f32.mrb[0].mxu0
    %v414 = vadd.f32 %v313, %v413
    %v415 = vpop.f32.mrb[0].mxu0
    %416 = vdwg.mxu0
    %417 = vmatprep.subr.mxu0 0.0
    %v418 = vand.u32 %v60, 4294901760
    %419 = vmatpush1.msra.mxu0 %v418
    %420 = vmatprep.subr.mxu0 0.0
    %v421 = vand.u32 %v61, 4294901760
    %422 = vmatpush1.msra.mxu0 %v421
    %423 = vmatprep.subr.mxu0 0.0
    %v424 = vand.u32 %v62, 4294901760
    %425 = vmatpush1.msra.mxu0 %v424
    %426 = vmatprep.subr.mxu0 0.0
    %v427 = vand.u32 %v63, 4294901760
    %428 = vmatpush1.msra.mxu0 %v427
    %429 = vmatprep.subr.mxu0 0.0
    %430 = vmatpush1.msra.mxu0 0.0
    %431 = vmatprep.subr.mxu0 0.0
    %432 = vmatpush1.msra.mxu0 0.0
    %433 = vmatprep.subr.mxu0 0.0
    %434 = vmatpush1.msra.mxu0 0.0
    %435 = vmatprep.subr.mxu0 0.0
    %436 = vmatpush1.msra.mxu0 0.0
    %437 = vmatprep.subr.mxu0 0.0
    %438 = vmatpush1.msra.mxu0 0.0
    %439 = vmatprep.subr.mxu0 0.0
    %440 = vmatpush1.msra.mxu0 0.0
    %441 = vmatprep.subr.mxu0 0.0
    %442 = vmatpush1.msra.mxu0 0.0
    %443 = vmatprep.subr.mxu0 0.0
    %444 = vmatpush1.msra.mxu0 0.0
    %445 = vmatprep.subr.mxu0 0.0
    %446 = vmatpush1.msra.mxu0 0.0
    %447 = vmatprep.subr.mxu0 0.0
    %448 = vmatpush1.msra.mxu0 0.0
    %449 = vmatprep.subr.mxu0 0.0
    %450 = vmatpush1.msra.mxu0 0.0
    %451 = vmatprep.subr.mxu0 0.0
    %452 = vmatpush1.msra.mxu0 0.0
    %453 = vmatprep.subr.mxu0 0.0
    %454 = vmatpush1.msra.mxu0 0.0
    %455 = vmatprep.subr.mxu0 0.0
    %456 = vmatpush1.msra.mxu0 0.0
    %457 = vmatprep.subr.mxu0 0.0
    %458 = vmatpush1.msra.mxu0 0.0
    %459 = vmatprep.subr.mxu0 0.0
    %460 = vmatpush1.msra.mxu0 0.0
    %461 = vmatprep.subr.mxu0 0.0
    %462 = vmatpush1.msra.mxu0 0.0
    %463 = vmatprep.subr.mxu0 0.0
    %464 = vmatpush1.msra.mxu0 0.0
    %465 = vmatprep.subr.mxu0 0.0
    %466 = vmatpush1.msra.mxu0 0.0
    %467 = vmatprep.subr.mxu0 0.0
    %468 = vmatpush1.msra.mxu0 0.0
    %469 = vmatprep.subr.mxu0 0.0
    %470 = vmatpush1.msra.mxu0 0.0
    %471 = vmatprep.subr.mxu0 0.0
    %472 = vmatpush1.msra.mxu0 0.0
    %473 = vmatprep.subr.mxu0 0.0
    %474 = vmatpush1.msra.mxu0 0.0
    %475 = vmatprep.subr.mxu0 0.0
    %476 = vmatpush1.msra.mxu0 0.0
    %477 = vmatprep.subr.mxu0 0.0
    %478 = vmatpush1.msra.mxu0 0.0
    %479 = vmatprep.subr.mxu0 0.0
    %480 = vmatpush1.msra.mxu0 0.0
    %481 = vmatprep.subr.mxu0 0.0
    %482 = vmatpush1.msra.mxu0 0.0
    %483 = vmatprep.subr.mxu0 0.0
    %484 = vmatpush1.msra.mxu0 0.0
    %485 = vmatprep.mubr.f32.mxu0 0.0
    %v486 = vand.u32 %v87, 4294901760
    %v487 = vsub.f32 %v87, %v486
    %v488 = vand.u32 %v487, 4294901760
    %489 = vmatmul.mubr.f32.gmra.mrb[0].mxu0 %v488
    %v490 = vpop.f32.mrb[0].mxu0
    %v491 = vadd.f32 %v393, %v490
    %v492 = vpop.f32.mrb[0].mxu0
    %493 = vmatprep.mubr.f32.mxu0 0.0
    %v494 = vand.u32 %v90, 4294901760
    %v495 = vsub.f32 %v90, %v494
    %v496 = vand.u32 %v495, 4294901760
    %497 = vmatmul.mubr.f32.gmra.mrb[0].mxu0 %v496
    %v498 = vpop.f32.mrb[0].mxu0
    %v499 = vadd.f32 %v400, %v498
    %v500 = vpop.f32.mrb[0].mxu0
    %501 = vmatprep.mubr.f32.mxu0 0.0
    %v502 = vand.u32 %v93, 4294901760
    %v503 = vsub.f32 %v93, %v502
    %v504 = vand.u32 %v503, 4294901760
    %505 = vmatmul.mubr.f32.gmra.mrb[0].mxu0 %v504
    %v506 = vpop.f32.mrb[0].mxu0
    %v507 = vadd.f32 %v407, %v506
    %v508 = vpop.f32.mrb[0].mxu0
    %509 = vmatprep.mubr.f32.mxu0 0.0
    %v510 = vand.u32 %v96, 4294901760
    %v511 = vsub.f32 %v96, %v510
    %v512 = vand.u32 %v511, 4294901760
    %513 = vmatmul.mubr.f32.gmra.mrb[0].mxu0 %v512
    %v514 = vpop.f32.mrb[0].mxu0
    %v515 = vadd.f32 %v414, %v514
    %v516 = vpop.f32.mrb[0].mxu0
    %517 = vdwg.mxu0
    %518 = vmatprep.subr.mxu0 0.0
    %v519 = vand.u32 %v60, 4294901760
    %v520 = vsub.f32 %v60, %v519
    %v521 = vand.u32 %v520, 4294901760
    %522 = vmatpush1.msra.mxu0 %v521
    %523 = vmatprep.subr.mxu0 0.0
    %v524 = vand.u32 %v61, 4294901760
    %v525 = vsub.f32 %v61, %v524
    %v526 = vand.u32 %v525, 4294901760
    %527 = vmatpush1.msra.mxu0 %v526
    %528 = vmatprep.subr.mxu0 0.0
    %v529 = vand.u32 %v62, 4294901760
    %v530 = vsub.f32 %v62, %v529
    %v531 = vand.u32 %v530, 4294901760
    %532 = vmatpush1.msra.mxu0 %v531
    %533 = vmatprep.subr.mxu0 0.0
    %v534 = vand.u32 %v63, 4294901760
    %v535 = vsub.f32 %v63, %v534
    %v536 = vand.u32 %v535, 4294901760
    %537 = vmatpush1.msra.mxu0 %v536
    %538 = vmatprep.subr.mxu0 0.0
    %539 = vmatpush1.msra.mxu0 0.0
    %540 = vmatprep.subr.mxu0 0.0
    %541 = vmatpush1.msra.mxu0 0.0
    %542 = vmatprep.subr.mxu0 0.0
    %543 = vmatpush1.msra.mxu0 0.0
    %544 = vmatprep.subr.mxu0 0.0
    %545 = vmatpush1.msra.mxu0 0.0
    %546 = vmatprep.subr.mxu0 0.0
    %547 = vmatpush1.msra.mxu0 0.0
    %548 = vmatprep.subr.mxu0 0.0
    %549 = vmatpush1.msra.mxu0 0.0
    %550 = vmatprep.subr.mxu0 0.0
    %551 = vmatpush1.msra.mxu0 0.0
    %552 = vmatprep.subr.mxu0 0.0
    %553 = vmatpush1.msra.mxu0 0.0
    %554 = vmatprep.subr.mxu0 0.0
    %555 = vmatpush1.msra.mxu0 0.0
    %556 = vmatprep.subr.mxu0 0.0
    %557 = vmatpush1.msra.mxu0 0.0
    %558 = vmatprep.subr.mxu0 0.0
    %559 = vmatpush1.msra.mxu0 0.0
    %560 = vmatprep.subr.mxu0 0.0
    %561 = vmatpush1.msra.mxu0 0.0
    %562 = vmatprep.subr.mxu0 0.0
    %563 = vmatpush1.msra.mxu0 0.0
    %564 = vmatprep.subr.mxu0 0.0
    %565 = vmatpush1.msra.mxu0 0.0
    %566 = vmatprep.subr.mxu0 0.0
    %567 = vmatpush1.msra.mxu0 0.0
    %568 = vmatprep.subr.mxu0 0.0
    %569 = vmatpush1.msra.mxu0 0.0
    %570 = vmatprep.subr.mxu0 0.0
    %571 = vmatpush1.msra.mxu0 0.0
    %572 = vmatprep.subr.mxu0 0.0
    %573 = vmatpush1.msra.mxu0 0.0
    %574 = vmatprep.subr.mxu0 0.0
    %575 = vmatpush1.msra.mxu0 0.0
    %576 = vmatprep.subr.mxu0 0.0
    %577 = vmatpush1.msra.mxu0 0.0
    %578 = vmatprep.subr.mxu0 0.0
    %579 = vmatpush1.msra.mxu0 0.0
    %580 = vmatprep.subr.mxu0 0.0
    %581 = vmatpush1.msra.mxu0 0.0
    %582 = vmatprep.subr.mxu0 0.0
    %583 = vmatpush1.msra.mxu0 0.0
    %584 = vmatprep.subr.mxu0 0.0
    %585 = vmatpush1.msra.mxu0 0.0
    %586 = vmatprep.subr.mxu0 0.0
    %587 = vmatpush1.msra.mxu0 0.0
    %588 = vmatprep.subr.mxu0 0.0
    %589 = vmatpush1.msra.mxu0 0.0
    %590 = vmatprep.subr.mxu0 0.0
    %591 = vmatpush1.msra.mxu0 0.0
    %592 = vmatprep.subr.mxu0 0.0
    %593 = vmatpush1.msra.mxu0 0.0
    %594 = vmatprep.mubr.f32.mxu0 0.0
    %v595 = vand.u32 %v87, 4294901760
    %596 = vmatmul.mubr.f32.gmra.mrb[0].mxu0 %v595
    %v597 = vpop.f32.mrb[0].mxu0
    %v598 = vadd.f32 %v491, %v597
    %v599 = vpop.f32.mrb[0].mxu0
    %600 = vmatprep.mubr.f32.mxu0 0.0
    %v601 = vand.u32 %v90, 4294901760
    %602 = vmatmul.mubr.f32.gmra.mrb[0].mxu0 %v601
    %v603 = vpop.f32.mrb[0].mxu0
    %v604 = vadd.f32 %v499, %v603
    %v605 = vpop.f32.mrb[0].mxu0
    %606 = vmatprep.mubr.f32.mxu0 0.0
    %v607 = vand.u32 %v93, 4294901760
    %608 = vmatmul.mubr.f32.gmra.mrb[0].mxu0 %v607
    %v609 = vpop.f32.mrb[0].mxu0
    %v610 = vadd.f32 %v507, %v609
    %v611 = vpop.f32.mrb[0].mxu0
    %612 = vmatprep.mubr.f32.mxu0 0.0
    %v613 = vand.u32 %v96, 4294901760
    %614 = vmatmul.mubr.f32.gmra.mrb[0].mxu0 %v613
    %v615 = vpop.f32.mrb[0].mxu0
    %v616 = vadd.f32 %v515, %v615
    %v617 = vpop.f32.mrb[0].mxu0
    %618 = vdwg.mxu0
    %619 = vmatprep.subr.mxu0 0.0
    %v620 = vand.u32 %v60, 4294901760
    %621 = vmatpush1.msra.mxu0 %v620
    %622 = vmatprep.subr.mxu0 0.0
    %v623 = vand.u32 %v61, 4294901760
    %624 = vmatpush1.msra.mxu0 %v623
    %625 = vmatprep.subr.mxu0 0.0
    %v626 = vand.u32 %v62, 4294901760
    %627 = vmatpush1.msra.mxu0 %v626
    %628 = vmatprep.subr.mxu0 0.0
    %v629 = vand.u32 %v63, 4294901760
    %630 = vmatpush1.msra.mxu0 %v629
    %631 = vmatprep.subr.mxu0 0.0
    %632 = vmatpush1.msra.mxu0 0.0
    %633 = vmatprep.subr.mxu0 0.0
    %634 = vmatpush1.msra.mxu0 0.0
    %635 = vmatprep.subr.mxu0 0.0
    %636 = vmatpush1.msra.mxu0 0.0
    %637 = vmatprep.subr.mxu0 0.0
    %638 = vmatpush1.msra.mxu0 0.0
    %639 = vmatprep.subr.mxu0 0.0
    %640 = vmatpush1.msra.mxu0 0.0
    %641 = vmatprep.subr.mxu0 0.0
    %642 = vmatpush1.msra.mxu0 0.0
    %643 = vmatprep.subr.mxu0 0.0
    %644 = vmatpush1.msra.mxu0 0.0
    %645 = vmatprep.subr.mxu0 0.0
    %646 = vmatpush1.msra.mxu0 0.0
    %647 = vmatprep.subr.mxu0 0.0
    %648 = vmatpush1.msra.mxu0 0.0
    %649 = vmatprep.subr.mxu0 0.0
    %650 = vmatpush1.msra.mxu0 0.0
    %651 = vmatprep.subr.mxu0 0.0
    %652 = vmatpush1.msra.mxu0 0.0
    %653 = vmatprep.subr.mxu0 0.0
    %654 = vmatpush1.msra.mxu0 0.0
    %655 = vmatprep.subr.mxu0 0.0
    %656 = vmatpush1.msra.mxu0 0.0
    %657 = vmatprep.subr.mxu0 0.0
    %658 = vmatpush1.msra.mxu0 0.0
    %659 = vmatprep.subr.mxu0 0.0
    %660 = vmatpush1.msra.mxu0 0.0
    %661 = vmatprep.subr.mxu0 0.0
    %662 = vmatpush1.msra.mxu0 0.0
    %663 = vmatprep.subr.mxu0 0.0
    %664 = vmatpush1.msra.mxu0 0.0
    %665 = vmatprep.subr.mxu0 0.0
    %666 = vmatpush1.msra.mxu0 0.0
    %667 = vmatprep.subr.mxu0 0.0
    %668 = vmatpush1.msra.mxu0 0.0
    %669 = vmatprep.subr.mxu0 0.0
    %670 = vmatpush1.msra.mxu0 0.0
    %671 = vmatprep.subr.mxu0 0.0
    %672 = vmatpush1.msra.mxu0 0.0
    %673 = vmatprep.subr.mxu0 0.0
    %674 = vmatpush1.msra.mxu0 0.0
    %675 = vmatprep.subr.mxu0 0.0
    %676 = vmatpush1.msra.mxu0 0.0
    %677 = vmatprep.subr.mxu0 0.0
    %678 = vmatpush1.msra.mxu0 0.0
    %679 = vmatprep.subr.mxu0 0.0
    %680 = vmatpush1.msra.mxu0 0.0
    %681 = vmatprep.subr.mxu0 0.0
    %682 = vmatpush1.msra.mxu0 0.0
    %683 = vmatprep.subr.mxu0 0.0
    %684 = vmatpush1.msra.mxu0 0.0
    %685 = vmatprep.subr.mxu0 0.0
    %686 = vmatpush1.msra.mxu0 0.0
    %687 = vmatprep.mubr.f32.mxu0 0.0
    %v688 = vand.u32 %v87, 4294901760
    %689 = vmatmul.mubr.f32.gmra.mrb[0].mxu0 %v688
    %v690 = vpop.f32.mrb[0].mxu0
    %v691 = vadd.f32 %v598, %v690
    %v692 = vpop.f32.mrb[0].mxu0
    %693 = vmatprep.mubr.f32.mxu0 0.0
    %v694 = vand.u32 %v90, 4294901760
    %695 = vmatmul.mubr.f32.gmra.mrb[0].mxu0 %v694
    %v696 = vpop.f32.mrb[0].mxu0
    %v697 = vadd.f32 %v604, %v696
    %v698 = vpop.f32.mrb[0].mxu0
    %699 = vmatprep.mubr.f32.mxu0 0.0
    %v700 = vand.u32 %v93, 4294901760
    %701 = vmatmul.mubr.f32.gmra.mrb[0].mxu0 %v700
    %v702 = vpop.f32.mrb[0].mxu0
    %v703 = vadd.f32 %v610, %v702
    %v704 = vpop.f32.mrb[0].mxu0
    %705 = vmatprep.mubr.f32.mxu0 0.0
    %v706 = vand.u32 %v96, 4294901760
    %707 = vmatmul.mubr.f32.gmra.mrb[0].mxu0 %v706
    %v708 = vpop.f32.mrb[0].mxu0
    %v709 = vadd.f32 %v616, %v708
    %v710 = vpop.f32.mrb[0].mxu0
    %711 = vdwg.mxu0
    %716 = vrot.lane.b32.xlu0 %v691, 120
    %v717 = vpop.permute.xlu0 %716
    %718 = vrot.lane.b32.xlu0 %v697, 120
    %v719 = vpop.permute.xlu0 %718
    %720 = vrot.lane.b32.xlu0 %v703, 120
    %v721 = vpop.permute.xlu0 %720
    %722 = vrot.lane.b32.xlu0 %v709, 120
    %v723 = vpop.permute.xlu0 %722
    %724 = vrot.lane.b32.xlu0 %v691, 112
    %v725 = vpop.permute.xlu0 %724
    %726 = vrot.lane.b32.xlu0 %v697, 112
    %v727 = vpop.permute.xlu0 %726
    %728 = vrot.lane.b32.xlu0 %v703, 112
    %v729 = vpop.permute.xlu0 %728
    %730 = vrot.lane.b32.xlu0 %v709, 112
    %v731 = vpop.permute.xlu0 %730
    %732 = vrot.lane.b32.xlu0 %v691, 104
    %v733 = vpop.permute.xlu0 %732
    %734 = vrot.lane.b32.xlu0 %v697, 104
    %v735 = vpop.permute.xlu0 %734
    %736 = vrot.lane.b32.xlu0 %v703, 104
    %v737 = vpop.permute.xlu0 %736
    %738 = vrot.lane.b32.xlu0 %v709, 104
    %v739 = vpop.permute.xlu0 %738
    %v740 = vld [vmem:[#allocation5] sm:$0xff]
    %v741 = vld [vmem:[#allocation5 + $0x8] sm:$0xff]
    %v742 = vld [vmem:[#allocation5 + $0x10] sm:$0xff]
    %v743 = vld [vmem:[#allocation5 + $0x18] sm:$0xff]
    %v744 = vld [vmem:[#allocation5 + $0x20] sm:$0xff]
    %v745 = vld [vmem:[#allocation5 + $0x28] sm:$0xff]
    %v746 = vld [vmem:[#allocation5 + $0x30] sm:$0xff]
    %v747 = vld [vmem:[#allocation5 + $0x38] sm:$0xff]
    %v748 = vld [vmem:[#allocation5 + $0x40] sm:$0xff]
    %v749 = vld [vmem:[#allocation5 + $0x48] sm:$0xff]
    %v750 = vld [vmem:[#allocation5 + $0x50] sm:$0xff]
    %v751 = vld [vmem:[#allocation5 + $0x58] sm:$0xff]
    %v752 = vld [vmem:[#allocation5 + $0x60] sm:$0xff]
    %v753 = vld [vmem:[#allocation5 + $0x68] sm:$0xff]
    %v754 = vld [vmem:[#allocation5 + $0x70] sm:$0xff]
    %v755 = vld [vmem:[#allocation5 + $0x78] sm:$0xff]
    %756 = vrot.lane.b32.xlu0 %v691, 96
    %v757 = vpop.permute.xlu0 %756
    %758 = vrot.lane.b32.xlu0 %v697, 96
    %v759 = vpop.permute.xlu0 %758
    %760 = vrot.lane.b32.xlu0 %v703, 96
    %v761 = vpop.permute.xlu0 %760
    %762 = vrot.lane.b32.xlu0 %v709, 96
    %v763 = vpop.permute.xlu0 %762
    %764 = vrot.lane.b32.xlu0 %v717, 96
    %v765 = vpop.permute.xlu0 %764
    %766 = vrot.lane.b32.xlu0 %v719, 96
    %v767 = vpop.permute.xlu0 %766
    %768 = vrot.lane.b32.xlu0 %v721, 96
    %v769 = vpop.permute.xlu0 %768
    %770 = vrot.lane.b32.xlu0 %v723, 96
    %v771 = vpop.permute.xlu0 %770
    %772 = vrot.lane.b32.xlu0 %v725, 96
    %v773 = vpop.permute.xlu0 %772
    %774 = vrot.lane.b32.xlu0 %v727, 96
    %v775 = vpop.permute.xlu0 %774
    %776 = vrot.lane.b32.xlu0 %v729, 96
    %v777 = vpop.permute.xlu0 %776
    %778 = vrot.lane.b32.xlu0 %v731, 96
    %v779 = vpop.permute.xlu0 %778
    %780 = vrot.lane.b32.xlu0 %v733, 96
    %v781 = vpop.permute.xlu0 %780
    %782 = vrot.lane.b32.xlu0 %v735, 96
    %v783 = vpop.permute.xlu0 %782
    %784 = vrot.lane.b32.xlu0 %v737, 96
    %v785 = vpop.permute.xlu0 %784
    %786 = vrot.lane.b32.xlu0 %v739, 96
    %v787 = vpop.permute.xlu0 %786
    %vm788 = vcmask 64512
    %v789 = vsel %vm788, %v691, 0
    %v791 = vsel %vm788, %v697, 0
    %v793 = vsel %vm788, %v703, 0
    %v795 = vsel %vm788, %v709, 0
    %v797 = vsel %vm788, %v717, 0
    %v799 = vsel %vm788, %v719, 0
    %v801 = vsel %vm788, %v721, 0
    %v803 = vsel %vm788, %v723, 0
    %v805 = vsel %vm788, %v725, 0
    %v807 = vsel %vm788, %v727, 0
    %v809 = vsel %vm788, %v729, 0
    %v811 = vsel %vm788, %v731, 0
    %v813 = vsel %vm788, %v733, 0
    %v815 = vsel %vm788, %v735, 0
    %v817 = vsel %vm788, %v737, 0
    %v819 = vsel %vm788, %v739, 0
    %v821 = vsel %vm788, %v757, 0
    %v823 = vsel %vm788, %v759, 0
    %v825 = vsel %vm788, %v761, 0
    %v827 = vsel %vm788, %v763, 0
    %v829 = vsel %vm788, %v765, 0
    %v831 = vsel %vm788, %v767, 0
    %v833 = vsel %vm788, %v769, 0
    %v835 = vsel %vm788, %v771, 0
    %v837 = vsel %vm788, %v773, 0
    %v839 = vsel %vm788, %v775, 0
    %v841 = vsel %vm788, %v777, 0
    %v843 = vsel %vm788, %v779, 0
    %v845 = vsel %vm788, %v781, 0
    %v847 = vsel %vm788, %v783, 0
    %v849 = vsel %vm788, %v785, 0
    %v851 = vsel %vm788, %v787, 0
    %853 = vmatprep.subr.mxu0 0.0
    %v854 = vand.u32 %v821, 4294901760
    %855 = vmatpush1.xpose.msra.mxu0 %v854
    %856 = vmatprep.subr.mxu0 0.0
    %v857 = vand.u32 %v823, 4294901760
    %858 = vmatpush1.xpose.msra.mxu0 %v857
    %859 = vmatprep.subr.mxu0 0.0
    %v860 = vand.u32 %v825, 4294901760
    %861 = vmatpush1.xpose.msra.mxu0 %v860
    %862 = vmatprep.subr.mxu0 0.0
    %v863 = vand.u32 %v827, 4294901760
    %864 = vmatpush1.xpose.msra.mxu0 %v863
    %865 = vmatprep.subr.mxu0 0.0
    %v866 = vand.u32 %v829, 4294901760
    %867 = vmatpush1.xpose.msra.mxu0 %v866
    %868 = vmatprep.subr.mxu0 0.0
    %v869 = vand.u32 %v831, 4294901760
    %870 = vmatpush1.xpose.msra.mxu0 %v869
    %871 = vmatprep.subr.mxu0 0.0
    %v872 = vand.u32 %v833, 4294901760
    %873 = vmatpush1.xpose.msra.mxu0 %v872
    %874 = vmatprep.subr.mxu0 0.0
    %v875 = vand.u32 %v835, 4294901760
    %876 = vmatpush1.xpose.msra.mxu0 %v875
    %877 = vmatprep.subr.mxu0 0.0
    %v878 = vand.u32 %v837, 4294901760
    %879 = vmatpush1.xpose.msra.mxu0 %v878
    %880 = vmatprep.subr.mxu0 0.0
    %v881 = vand.u32 %v839, 4294901760
    %882 = vmatpush1.xpose.msra.mxu0 %v881
    %883 = vmatprep.subr.mxu0 0.0
    %v884 = vand.u32 %v841, 4294901760
    %885 = vmatpush1.xpose.msra.mxu0 %v884
    %886 = vmatprep.subr.mxu0 0.0
    %v887 = vand.u32 %v843, 4294901760
    %888 = vmatpush1.xpose.msra.mxu0 %v887
    %889 = vmatprep.subr.mxu0 0.0
    %v890 = vand.u32 %v845, 4294901760
    %891 = vmatpush1.xpose.msra.mxu0 %v890
    %892 = vmatprep.subr.mxu0 0.0
    %v893 = vand.u32 %v847, 4294901760
    %894 = vmatpush1.xpose.msra.mxu0 %v893
    %895 = vmatprep.subr.mxu0 0.0
    %v896 = vand.u32 %v849, 4294901760
    %897 = vmatpush1.xpose.msra.mxu0 %v896
    %898 = vmatprep.subr.mxu0 0.0
    %v899 = vand.u32 %v851, 4294901760
    %900 = vmatpush1.xpose.msra.mxu0 %v899
    %901 = vmatprep.subr.mxu0 0.0
    %902 = vmatpush1.xpose.msra.mxu0 0.0
    %903 = vmatprep.subr.mxu0 0.0
    %904 = vmatpush1.xpose.msra.mxu0 0.0
    %905 = vmatprep.subr.mxu0 0.0
    %906 = vmatpush1.xpose.msra.mxu0 0.0
    %907 = vmatprep.subr.mxu0 0.0
    %908 = vmatpush1.xpose.msra.mxu0 0.0
    %909 = vmatprep.subr.mxu0 0.0
    %910 = vmatpush1.xpose.msra.mxu0 0.0
    %911 = vmatprep.subr.mxu0 0.0
    %912 = vmatpush1.xpose.msra.mxu0 0.0
    %913 = vmatprep.subr.mxu0 0.0
    %914 = vmatpush1.xpose.msra.mxu0 0.0
    %915 = vmatprep.subr.mxu0 0.0
    %916 = vmatpush1.xpose.msra.mxu0 0.0
    %917 = vmatprep.subr.mxu0 0.0
    %918 = vmatpush1.xpose.msra.mxu0 0.0
    %919 = vmatprep.subr.mxu0 0.0
    %920 = vmatpush1.xpose.msra.mxu0 0.0
    %921 = vmatprep.subr.mxu0 0.0
    %922 = vmatpush1.xpose.msra.mxu0 0.0
    %923 = vmatprep.subr.mxu0 0.0
    %924 = vmatpush1.xpose.msra.mxu0 0.0
    %925 = vmatprep.subr.mxu0 0.0
    %926 = vmatpush1.xpose.msra.mxu0 0.0
    %927 = vmatprep.subr.mxu0 0.0
    %928 = vmatpush1.xpose.msra.mxu0 0.0
    %929 = vmatprep.subr.mxu0 0.0
    %930 = vmatpush1.xpose.msra.mxu0 0.0
    %931 = vmatprep.subr.mxu0 0.0
    %932 = vmatpush1.xpose.msra.mxu0 0.0
    %933 = vmatprep.mubr.f32.mxu0 0.0
    %v934 = vand.u32 %v789, 4294901760
    %v935 = vsub.f32 %v789, %v934
    %v936 = vand.u32 %v935, 4294901760
    %v937 = vsub.f32 %v935, %v936
    %v938 = vand.u32 %v937, 4294901760
    %939 = vmatmul.mubr.f32.gmra.mrb[0].mxu0 %v938
    %v940 = vpop.f32.mrb[0].mxu0
    %v941 = vadd.f32 %v740, %v940
    %v942 = vpop.f32.mrb[0].mxu0
    %943 = vmatprep.mubr.f32.mxu0 0.0
    %v944 = vand.u32 %v791, 4294901760
    %v945 = vsub.f32 %v791, %v944
    %v946 = vand.u32 %v945, 4294901760
    %v947 = vsub.f32 %v945, %v946
    %v948 = vand.u32 %v947, 4294901760
    %949 = vmatmul.mubr.f32.gmra.mrb[0].mxu0 %v948
    %v950 = vpop.f32.mrb[0].mxu0
    %v951 = vadd.f32 %v741, %v950
    %v952 = vpop.f32.mrb[0].mxu0
    %953 = vmatprep.mubr.f32.mxu0 0.0
    %v954 = vand.u32 %v793, 4294901760
    %v955 = vsub.f32 %v793, %v954
    %v956 = vand.u32 %v955, 4294901760
    %v957 = vsub.f32 %v955, %v956
    %v958 = vand.u32 %v957, 4294901760
    %959 = vmatmul.mubr.f32.gmra.mrb[0].mxu0 %v958
    %v960 = vpop.f32.mrb[0].mxu0
    %v961 = vadd.f32 %v742, %v960
    %v962 = vpop.f32.mrb[0].mxu0
    %963 = vmatprep.mubr.f32.mxu0 0.0
    %v964 = vand.u32 %v795, 4294901760
    %v965 = vsub.f32 %v795, %v964
    %v966 = vand.u32 %v965, 4294901760
    %v967 = vsub.f32 %v965, %v966
    %v968 = vand.u32 %v967, 4294901760
    %969 = vmatmul.mubr.f32.gmra.mrb[0].mxu0 %v968
    %v970 = vpop.f32.mrb[0].mxu0
    %v971 = vadd.f32 %v743, %v970
    %v972 = vpop.f32.mrb[0].mxu0
    %973 = vmatprep.mubr.f32.mxu0 0.0
    %v974 = vand.u32 %v797, 4294901760
    %v975 = vsub.f32 %v797, %v974
    %v976 = vand.u32 %v975, 4294901760
    %v977 = vsub.f32 %v975, %v976
    %v978 = vand.u32 %v977, 4294901760
    %979 = vmatmul.mubr.f32.gmra.mrb[0].mxu0 %v978
    %v980 = vpop.f32.mrb[0].mxu0
    %v981 = vadd.f32 %v744, %v980
    %v982 = vpop.f32.mrb[0].mxu0
    %983 = vmatprep.mubr.f32.mxu0 0.0
    %v984 = vand.u32 %v799, 4294901760
    %v985 = vsub.f32 %v799, %v984
    %v986 = vand.u32 %v985, 4294901760
    %v987 = vsub.f32 %v985, %v986
    %v988 = vand.u32 %v987, 4294901760
    %989 = vmatmul.mubr.f32.gmra.mrb[0].mxu0 %v988
    %v990 = vpop.f32.mrb[0].mxu0
    %v991 = vadd.f32 %v745, %v990
    %v992 = vpop.f32.mrb[0].mxu0
    %993 = vmatprep.mubr.f32.mxu0 0.0
    %v994 = vand.u32 %v801, 4294901760
    %v995 = vsub.f32 %v801, %v994
    %v996 = vand.u32 %v995, 4294901760
    %v997 = vsub.f32 %v995, %v996
    %v998 = vand.u32 %v997, 4294901760
    %999 = vmatmul.mubr.f32.gmra.mrb[0].mxu0 %v998
    %v1000 = vpop.f32.mrb[0].mxu0
    %v1001 = vadd.f32 %v746, %v1000
    %v1002 = vpop.f32.mrb[0].mxu0
    %1003 = vmatprep.mubr.f32.mxu0 0.0
    %v1004 = vand.u32 %v803, 4294901760
    %v1005 = vsub.f32 %v803, %v1004
    %v1006 = vand.u32 %v1005, 4294901760
    %v1007 = vsub.f32 %v1005, %v1006
    %v1008 = vand.u32 %v1007, 4294901760
    %1009 = vmatmul.mubr.f32.gmra.mrb[0].mxu0 %v1008
    %v1010 = vpop.f32.mrb[0].mxu0
    %v1011 = vadd.f32 %v747, %v1010
    %v1012 = vpop.f32.mrb[0].mxu0
    %1013 = vmatprep.mubr.f32.mxu0 0.0
    %v1014 = vand.u32 %v805, 4294901760
    %v1015 = vsub.f32 %v805, %v1014
    %v1016 = vand.u32 %v1015, 4294901760
    %v1017 = vsub.f32 %v1015, %v1016
    %v1018 = vand.u32 %v1017, 4294901760
    %1019 = vmatmul.mubr.f32.gmra.mrb[0].mxu0 %v1018
    %v1020 = vpop.f32.mrb[0].mxu0
    %v1021 = vadd.f32 %v748, %v1020
    %v1022 = vpop.f32.mrb[0].mxu0
    %1023 = vmatprep.mubr.f32.mxu0 0.0
    %v1024 = vand.u32 %v807, 4294901760
    %v1025 = vsub.f32 %v807, %v1024
    %v1026 = vand.u32 %v1025, 4294901760
    %v1027 = vsub.f32 %v1025, %v1026
    %v1028 = vand.u32 %v1027, 4294901760
    %1029 = vmatmul.mubr.f32.gmra.mrb[0].mxu0 %v1028
    %v1030 = vpop.f32.mrb[0].mxu0
    %v1031 = vadd.f32 %v749, %v1030
    %v1032 = vpop.f32.mrb[0].mxu0
    %1033 = vmatprep.mubr.f32.mxu0 0.0
    %v1034 = vand.u32 %v809, 4294901760
    %v1035 = vsub.f32 %v809, %v1034
    %v1036 = vand.u32 %v1035, 4294901760
    %v1037 = vsub.f32 %v1035, %v1036
    %v1038 = vand.u32 %v1037, 4294901760
    %1039 = vmatmul.mubr.f32.gmra.mrb[0].mxu0 %v1038
    %v1040 = vpop.f32.mrb[0].mxu0
    %v1041 = vadd.f32 %v750, %v1040
    %v1042 = vpop.f32.mrb[0].mxu0
    %1043 = vmatprep.mubr.f32.mxu0 0.0
    %v1044 = vand.u32 %v811, 4294901760
    %v1045 = vsub.f32 %v811, %v1044
    %v1046 = vand.u32 %v1045, 4294901760
    %v1047 = vsub.f32 %v1045, %v1046
    %v1048 = vand.u32 %v1047, 4294901760
    %1049 = vmatmul.mubr.f32.gmra.mrb[0].mxu0 %v1048
    %v1050 = vpop.f32.mrb[0].mxu0
    %v1051 = vadd.f32 %v751, %v1050
    %v1052 = vpop.f32.mrb[0].mxu0
    %1053 = vmatprep.mubr.f32.mxu0 0.0
    %v1054 = vand.u32 %v813, 4294901760
    %v1055 = vsub.f32 %v813, %v1054
    %v1056 = vand.u32 %v1055, 4294901760
    %v1057 = vsub.f32 %v1055, %v1056
    %v1058 = vand.u32 %v1057, 4294901760
    %1059 = vmatmul.mubr.f32.gmra.mrb[0].mxu0 %v1058
    %v1060 = vpop.f32.mrb[0].mxu0
    %v1061 = vadd.f32 %v752, %v1060
    %v1062 = vpop.f32.mrb[0].mxu0
    %1063 = vmatprep.mubr.f32.mxu0 0.0
    %v1064 = vand.u32 %v815, 4294901760
    %v1065 = vsub.f32 %v815, %v1064
    %v1066 = vand.u32 %v1065, 4294901760
    %v1067 = vsub.f32 %v1065, %v1066
    %v1068 = vand.u32 %v1067, 4294901760
    %1069 = vmatmul.mubr.f32.gmra.mrb[0].mxu0 %v1068
    %v1070 = vpop.f32.mrb[0].mxu0
    %v1071 = vadd.f32 %v753, %v1070
    %v1072 = vpop.f32.mrb[0].mxu0
    %1073 = vmatprep.mubr.f32.mxu0 0.0
    %v1074 = vand.u32 %v817, 4294901760
    %v1075 = vsub.f32 %v817, %v1074
    %v1076 = vand.u32 %v1075, 4294901760
    %v1077 = vsub.f32 %v1075, %v1076
    %v1078 = vand.u32 %v1077, 4294901760
    %1079 = vmatmul.mubr.f32.gmra.mrb[0].mxu0 %v1078
    %v1080 = vpop.f32.mrb[0].mxu0
    %v1081 = vadd.f32 %v754, %v1080
    %v1082 = vpop.f32.mrb[0].mxu0
    %1083 = vmatprep.mubr.f32.mxu0 0.0
    %v1084 = vand.u32 %v819, 4294901760
    %v1085 = vsub.f32 %v819, %v1084
    %v1086 = vand.u32 %v1085, 4294901760
    %v1087 = vsub.f32 %v1085, %v1086
    %v1088 = vand.u32 %v1087, 4294901760
    %1089 = vmatmul.mubr.f32.gmra.mrb[0].mxu0 %v1088
    %v1090 = vpop.f32.mrb[0].mxu0
    %v1091 = vadd.f32 %v755, %v1090
    %v1092 = vpop.f32.mrb[0].mxu0
    %1093 = vdwg.mxu0
    %1094 = vmatprep.subr.mxu0 0.0
    %v1095 = vand.u32 %v821, 4294901760
    %v1096 = vsub.f32 %v821, %v1095
    %v1097 = vand.u32 %v1096, 4294901760
    %v1098 = vsub.f32 %v1096, %v1097
    %v1099 = vand.u32 %v1098, 4294901760
    %1100 = vmatpush1.xpose.msra.mxu0 %v1099
    %1101 = vmatprep.subr.mxu0 0.0
    %v1102 = vand.u32 %v823, 4294901760
    %v1103 = vsub.f32 %v823, %v1102
    %v1104 = vand.u32 %v1103, 4294901760
    %v1105 = vsub.f32 %v1103, %v1104
    %v1106 = vand.u32 %v1105, 4294901760
    %1107 = vmatpush1.xpose.msra.mxu0 %v1106
    %1108 = vmatprep.subr.mxu0 0.0
    %v1109 = vand.u32 %v825, 4294901760
    %v1110 = vsub.f32 %v825, %v1109
    %v1111 = vand.u32 %v1110, 4294901760
    %v1112 = vsub.f32 %v1110, %v1111
    %v1113 = vand.u32 %v1112, 4294901760
    %1114 = vmatpush1.xpose.msra.mxu0 %v1113
    %1115 = vmatprep.subr.mxu0 0.0
    %v1116 = vand.u32 %v827, 4294901760
    %v1117 = vsub.f32 %v827, %v1116
    %v1118 = vand.u32 %v1117, 4294901760
    %v1119 = vsub.f32 %v1117, %v1118
    %v1120 = vand.u32 %v1119, 4294901760
    %1121 = vmatpush1.xpose.msra.mxu0 %v1120
    %1122 = vmatprep.subr.mxu0 0.0
    %v1123 = vand.u32 %v829, 4294901760
    %v1124 = vsub.f32 %v829, %v1123
    %v1125 = vand.u32 %v1124, 4294901760
    %v1126 = vsub.f32 %v1124, %v1125
    %v1127 = vand.u32 %v1126, 4294901760
    %1128 = vmatpush1.xpose.msra.mxu0 %v1127
    %1129 = vmatprep.subr.mxu0 0.0
    %v1130 = vand.u32 %v831, 4294901760
    %v1131 = vsub.f32 %v831, %v1130
    %v1132 = vand.u32 %v1131, 4294901760
    %v1133 = vsub.f32 %v1131, %v1132
    %v1134 = vand.u32 %v1133, 4294901760
    %1135 = vmatpush1.xpose.msra.mxu0 %v1134
    %1136 = vmatprep.subr.mxu0 0.0
    %v1137 = vand.u32 %v833, 4294901760
    %v1138 = vsub.f32 %v833, %v1137
    %v1139 = vand.u32 %v1138, 4294901760
    %v1140 = vsub.f32 %v1138, %v1139
    %v1141 = vand.u32 %v1140, 4294901760
    %1142 = vmatpush1.xpose.msra.mxu0 %v1141
    %1143 = vmatprep.subr.mxu0 0.0
    %v1144 = vand.u32 %v835, 4294901760
    %v1145 = vsub.f32 %v835, %v1144
    %v1146 = vand.u32 %v1145, 4294901760
    %v1147 = vsub.f32 %v1145, %v1146
    %v1148 = vand.u32 %v1147, 4294901760
    %1149 = vmatpush1.xpose.msra.mxu0 %v1148
    %1150 = vmatprep.subr.mxu0 0.0
    %v1151 = vand.u32 %v837, 4294901760
    %v1152 = vsub.f32 %v837, %v1151
    %v1153 = vand.u32 %v1152, 4294901760
    %v1154 = vsub.f32 %v1152, %v1153
    %v1155 = vand.u32 %v1154, 4294901760
    %1156 = vmatpush1.xpose.msra.mxu0 %v1155
    %1157 = vmatprep.subr.mxu0 0.0
    %v1158 = vand.u32 %v839, 4294901760
    %v1159 = vsub.f32 %v839, %v1158
    %v1160 = vand.u32 %v1159, 4294901760
    %v1161 = vsub.f32 %v1159, %v1160
    %v1162 = vand.u32 %v1161, 4294901760
    %1163 = vmatpush1.xpose.msra.mxu0 %v1162
    %1164 = vmatprep.subr.mxu0 0.0
    %v1165 = vand.u32 %v841, 4294901760
    %v1166 = vsub.f32 %v841, %v1165
    %v1167 = vand.u32 %v1166, 4294901760
    %v1168 = vsub.f32 %v1166, %v1167
    %v1169 = vand.u32 %v1168, 4294901760
    %1170 = vmatpush1.xpose.msra.mxu0 %v1169
    %1171 = vmatprep.subr.mxu0 0.0
    %v1172 = vand.u32 %v843, 4294901760
    %v1173 = vsub.f32 %v843, %v1172
    %v1174 = vand.u32 %v1173, 4294901760
    %v1175 = vsub.f32 %v1173, %v1174
    %v1176 = vand.u32 %v1175, 4294901760
    %1177 = vmatpush1.xpose.msra.mxu0 %v1176
    %1178 = vmatprep.subr.mxu0 0.0
    %v1179 = vand.u32 %v845, 4294901760
    %v1180 = vsub.f32 %v845, %v1179
    %v1181 = vand.u32 %v1180, 4294901760
    %v1182 = vsub.f32 %v1180, %v1181
    %v1183 = vand.u32 %v1182, 4294901760
    %1184 = vmatpush1.xpose.msra.mxu0 %v1183
    %1185 = vmatprep.subr.mxu0 0.0
    %v1186 = vand.u32 %v847, 4294901760
    %v1187 = vsub.f32 %v847, %v1186
    %v1188 = vand.u32 %v1187, 4294901760
    %v1189 = vsub.f32 %v1187, %v1188
    %v1190 = vand.u32 %v1189, 4294901760
    %1191 = vmatpush1.xpose.msra.mxu0 %v1190
    %1192 = vmatprep.subr.mxu0 0.0
    %v1193 = vand.u32 %v849, 4294901760
    %v1194 = vsub.f32 %v849, %v1193
    %v1195 = vand.u32 %v1194, 4294901760
    %v1196 = vsub.f32 %v1194, %v1195
    %v1197 = vand.u32 %v1196, 4294901760
    %1198 = vmatpush1.xpose.msra.mxu0 %v1197
    %1199 = vmatprep.subr.mxu0 0.0
    %v1200 = vand.u32 %v851, 4294901760
    %v1201 = vsub.f32 %v851, %v1200
    %v1202 = vand.u32 %v1201, 4294901760
    %v1203 = vsub.f32 %v1201, %v1202
    %v1204 = vand.u32 %v1203, 4294901760
    %1205 = vmatpush1.xpose.msra.mxu0 %v1204
    %1206 = vmatprep.subr.mxu0 0.0
    %1207 = vmatpush1.xpose.msra.mxu0 0.0
    %1208 = vmatprep.subr.mxu0 0.0
    %1209 = vmatpush1.xpose.msra.mxu0 0.0
    %1210 = vmatprep.subr.mxu0 0.0
    %1211 = vmatpush1.xpose.msra.mxu0 0.0
    %1212 = vmatprep.subr.mxu0 0.0
    %1213 = vmatpush1.xpose.msra.mxu0 0.0
    %1214 = vmatprep.subr.mxu0 0.0
    %1215 = vmatpush1.xpose.msra.mxu0 0.0
    %1216 = vmatprep.subr.mxu0 0.0
    %1217 = vmatpush1.xpose.msra.mxu0 0.0
    %1218 = vmatprep.subr.mxu0 0.0
    %1219 = vmatpush1.xpose.msra.mxu0 0.0
    %1220 = vmatprep.subr.mxu0 0.0
    %1221 = vmatpush1.xpose.msra.mxu0 0.0
    %1222 = vmatprep.subr.mxu0 0.0
    %1223 = vmatpush1.xpose.msra.mxu0 0.0
    %1224 = vmatprep.subr.mxu0 0.0
    %1225 = vmatpush1.xpose.msra.mxu0 0.0
    %1226 = vmatprep.subr.mxu0 0.0
    %1227 = vmatpush1.xpose.msra.mxu0 0.0
    %1228 = vmatprep.subr.mxu0 0.0
    %1229 = vmatpush1.xpose.msra.mxu0 0.0
    %1230 = vmatprep.subr.mxu0 0.0
    %1231 = vmatpush1.xpose.msra.mxu0 0.0
    %1232 = vmatprep.subr.mxu0 0.0
    %1233 = vmatpush1.xpose.msra.mxu0 0.0
    %1234 = vmatprep.subr.mxu0 0.0
    %1235 = vmatpush1.xpose.msra.mxu0 0.0
    %1236 = vmatprep.subr.mxu0 0.0
    %1237 = vmatpush1.xpose.msra.mxu0 0.0
    %1238 = vmatprep.mubr.f32.mxu0 0.0
    %v1239 = vand.u32 %v789, 4294901760
    %1240 = vmatmul.mubr.f32.gmra.mrb[0].mxu0 %v1239
    %v1241 = vpop.f32.mrb[0].mxu0
    %v1242 = vadd.f32 %v941, %v1241
    %v1243 = vpop.f32.mrb[0].mxu0
    %1244 = vmatprep.mubr.f32.mxu0 0.0
    %v1245 = vand.u32 %v791, 4294901760
    %1246 = vmatmul.mubr.f32.gmra.mrb[0].mxu0 %v1245
    %v1247 = vpop.f32.mrb[0].mxu0
    %v1248 = vadd.f32 %v951, %v1247
    %v1249 = vpop.f32.mrb[0].mxu0
    %1250 = vmatprep.mubr.f32.mxu0 0.0
    %v1251 = vand.u32 %v793, 4294901760
    %1252 = vmatmul.mubr.f32.gmra.mrb[0].mxu0 %v1251
    %v1253 = vpop.f32.mrb[0].mxu0
    %v1254 = vadd.f32 %v961, %v1253
    %v1255 = vpop.f32.mrb[0].mxu0
    %1256 = vmatprep.mubr.f32.mxu0 0.0
    %v1257 = vand.u32 %v795, 4294901760
    %1258 = vmatmul.mubr.f32.gmra.mrb[0].mxu0 %v1257
    %v1259 = vpop.f32.mrb[0].mxu0
    %v1260 = vadd.f32 %v971, %v1259
    %v1261 = vpop.f32.mrb[0].mxu0
    %1262 = vmatprep.mubr.f32.mxu0 0.0
    %v1263 = vand.u32 %v797, 4294901760
    %1264 = vmatmul.mubr.f32.gmra.mrb[0].mxu0 %v1263
    %v1265 = vpop.f32.mrb[0].mxu0
    %v1266 = vadd.f32 %v981, %v1265
    %v1267 = vpop.f32.mrb[0].mxu0
    %1268 = vmatprep.mubr.f32.mxu0 0.0
    %v1269 = vand.u32 %v799, 4294901760
    %1270 = vmatmul.mubr.f32.gmra.mrb[0].mxu0 %v1269
    %v1271 = vpop.f32.mrb[0].mxu0
    %v1272 = vadd.f32 %v991, %v1271
    %v1273 = vpop.f32.mrb[0].mxu0
    %1274 = vmatprep.mubr.f32.mxu0 0.0
    %v1275 = vand.u32 %v801, 4294901760
    %1276 = vmatmul.mubr.f32.gmra.mrb[0].mxu0 %v1275
    %v1277 = vpop.f32.mrb[0].mxu0
    %v1278 = vadd.f32 %v1001, %v1277
    %v1279 = vpop.f32.mrb[0].mxu0
    %1280 = vmatprep.mubr.f32.mxu0 0.0
    %v1281 = vand.u32 %v803, 4294901760
    %1282 = vmatmul.mubr.f32.gmra.mrb[0].mxu0 %v1281
    %v1283 = vpop.f32.mrb[0].mxu0
    %v1284 = vadd.f32 %v1011, %v1283
    %v1285 = vpop.f32.mrb[0].mxu0
    %1286 = vmatprep.mubr.f32.mxu0 0.0
    %v1287 = vand.u32 %v805, 4294901760
    %1288 = vmatmul.mubr.f32.gmra.mrb[0].mxu0 %v1287
    %v1289 = vpop.f32.mrb[0].mxu0
    %v1290 = vadd.f32 %v1021, %v1289
    %v1291 = vpop.f32.mrb[0].mxu0
    %1292 = vmatprep.mubr.f32.mxu0 0.0
    %v1293 = vand.u32 %v807, 4294901760
    %1294 = vmatmul.mubr.f32.gmra.mrb[0].mxu0 %v1293
    %v1295 = vpop.f32.mrb[0].mxu0
    %v1296 = vadd.f32 %v1031, %v1295
    %v1297 = vpop.f32.mrb[0].mxu0
    %1298 = vmatprep.mubr.f32.mxu0 0.0
    %v1299 = vand.u32 %v809, 4294901760
    %1300 = vmatmul.mubr.f32.gmra.mrb[0].mxu0 %v1299
    %v1301 = vpop.f32.mrb[0].mxu0
    %v1302 = vadd.f32 %v1041, %v1301
    %v1303 = vpop.f32.mrb[0].mxu0
    %1304 = vmatprep.mubr.f32.mxu0 0.0
    %v1305 = vand.u32 %v811, 4294901760
    %1306 = vmatmul.mubr.f32.gmra.mrb[0].mxu0 %v1305
    %v1307 = vpop.f32.mrb[0].mxu0
    %v1308 = vadd.f32 %v1051, %v1307
    %v1309 = vpop.f32.mrb[0].mxu0
    %1310 = vmatprep.mubr.f32.mxu0 0.0
    %v1311 = vand.u32 %v813, 4294901760
    %1312 = vmatmul.mubr.f32.gmra.mrb[0].mxu0 %v1311
    %v1313 = vpop.f32.mrb[0].mxu0
    %v1314 = vadd.f32 %v1061, %v1313
    %v1315 = vpop.f32.mrb[0].mxu0
    %1316 = vmatprep.mubr.f32.mxu0 0.0
    %v1317 = vand.u32 %v815, 4294901760
    %1318 = vmatmul.mubr.f32.gmra.mrb[0].mxu0 %v1317
    %v1319 = vpop.f32.mrb[0].mxu0
    %v1320 = vadd.f32 %v1071, %v1319
    %v1321 = vpop.f32.mrb[0].mxu0
    %1322 = vmatprep.mubr.f32.mxu0 0.0
    %v1323 = vand.u32 %v817, 4294901760
    %1324 = vmatmul.mubr.f32.gmra.mrb[0].mxu0 %v1323
    %v1325 = vpop.f32.mrb[0].mxu0
    %v1326 = vadd.f32 %v1081, %v1325
    %v1327 = vpop.f32.mrb[0].mxu0
    %1328 = vmatprep.mubr.f32.mxu0 0.0
    %v1329 = vand.u32 %v819, 4294901760
    %1330 = vmatmul.mubr.f32.gmra.mrb[0].mxu0 %v1329
    %v1331 = vpop.f32.mrb[0].mxu0
    %v1332 = vadd.f32 %v1091, %v1331
    %v1333 = vpop.f32.mrb[0].mxu0
    %1334 = vdwg.mxu0
    %1335 = vmatprep.subr.mxu0 0.0
    %v1336 = vand.u32 %v821, 4294901760
    %v1337 = vsub.f32 %v821, %v1336
    %1338 = vmatpush1.xpose.msra.mxu0 %v1337
    %1339 = vmatprep.subr.mxu0 0.0
    %v1340 = vand.u32 %v823, 4294901760
    %v1341 = vsub.f32 %v823, %v1340
    %1342 = vmatpush1.xpose.msra.mxu0 %v1341
    %1343 = vmatprep.subr.mxu0 0.0
    %v1344 = vand.u32 %v825, 4294901760
    %v1345 = vsub.f32 %v825, %v1344
    %1346 = vmatpush1.xpose.msra.mxu0 %v1345
    %1347 = vmatprep.subr.mxu0 0.0
    %v1348 = vand.u32 %v827, 4294901760
    %v1349 = vsub.f32 %v827, %v1348
    %1350 = vmatpush1.xpose.msra.mxu0 %v1349
    %1351 = vmatprep.subr.mxu0 0.0
    %v1352 = vand.u32 %v829, 4294901760
    %v1353 = vsub.f32 %v829, %v1352
    %1354 = vmatpush1.xpose.msra.mxu0 %v1353
    %1355 = vmatprep.subr.mxu0 0.0
    %v1356 = vand.u32 %v831, 4294901760
    %v1357 = vsub.f32 %v831, %v1356
    %1358 = vmatpush1.xpose.msra.mxu0 %v1357
    %1359 = vmatprep.subr.mxu0 0.0
    %v1360 = vand.u32 %v833, 4294901760
    %v1361 = vsub.f32 %v833, %v1360
    %1362 = vmatpush1.xpose.msra.mxu0 %v1361
    %1363 = vmatprep.subr.mxu0 0.0
    %v1364 = vand.u32 %v835, 4294901760
    %v1365 = vsub.f32 %v835, %v1364
    %1366 = vmatpush1.xpose.msra.mxu0 %v1365
    %1367 = vmatprep.subr.mxu0 0.0
    %v1368 = vand.u32 %v837, 4294901760
    %v1369 = vsub.f32 %v837, %v1368
    %1370 = vmatpush1.xpose.msra.mxu0 %v1369
    %1371 = vmatprep.subr.mxu0 0.0
    %v1372 = vand.u32 %v839, 4294901760
    %v1373 = vsub.f32 %v839, %v1372
    %1374 = vmatpush1.xpose.msra.mxu0 %v1373
    %1375 = vmatprep.subr.mxu0 0.0
    %v1376 = vand.u32 %v841, 4294901760
    %v1377 = vsub.f32 %v841, %v1376
    %1378 = vmatpush1.xpose.msra.mxu0 %v1377
    %1379 = vmatprep.subr.mxu0 0.0
    %v1380 = vand.u32 %v843, 4294901760
    %v1381 = vsub.f32 %v843, %v1380
    %1382 = vmatpush1.xpose.msra.mxu0 %v1381
    %1383 = vmatprep.subr.mxu0 0.0
    %v1384 = vand.u32 %v845, 4294901760
    %v1385 = vsub.f32 %v845, %v1384
    %1386 = vmatpush1.xpose.msra.mxu0 %v1385
    %1387 = vmatprep.subr.mxu0 0.0
    %v1388 = vand.u32 %v847, 4294901760
    %v1389 = vsub.f32 %v847, %v1388
    %1390 = vmatpush1.xpose.msra.mxu0 %v1389
    %1391 = vmatprep.subr.mxu0 0.0
    %v1392 = vand.u32 %v849, 4294901760
    %v1393 = vsub.f32 %v849, %v1392
    %1394 = vmatpush1.xpose.msra.mxu0 %v1393
    %1395 = vmatprep.subr.mxu0 0.0
    %v1396 = vand.u32 %v851, 4294901760
    %v1397 = vsub.f32 %v851, %v1396
    %1398 = vmatpush1.xpose.msra.mxu0 %v1397
    %1399 = vmatprep.subr.mxu0 0.0
    %1400 = vmatpush1.xpose.msra.mxu0 0.0
    %1401 = vmatprep.subr.mxu0 0.0
    %1402 = vmatpush1.xpose.msra.mxu0 0.0
    %1403 = vmatprep.subr.mxu0 0.0
    %1404 = vmatpush1.xpose.msra.mxu0 0.0
    %1405 = vmatprep.subr.mxu0 0.0
    %1406 = vmatpush1.xpose.msra.mxu0 0.0
    %1407 = vmatprep.subr.mxu0 0.0
    %1408 = vmatpush1.xpose.msra.mxu0 0.0
    %1409 = vmatprep.subr.mxu0 0.0
    %1410 = vmatpush1.xpose.msra.mxu0 0.0
    %1411 = vmatprep.subr.mxu0 0.0
    %1412 = vmatpush1.xpose.msra.mxu0 0.0
    %1413 = vmatprep.subr.mxu0 0.0
    %1414 = vmatpush1.xpose.msra.mxu0 0.0
    %1415 = vmatprep.subr.mxu0 0.0
    %1416 = vmatpush1.xpose.msra.mxu0 0.0
    %1417 = vmatprep.subr.mxu0 0.0
    %1418 = vmatpush1.xpose.msra.mxu0 0.0
    %1419 = vmatprep.subr.mxu0 0.0
    %1420 = vmatpush1.xpose.msra.mxu0 0.0
    %1421 = vmatprep.subr.mxu0 0.0
    %1422 = vmatpush1.xpose.msra.mxu0 0.0
    %1423 = vmatprep.subr.mxu0 0.0
    %1424 = vmatpush1.xpose.msra.mxu0 0.0
    %1425 = vmatprep.subr.mxu0 0.0
    %1426 = vmatpush1.xpose.msra.mxu0 0.0
    %1427 = vmatprep.subr.mxu0 0.0
    %1428 = vmatpush1.xpose.msra.mxu0 0.0
    %1429 = vmatprep.subr.mxu0 0.0
    %1430 = vmatpush1.xpose.msra.mxu0 0.0
    %1431 = vmatprep.mubr.f32.mxu0 0.0
    %v1432 = vand.u32 %v789, 4294901760
    %v1433 = vsub.f32 %v789, %v1432
    %1434 = vmatmul.mubr.f32.gmra.mrb[0].mxu0 %v1433
    %v1435 = vpop.f32.mrb[0].mxu0
    %v1436 = vadd.f32 %v1242, %v1435
    %v1437 = vpop.f32.mrb[0].mxu0
    %1438 = vmatprep.mubr.f32.mxu0 0.0
    %v1439 = vand.u32 %v791, 4294901760
    %v1440 = vsub.f32 %v791, %v1439
    %1441 = vmatmul.mubr.f32.gmra.mrb[0].mxu0 %v1440
    %v1442 = vpop.f32.mrb[0].mxu0
    %v1443 = vadd.f32 %v1248, %v1442
    %v1444 = vpop.f32.mrb[0].mxu0
    %1445 = vmatprep.mubr.f32.mxu0 0.0
    %v1446 = vand.u32 %v793, 4294901760
    %v1447 = vsub.f32 %v793, %v1446
    %1448 = vmatmul.mubr.f32.gmra.mrb[0].mxu0 %v1447
    %v1449 = vpop.f32.mrb[0].mxu0
    %v1450 = vadd.f32 %v1254, %v1449
    %v1451 = vpop.f32.mrb[0].mxu0
    %1452 = vmatprep.mubr.f32.mxu0 0.0
    %v1453 = vand.u32 %v795, 4294901760
    %v1454 = vsub.f32 %v795, %v1453
    %1455 = vmatmul.mubr.f32.gmra.mrb[0].mxu0 %v1454
    %v1456 = vpop.f32.mrb[0].mxu0
    %v1457 = vadd.f32 %v1260, %v1456
    %v1458 = vpop.f32.mrb[0].mxu0
    %1459 = vmatprep.mubr.f32.mxu0 0.0
    %v1460 = vand.u32 %v797, 4294901760
    %v1461 = vsub.f32 %v797, %v1460
    %1462 = vmatmul.mubr.f32.gmra.mrb[0].mxu0 %v1461
    %v1463 = vpop.f32.mrb[0].mxu0
    %v1464 = vadd.f32 %v1266, %v1463
    %v1465 = vpop.f32.mrb[0].mxu0
    %1466 = vmatprep.mubr.f32.mxu0 0.0
    %v1467 = vand.u32 %v799, 4294901760
    %v1468 = vsub.f32 %v799, %v1467
    %1469 = vmatmul.mubr.f32.gmra.mrb[0].mxu0 %v1468
    %v1470 = vpop.f32.mrb[0].mxu0
    %v1471 = vadd.f32 %v1272, %v1470
    %v1472 = vpop.f32.mrb[0].mxu0
    %1473 = vmatprep.mubr.f32.mxu0 0.0
    %v1474 = vand.u32 %v801, 4294901760
    %v1475 = vsub.f32 %v801, %v1474
    %1476 = vmatmul.mubr.f32.gmra.mrb[0].mxu0 %v1475
    %v1477 = vpop.f32.mrb[0].mxu0
    %v1478 = vadd.f32 %v1278, %v1477
    %v1479 = vpop.f32.mrb[0].mxu0
    %1480 = vmatprep.mubr.f32.mxu0 0.0
    %v1481 = vand.u32 %v803, 4294901760
    %v1482 = vsub.f32 %v803, %v1481
    %1483 = vmatmul.mubr.f32.gmra.mrb[0].mxu0 %v1482
    %v1484 = vpop.f32.mrb[0].mxu0
    %v1485 = vadd.f32 %v1284, %v1484
    %v1486 = vpop.f32.mrb[0].mxu0
    %1487 = vmatprep.mubr.f32.mxu0 0.0
    %v1488 = vand.u32 %v805, 4294901760
    %v1489 = vsub.f32 %v805, %v1488
    %1490 = vmatmul.mubr.f32.gmra.mrb[0].mxu0 %v1489
    %v1491 = vpop.f32.mrb[0].mxu0
    %v1492 = vadd.f32 %v1290, %v1491
    %v1493 = vpop.f32.mrb[0].mxu0
    %1494 = vmatprep.mubr.f32.mxu0 0.0
    %v1495 = vand.u32 %v807, 4294901760
    %v1496 = vsub.f32 %v807, %v1495
    %1497 = vmatmul.mubr.f32.gmra.mrb[0].mxu0 %v1496
    %v1498 = vpop.f32.mrb[0].mxu0
    %v1499 = vadd.f32 %v1296, %v1498
    %v1500 = vpop.f32.mrb[0].mxu0
    %1501 = vmatprep.mubr.f32.mxu0 0.0
    %v1502 = vand.u32 %v809, 4294901760
    %v1503 = vsub.f32 %v809, %v1502
    %1504 = vmatmul.mubr.f32.gmra.mrb[0].mxu0 %v1503
    %v1505 = vpop.f32.mrb[0].mxu0
    %v1506 = vadd.f32 %v1302, %v1505
    %v1507 = vpop.f32.mrb[0].mxu0
    %1508 = vmatprep.mubr.f32.mxu0 0.0
    %v1509 = vand.u32 %v811, 4294901760
    %v1510 = vsub.f32 %v811, %v1509
    %1511 = vmatmul.mubr.f32.gmra.mrb[0].mxu0 %v1510
    %v1512 = vpop.f32.mrb[0].mxu0
    %v1513 = vadd.f32 %v1308, %v1512
    %v1514 = vpop.f32.mrb[0].mxu0
    %1515 = vmatprep.mubr.f32.mxu0 0.0
    %v1516 = vand.u32 %v813, 4294901760
    %v1517 = vsub.f32 %v813, %v1516
    %1518 = vmatmul.mubr.f32.gmra.mrb[0].mxu0 %v1517
    %v1519 = vpop.f32.mrb[0].mxu0
    %v1520 = vadd.f32 %v1314, %v1519
    %v1521 = vpop.f32.mrb[0].mxu0
    %1522 = vmatprep.mubr.f32.mxu0 0.0
    %v1523 = vand.u32 %v815, 4294901760
    %v1524 = vsub.f32 %v815, %v1523
    %1525 = vmatmul.mubr.f32.gmra.mrb[0].mxu0 %v1524
    %v1526 = vpop.f32.mrb[0].mxu0
    %v1527 = vadd.f32 %v1320, %v1526
    %v1528 = vpop.f32.mrb[0].mxu0
    %1529 = vmatprep.mubr.f32.mxu0 0.0
    %v1530 = vand.u32 %v817, 4294901760
    %v1531 = vsub.f32 %v817, %v1530
    %1532 = vmatmul.mubr.f32.gmra.mrb[0].mxu0 %v1531
    %v1533 = vpop.f32.mrb[0].mxu0
    %v1534 = vadd.f32 %v1326, %v1533
    %v1535 = vpop.f32.mrb[0].mxu0
    %1536 = vmatprep.mubr.f32.mxu0 0.0
    %v1537 = vand.u32 %v819, 4294901760
    %v1538 = vsub.f32 %v819, %v1537
    %1539 = vmatmul.mubr.f32.gmra.mrb[0].mxu0 %v1538
    %v1540 = vpop.f32.mrb[0].mxu0
    %v1541 = vadd.f32 %v1332, %v1540
    %v1542 = vpop.f32.mrb[0].mxu0
    %1543 = vdwg.mxu0
    %1544 = vmatprep.subr.mxu0 0.0
    %v1545 = vand.u32 %v821, 4294901760
    %1546 = vmatpush1.xpose.msra.mxu0 %v1545
    %1547 = vmatprep.subr.mxu0 0.0
    %v1548 = vand.u32 %v823, 4294901760
    %1549 = vmatpush1.xpose.msra.mxu0 %v1548
    %1550 = vmatprep.subr.mxu0 0.0
    %v1551 = vand.u32 %v825, 4294901760
    %1552 = vmatpush1.xpose.msra.mxu0 %v1551
    %1553 = vmatprep.subr.mxu0 0.0
    %v1554 = vand.u32 %v827, 4294901760
    %1555 = vmatpush1.xpose.msra.mxu0 %v1554
    %1556 = vmatprep.subr.mxu0 0.0
    %v1557 = vand.u32 %v829, 4294901760
    %1558 = vmatpush1.xpose.msra.mxu0 %v1557
    %1559 = vmatprep.subr.mxu0 0.0
    %v1560 = vand.u32 %v831, 4294901760
    %1561 = vmatpush1.xpose.msra.mxu0 %v1560
    %1562 = vmatprep.subr.mxu0 0.0
    %v1563 = vand.u32 %v833, 4294901760
    %1564 = vmatpush1.xpose.msra.mxu0 %v1563
    %1565 = vmatprep.subr.mxu0 0.0
    %v1566 = vand.u32 %v835, 4294901760
    %1567 = vmatpush1.xpose.msra.mxu0 %v1566
    %1568 = vmatprep.subr.mxu0 0.0
    %v1569 = vand.u32 %v837, 4294901760
    %1570 = vmatpush1.xpose.msra.mxu0 %v1569
    %1571 = vmatprep.subr.mxu0 0.0
    %v1572 = vand.u32 %v839, 4294901760
    %1573 = vmatpush1.xpose.msra.mxu0 %v1572
    %1574 = vmatprep.subr.mxu0 0.0
    %v1575 = vand.u32 %v841, 4294901760
    %1576 = vmatpush1.xpose.msra.mxu0 %v1575
    %1577 = vmatprep.subr.mxu0 0.0
    %v1578 = vand.u32 %v843, 4294901760
    %1579 = vmatpush1.xpose.msra.mxu0 %v1578
    %1580 = vmatprep.subr.mxu0 0.0
    %v1581 = vand.u32 %v845, 4294901760
    %1582 = vmatpush1.xpose.msra.mxu0 %v1581
    %1583 = vmatprep.subr.mxu0 0.0
    %v1584 = vand.u32 %v847, 4294901760
    %1585 = vmatpush1.xpose.msra.mxu0 %v1584
    %1586 = vmatprep.subr.mxu0 0.0
    %v1587 = vand.u32 %v849, 4294901760
    %1588 = vmatpush1.xpose.msra.mxu0 %v1587
    %1589 = vmatprep.subr.mxu0 0.0
    %v1590 = vand.u32 %v851, 4294901760
    %1591 = vmatpush1.xpose.msra.mxu0 %v1590
    %1592 = vmatprep.subr.mxu0 0.0
    %1593 = vmatpush1.xpose.msra.mxu0 0.0
    %1594 = vmatprep.subr.mxu0 0.0
    %1595 = vmatpush1.xpose.msra.mxu0 0.0
    %1596 = vmatprep.subr.mxu0 0.0
    %1597 = vmatpush1.xpose.msra.mxu0 0.0
    %1598 = vmatprep.subr.mxu0 0.0
    %1599 = vmatpush1.xpose.msra.mxu0 0.0
    %1600 = vmatprep.subr.mxu0 0.0
    %1601 = vmatpush1.xpose.msra.mxu0 0.0
    %1602 = vmatprep.subr.mxu0 0.0
    %1603 = vmatpush1.xpose.msra.mxu0 0.0
    %1604 = vmatprep.subr.mxu0 0.0
    %1605 = vmatpush1.xpose.msra.mxu0 0.0
    %1606 = vmatprep.subr.mxu0 0.0
    %1607 = vmatpush1.xpose.msra.mxu0 0.0
    %1608 = vmatprep.subr.mxu0 0.0
    %1609 = vmatpush1.xpose.msra.mxu0 0.0
    %1610 = vmatprep.subr.mxu0 0.0
    %1611 = vmatpush1.xpose.msra.mxu0 0.0
    %1612 = vmatprep.subr.mxu0 0.0
    %1613 = vmatpush1.xpose.msra.mxu0 0.0
    %1614 = vmatprep.subr.mxu0 0.0
    %1615 = vmatpush1.xpose.msra.mxu0 0.0
    %1616 = vmatprep.subr.mxu0 0.0
    %1617 = vmatpush1.xpose.msra.mxu0 0.0
    %1618 = vmatprep.subr.mxu0 0.0
    %1619 = vmatpush1.xpose.msra.mxu0 0.0
    %1620 = vmatprep.subr.mxu0 0.0
    %1621 = vmatpush1.xpose.msra.mxu0 0.0
    %1622 = vmatprep.subr.mxu0 0.0
    %1623 = vmatpush1.xpose.msra.mxu0 0.0
    %1624 = vmatprep.mubr.f32.mxu0 0.0
    %v1625 = vand.u32 %v789, 4294901760
    %v1626 = vsub.f32 %v789, %v1625
    %v1627 = vand.u32 %v1626, 4294901760
    %1628 = vmatmul.mubr.f32.gmra.mrb[0].mxu0 %v1627
    %v1629 = vpop.f32.mrb[0].mxu0
    %v1630 = vadd.f32 %v1436, %v1629
    %v1631 = vpop.f32.mrb[0].mxu0
    %1632 = vmatprep.mubr.f32.mxu0 0.0
    %v1633 = vand.u32 %v791, 4294901760
    %v1634 = vsub.f32 %v791, %v1633
    %v1635 = vand.u32 %v1634, 4294901760
    %1636 = vmatmul.mubr.f32.gmra.mrb[0].mxu0 %v1635
    %v1637 = vpop.f32.mrb[0].mxu0
    %v1638 = vadd.f32 %v1443, %v1637
    %v1639 = vpop.f32.mrb[0].mxu0
    %1640 = vmatprep.mubr.f32.mxu0 0.0
    %v1641 = vand.u32 %v793, 4294901760
    %v1642 = vsub.f32 %v793, %v1641
    %v1643 = vand.u32 %v1642, 4294901760
    %1644 = vmatmul.mubr.f32.gmra.mrb[0].mxu0 %v1643
    %v1645 = vpop.f32.mrb[0].mxu0
    %v1646 = vadd.f32 %v1450, %v1645
    %v1647 = vpop.f32.mrb[0].mxu0
    %1648 = vmatprep.mubr.f32.mxu0 0.0
    %v1649 = vand.u32 %v795, 4294901760
    %v1650 = vsub.f32 %v795, %v1649
    %v1651 = vand.u32 %v1650, 4294901760
    %1652 = vmatmul.mubr.f32.gmra.mrb[0].mxu0 %v1651
    %v1653 = vpop.f32.mrb[0].mxu0
    %v1654 = vadd.f32 %v1457, %v1653
    %v1655 = vpop.f32.mrb[0].mxu0
    %1656 = vmatprep.mubr.f32.mxu0 0.0
    %v1657 = vand.u32 %v797, 4294901760
    %v1658 = vsub.f32 %v797, %v1657
    %v1659 = vand.u32 %v1658, 4294901760
    %1660 = vmatmul.mubr.f32.gmra.mrb[0].mxu0 %v1659
    %v1661 = vpop.f32.mrb[0].mxu0
    %v1662 = vadd.f32 %v1464, %v1661
    %v1663 = vpop.f32.mrb[0].mxu0
    %1664 = vmatprep.mubr.f32.mxu0 0.0
    %v1665 = vand.u32 %v799, 4294901760
    %v1666 = vsub.f32 %v799, %v1665
    %v1667 = vand.u32 %v1666, 4294901760
    %1668 = vmatmul.mubr.f32.gmra.mrb[0].mxu0 %v1667
    %v1669 = vpop.f32.mrb[0].mxu0
    %v1670 = vadd.f32 %v1471, %v1669
    %v1671 = vpop.f32.mrb[0].mxu0
    %1672 = vmatprep.mubr.f32.mxu0 0.0
    %v1673 = vand.u32 %v801, 4294901760
    %v1674 = vsub.f32 %v801, %v1673
    %v1675 = vand.u32 %v1674, 4294901760
    %1676 = vmatmul.mubr.f32.gmra.mrb[0].mxu0 %v1675
    %v1677 = vpop.f32.mrb[0].mxu0
    %v1678 = vadd.f32 %v1478, %v1677
    %v1679 = vpop.f32.mrb[0].mxu0
    %1680 = vmatprep.mubr.f32.mxu0 0.0
    %v1681 = vand.u32 %v803, 4294901760
    %v1682 = vsub.f32 %v803, %v1681
    %v1683 = vand.u32 %v1682, 4294901760
    %1684 = vmatmul.mubr.f32.gmra.mrb[0].mxu0 %v1683
    %v1685 = vpop.f32.mrb[0].mxu0
    %v1686 = vadd.f32 %v1485, %v1685
    %v1687 = vpop.f32.mrb[0].mxu0
    %1688 = vmatprep.mubr.f32.mxu0 0.0
    %v1689 = vand.u32 %v805, 4294901760
    %v1690 = vsub.f32 %v805, %v1689
    %v1691 = vand.u32 %v1690, 4294901760
    %1692 = vmatmul.mubr.f32.gmra.mrb[0].mxu0 %v1691
    %v1693 = vpop.f32.mrb[0].mxu0
    %v1694 = vadd.f32 %v1492, %v1693
    %v1695 = vpop.f32.mrb[0].mxu0
    %1696 = vmatprep.mubr.f32.mxu0 0.0
    %v1697 = vand.u32 %v807, 4294901760
    %v1698 = vsub.f32 %v807, %v1697
    %v1699 = vand.u32 %v1698, 4294901760
    %1700 = vmatmul.mubr.f32.gmra.mrb[0].mxu0 %v1699
    %v1701 = vpop.f32.mrb[0].mxu0
    %v1702 = vadd.f32 %v1499, %v1701
    %v1703 = vpop.f32.mrb[0].mxu0
    %1704 = vmatprep.mubr.f32.mxu0 0.0
    %v1705 = vand.u32 %v809, 4294901760
    %v1706 = vsub.f32 %v809, %v1705
    %v1707 = vand.u32 %v1706, 4294901760
    %1708 = vmatmul.mubr.f32.gmra.mrb[0].mxu0 %v1707
    %v1709 = vpop.f32.mrb[0].mxu0
    %v1710 = vadd.f32 %v1506, %v1709
    %v1711 = vpop.f32.mrb[0].mxu0
    %1712 = vmatprep.mubr.f32.mxu0 0.0
    %v1713 = vand.u32 %v811, 4294901760
    %v1714 = vsub.f32 %v811, %v1713
    %v1715 = vand.u32 %v1714, 4294901760
    %1716 = vmatmul.mubr.f32.gmra.mrb[0].mxu0 %v1715
    %v1717 = vpop.f32.mrb[0].mxu0
    %v1718 = vadd.f32 %v1513, %v1717
    %v1719 = vpop.f32.mrb[0].mxu0
    %1720 = vmatprep.mubr.f32.mxu0 0.0
    %v1721 = vand.u32 %v813, 4294901760
    %v1722 = vsub.f32 %v813, %v1721
    %v1723 = vand.u32 %v1722, 4294901760
    %1724 = vmatmul.mubr.f32.gmra.mrb[0].mxu0 %v1723
    %v1725 = vpop.f32.mrb[0].mxu0
    %v1726 = vadd.f32 %v1520, %v1725
    %v1727 = vpop.f32.mrb[0].mxu0
    %1728 = vmatprep.mubr.f32.mxu0 0.0
    %v1729 = vand.u32 %v815, 4294901760
    %v1730 = vsub.f32 %v815, %v1729
    %v1731 = vand.u32 %v1730, 4294901760
    %1732 = vmatmul.mubr.f32.gmra.mrb[0].mxu0 %v1731
    %v1733 = vpop.f32.mrb[0].mxu0
    %v1734 = vadd.f32 %v1527, %v1733
    %v1735 = vpop.f32.mrb[0].mxu0
    %1736 = vmatprep.mubr.f32.mxu0 0.0
    %v1737 = vand.u32 %v817, 4294901760
    %v1738 = vsub.f32 %v817, %v1737
    %v1739 = vand.u32 %v1738, 4294901760
    %1740 = vmatmul.mubr.f32.gmra.mrb[0].mxu0 %v1739
    %v1741 = vpop.f32.mrb[0].mxu0
    %v1742 = vadd.f32 %v1534, %v1741
    %v1743 = vpop.f32.mrb[0].mxu0
    %1744 = vmatprep.mubr.f32.mxu0 0.0
    %v1745 = vand.u32 %v819, 4294901760
    %v1746 = vsub.f32 %v819, %v1745
    %v1747 = vand.u32 %v1746, 4294901760
    %1748 = vmatmul.mubr.f32.gmra.mrb[0].mxu0 %v1747
    %v1749 = vpop.f32.mrb[0].mxu0
    %v1750 = vadd.f32 %v1541, %v1749
    %v1751 = vpop.f32.mrb[0].mxu0
    %1752 = vdwg.mxu0
    %1753 = vmatprep.subr.mxu0 0.0
    %v1754 = vand.u32 %v821, 4294901760
    %v1755 = vsub.f32 %v821, %v1754
    %v1756 = vand.u32 %v1755, 4294901760
    %1757 = vmatpush1.xpose.msra.mxu0 %v1756
    %1758 = vmatprep.subr.mxu0 0.0
    %v1759 = vand.u32 %v823, 4294901760
    %v1760 = vsub.f32 %v823, %v1759
    %v1761 = vand.u32 %v1760, 4294901760
    %1762 = vmatpush1.xpose.msra.mxu0 %v1761
    %1763 = vmatprep.subr.mxu0 0.0
    %v1764 = vand.u32 %v825, 4294901760
    %v1765 = vsub.f32 %v825, %v1764
    %v1766 = vand.u32 %v1765, 4294901760
    %1767 = vmatpush1.xpose.msra.mxu0 %v1766
    %1768 = vmatprep.subr.mxu0 0.0
    %v1769 = vand.u32 %v827, 4294901760
    %v1770 = vsub.f32 %v827, %v1769
    %v1771 = vand.u32 %v1770, 4294901760
    %1772 = vmatpush1.xpose.msra.mxu0 %v1771
    %1773 = vmatprep.subr.mxu0 0.0
    %v1774 = vand.u32 %v829, 4294901760
    %v1775 = vsub.f32 %v829, %v1774
    %v1776 = vand.u32 %v1775, 4294901760
    %1777 = vmatpush1.xpose.msra.mxu0 %v1776
    %1778 = vmatprep.subr.mxu0 0.0
    %v1779 = vand.u32 %v831, 4294901760
    %v1780 = vsub.f32 %v831, %v1779
    %v1781 = vand.u32 %v1780, 4294901760
    %1782 = vmatpush1.xpose.msra.mxu0 %v1781
    %1783 = vmatprep.subr.mxu0 0.0
    %v1784 = vand.u32 %v833, 4294901760
    %v1785 = vsub.f32 %v833, %v1784
    %v1786 = vand.u32 %v1785, 4294901760
    %1787 = vmatpush1.xpose.msra.mxu0 %v1786
    %1788 = vmatprep.subr.mxu0 0.0
    %v1789 = vand.u32 %v835, 4294901760
    %v1790 = vsub.f32 %v835, %v1789
    %v1791 = vand.u32 %v1790, 4294901760
    %1792 = vmatpush1.xpose.msra.mxu0 %v1791
    %1793 = vmatprep.subr.mxu0 0.0
    %v1794 = vand.u32 %v837, 4294901760
    %v1795 = vsub.f32 %v837, %v1794
    %v1796 = vand.u32 %v1795, 4294901760
    %1797 = vmatpush1.xpose.msra.mxu0 %v1796
    %1798 = vmatprep.subr.mxu0 0.0
    %v1799 = vand.u32 %v839, 4294901760
    %v1800 = vsub.f32 %v839, %v1799
    %v1801 = vand.u32 %v1800, 4294901760
    %1802 = vmatpush1.xpose.msra.mxu0 %v1801
    %1803 = vmatprep.subr.mxu0 0.0
    %v1804 = vand.u32 %v841, 4294901760
    %v1805 = vsub.f32 %v841, %v1804
    %v1806 = vand.u32 %v1805, 4294901760
    %1807 = vmatpush1.xpose.msra.mxu0 %v1806
    %1808 = vmatprep.subr.mxu0 0.0
    %v1809 = vand.u32 %v843, 4294901760
    %v1810 = vsub.f32 %v843, %v1809
    %v1811 = vand.u32 %v1810, 4294901760
    %1812 = vmatpush1.xpose.msra.mxu0 %v1811
    %1813 = vmatprep.subr.mxu0 0.0
    %v1814 = vand.u32 %v845, 4294901760
    %v1815 = vsub.f32 %v845, %v1814
    %v1816 = vand.u32 %v1815, 4294901760
    %1817 = vmatpush1.xpose.msra.mxu0 %v1816
    %1818 = vmatprep.subr.mxu0 0.0
    %v1819 = vand.u32 %v847, 4294901760
    %v1820 = vsub.f32 %v847, %v1819
    %v1821 = vand.u32 %v1820, 4294901760
    %1822 = vmatpush1.xpose.msra.mxu0 %v1821
    %1823 = vmatprep.subr.mxu0 0.0
    %v1824 = vand.u32 %v849, 4294901760
    %v1825 = vsub.f32 %v849, %v1824
    %v1826 = vand.u32 %v1825, 4294901760
    %1827 = vmatpush1.xpose.msra.mxu0 %v1826
    %1828 = vmatprep.subr.mxu0 0.0
    %v1829 = vand.u32 %v851, 4294901760
    %v1830 = vsub.f32 %v851, %v1829
    %v1831 = vand.u32 %v1830, 4294901760
    %1832 = vmatpush1.xpose.msra.mxu0 %v1831
    %1833 = vmatprep.subr.mxu0 0.0
    %1834 = vmatpush1.xpose.msra.mxu0 0.0
    %1835 = vmatprep.subr.mxu0 0.0
    %1836 = vmatpush1.xpose.msra.mxu0 0.0
    %1837 = vmatprep.subr.mxu0 0.0
    %1838 = vmatpush1.xpose.msra.mxu0 0.0
    %1839 = vmatprep.subr.mxu0 0.0
    %1840 = vmatpush1.xpose.msra.mxu0 0.0
    %1841 = vmatprep.subr.mxu0 0.0
    %1842 = vmatpush1.xpose.msra.mxu0 0.0
    %1843 = vmatprep.subr.mxu0 0.0
    %1844 = vmatpush1.xpose.msra.mxu0 0.0
    %1845 = vmatprep.subr.mxu0 0.0
    %1846 = vmatpush1.xpose.msra.mxu0 0.0
    %1847 = vmatprep.subr.mxu0 0.0
    %1848 = vmatpush1.xpose.msra.mxu0 0.0
    %1849 = vmatprep.subr.mxu0 0.0
    %1850 = vmatpush1.xpose.msra.mxu0 0.0
    %1851 = vmatprep.subr.mxu0 0.0
    %1852 = vmatpush1.xpose.msra.mxu0 0.0
    %1853 = vmatprep.subr.mxu0 0.0
    %1854 = vmatpush1.xpose.msra.mxu0 0.0
    %1855 = vmatprep.subr.mxu0 0.0
    %1856 = vmatpush1.xpose.msra.mxu0 0.0
    %1857 = vmatprep.subr.mxu0 0.0
    %1858 = vmatpush1.xpose.msra.mxu0 0.0
    %1859 = vmatprep.subr.mxu0 0.0
    %1860 = vmatpush1.xpose.msra.mxu0 0.0
    %1861 = vmatprep.subr.mxu0 0.0
    %1862 = vmatpush1.xpose.msra.mxu0 0.0
    %1863 = vmatprep.subr.mxu0 0.0
    %1864 = vmatpush1.xpose.msra.mxu0 0.0
    %1865 = vmatprep.mubr.f32.mxu0 0.0
    %v1866 = vand.u32 %v789, 4294901760
    %1867 = vmatmul.mubr.f32.gmra.mrb[0].mxu0 %v1866
    %v1868 = vpop.f32.mrb[0].mxu0
    %v1869 = vadd.f32 %v1630, %v1868
    %v1870 = vpop.f32.mrb[0].mxu0
    %1871 = vmatprep.mubr.f32.mxu0 0.0
    %v1872 = vand.u32 %v791, 4294901760
    %1873 = vmatmul.mubr.f32.gmra.mrb[0].mxu0 %v1872
    %v1874 = vpop.f32.mrb[0].mxu0
    %v1875 = vadd.f32 %v1638, %v1874
    %v1876 = vpop.f32.mrb[0].mxu0
    %1877 = vmatprep.mubr.f32.mxu0 0.0
    %v1878 = vand.u32 %v793, 4294901760
    %1879 = vmatmul.mubr.f32.gmra.mrb[0].mxu0 %v1878
    %v1880 = vpop.f32.mrb[0].mxu0
    %v1881 = vadd.f32 %v1646, %v1880
    %v1882 = vpop.f32.mrb[0].mxu0
    %1883 = vmatprep.mubr.f32.mxu0 0.0
    %v1884 = vand.u32 %v795, 4294901760
    %1885 = vmatmul.mubr.f32.gmra.mrb[0].mxu0 %v1884
    %v1886 = vpop.f32.mrb[0].mxu0
    %v1887 = vadd.f32 %v1654, %v1886
    %v1888 = vpop.f32.mrb[0].mxu0
    %1889 = vmatprep.mubr.f32.mxu0 0.0
    %v1890 = vand.u32 %v797, 4294901760
    %1891 = vmatmul.mubr.f32.gmra.mrb[0].mxu0 %v1890
    %v1892 = vpop.f32.mrb[0].mxu0
    %v1893 = vadd.f32 %v1662, %v1892
    %v1894 = vpop.f32.mrb[0].mxu0
    %1895 = vmatprep.mubr.f32.mxu0 0.0
    %v1896 = vand.u32 %v799, 4294901760
    %1897 = vmatmul.mubr.f32.gmra.mrb[0].mxu0 %v1896
    %v1898 = vpop.f32.mrb[0].mxu0
    %v1899 = vadd.f32 %v1670, %v1898
    %v1900 = vpop.f32.mrb[0].mxu0
    %1901 = vmatprep.mubr.f32.mxu0 0.0
    %v1902 = vand.u32 %v801, 4294901760
    %1903 = vmatmul.mubr.f32.gmra.mrb[0].mxu0 %v1902
    %v1904 = vpop.f32.mrb[0].mxu0
    %v1905 = vadd.f32 %v1678, %v1904
    %v1906 = vpop.f32.mrb[0].mxu0
    %1907 = vmatprep.mubr.f32.mxu0 0.0
    %v1908 = vand.u32 %v803, 4294901760
    %1909 = vmatmul.mubr.f32.gmra.mrb[0].mxu0 %v1908
    %v1910 = vpop.f32.mrb[0].mxu0
    %v1911 = vadd.f32 %v1686, %v1910
    %v1912 = vpop.f32.mrb[0].mxu0
    %1913 = vmatprep.mubr.f32.mxu0 0.0
    %v1914 = vand.u32 %v805, 4294901760
    %1915 = vmatmul.mubr.f32.gmra.mrb[0].mxu0 %v1914
    %v1916 = vpop.f32.mrb[0].mxu0
    %v1917 = vadd.f32 %v1694, %v1916
    %v1918 = vpop.f32.mrb[0].mxu0
    %1919 = vmatprep.mubr.f32.mxu0 0.0
    %v1920 = vand.u32 %v807, 4294901760
    %1921 = vmatmul.mubr.f32.gmra.mrb[0].mxu0 %v1920
    %v1922 = vpop.f32.mrb[0].mxu0
    %v1923 = vadd.f32 %v1702, %v1922
    %v1924 = vpop.f32.mrb[0].mxu0
    %1925 = vmatprep.mubr.f32.mxu0 0.0
    %v1926 = vand.u32 %v809, 4294901760
    %1927 = vmatmul.mubr.f32.gmra.mrb[0].mxu0 %v1926
    %v1928 = vpop.f32.mrb[0].mxu0
    %v1929 = vadd.f32 %v1710, %v1928
    %v1930 = vpop.f32.mrb[0].mxu0
    %1931 = vmatprep.mubr.f32.mxu0 0.0
    %v1932 = vand.u32 %v811, 4294901760
    %1933 = vmatmul.mubr.f32.gmra.mrb[0].mxu0 %v1932
    %v1934 = vpop.f32.mrb[0].mxu0
    %v1935 = vadd.f32 %v1718, %v1934
    %v1936 = vpop.f32.mrb[0].mxu0
    %1937 = vmatprep.mubr.f32.mxu0 0.0
    %v1938 = vand.u32 %v813, 4294901760
    %1939 = vmatmul.mubr.f32.gmra.mrb[0].mxu0 %v1938
    %v1940 = vpop.f32.mrb[0].mxu0
    %v1941 = vadd.f32 %v1726, %v1940
    %v1942 = vpop.f32.mrb[0].mxu0
    %1943 = vmatprep.mubr.f32.mxu0 0.0
    %v1944 = vand.u32 %v815, 4294901760
    %1945 = vmatmul.mubr.f32.gmra.mrb[0].mxu0 %v1944
    %v1946 = vpop.f32.mrb[0].mxu0
    %v1947 = vadd.f32 %v1734, %v1946
    %v1948 = vpop.f32.mrb[0].mxu0
    %1949 = vmatprep.mubr.f32.mxu0 0.0
    %v1950 = vand.u32 %v817, 4294901760
    %1951 = vmatmul.mubr.f32.gmra.mrb[0].mxu0 %v1950
    %v1952 = vpop.f32.mrb[0].mxu0
    %v1953 = vadd.f32 %v1742, %v1952
    %v1954 = vpop.f32.mrb[0].mxu0
    %1955 = vmatprep.mubr.f32.mxu0 0.0
    %v1956 = vand.u32 %v819, 4294901760
    %1957 = vmatmul.mubr.f32.gmra.mrb[0].mxu0 %v1956
    %v1958 = vpop.f32.mrb[0].mxu0
    %v1959 = vadd.f32 %v1750, %v1958
    %v1960 = vpop.f32.mrb[0].mxu0
    %1961 = vdwg.mxu0
    %1962 = vmatprep.subr.mxu0 0.0
    %v1963 = vand.u32 %v821, 4294901760
    %1964 = vmatpush1.xpose.msra.mxu0 %v1963
    %1965 = vmatprep.subr.mxu0 0.0
    %v1966 = vand.u32 %v823, 4294901760
    %1967 = vmatpush1.xpose.msra.mxu0 %v1966
    %1968 = vmatprep.subr.mxu0 0.0
    %v1969 = vand.u32 %v825, 4294901760
    %1970 = vmatpush1.xpose.msra.mxu0 %v1969
    %1971 = vmatprep.subr.mxu0 0.0
    %v1972 = vand.u32 %v827, 4294901760
    %1973 = vmatpush1.xpose.msra.mxu0 %v1972
    %1974 = vmatprep.subr.mxu0 0.0
    %v1975 = vand.u32 %v829, 4294901760
    %1976 = vmatpush1.xpose.msra.mxu0 %v1975
    %1977 = vmatprep.subr.mxu0 0.0
    %v1978 = vand.u32 %v831, 4294901760
    %1979 = vmatpush1.xpose.msra.mxu0 %v1978
    %1980 = vmatprep.subr.mxu0 0.0
    %v1981 = vand.u32 %v833, 4294901760
    %1982 = vmatpush1.xpose.msra.mxu0 %v1981
    %1983 = vmatprep.subr.mxu0 0.0
    %v1984 = vand.u32 %v835, 4294901760
    %1985 = vmatpush1.xpose.msra.mxu0 %v1984
    %1986 = vmatprep.subr.mxu0 0.0
    %v1987 = vand.u32 %v837, 4294901760
    %1988 = vmatpush1.xpose.msra.mxu0 %v1987
    %1989 = vmatprep.subr.mxu0 0.0
    %v1990 = vand.u32 %v839, 4294901760
    %1991 = vmatpush1.xpose.msra.mxu0 %v1990
    %1992 = vmatprep.subr.mxu0 0.0
    %v1993 = vand.u32 %v841, 4294901760
    %1994 = vmatpush1.xpose.msra.mxu0 %v1993
    %1995 = vmatprep.subr.mxu0 0.0
    %v1996 = vand.u32 %v843, 4294901760
    %1997 = vmatpush1.xpose.msra.mxu0 %v1996
    %1998 = vmatprep.subr.mxu0 0.0
    %v1999 = vand.u32 %v845, 4294901760
    %2000 = vmatpush1.xpose.msra.mxu0 %v1999
    %2001 = vmatprep.subr.mxu0 0.0
    %v2002 = vand.u32 %v847, 4294901760
    %2003 = vmatpush1.xpose.msra.mxu0 %v2002
    %2004 = vmatprep.subr.mxu0 0.0
    %v2005 = vand.u32 %v849, 4294901760
    %2006 = vmatpush1.xpose.msra.mxu0 %v2005
    %2007 = vmatprep.subr.mxu0 0.0
    %v2008 = vand.u32 %v851, 4294901760
    %2009 = vmatpush1.xpose.msra.mxu0 %v2008
    %2010 = vmatprep.subr.mxu0 0.0
    %2011 = vmatpush1.xpose.msra.mxu0 0.0
    %2012 = vmatprep.subr.mxu0 0.0
    %2013 = vmatpush1.xpose.msra.mxu0 0.0
    %2014 = vmatprep.subr.mxu0 0.0
    %2015 = vmatpush1.xpose.msra.mxu0 0.0
    %2016 = vmatprep.subr.mxu0 0.0
    %2017 = vmatpush1.xpose.msra.mxu0 0.0
    %2018 = vmatprep.subr.mxu0 0.0
    %2019 = vmatpush1.xpose.msra.mxu0 0.0
    %2020 = vmatprep.subr.mxu0 0.0
    %2021 = vmatpush1.xpose.msra.mxu0 0.0
    %2022 = vmatprep.subr.mxu0 0.0
    %2023 = vmatpush1.xpose.msra.mxu0 0.0
    %2024 = vmatprep.subr.mxu0 0.0
    %2025 = vmatpush1.xpose.msra.mxu0 0.0
    %2026 = vmatprep.subr.mxu0 0.0
    %2027 = vmatpush1.xpose.msra.mxu0 0.0
    %2028 = vmatprep.subr.mxu0 0.0
    %2029 = vmatpush1.xpose.msra.mxu0 0.0
    %2030 = vmatprep.subr.mxu0 0.0
    %2031 = vmatpush1.xpose.msra.mxu0 0.0
    %2032 = vmatprep.subr.mxu0 0.0
    %2033 = vmatpush1.xpose.msra.mxu0 0.0
    %2034 = vmatprep.subr.mxu0 0.0
    %2035 = vmatpush1.xpose.msra.mxu0 0.0
    %2036 = vmatprep.subr.mxu0 0.0
    %2037 = vmatpush1.xpose.msra.mxu0 0.0
    %2038 = vmatprep.subr.mxu0 0.0
    %2039 = vmatpush1.xpose.msra.mxu0 0.0
    %2040 = vmatprep.subr.mxu0 0.0
    %2041 = vmatpush1.xpose.msra.mxu0 0.0
    %2042 = vmatprep.mubr.f32.mxu0 0.0
    %v2043 = vand.u32 %v789, 4294901760
    %2044 = vmatmul.mubr.f32.gmra.mrb[0].mxu0 %v2043
    %v2045 = vpop.f32.mrb[0].mxu0
    %v2046 = vadd.f32 %v1869, %v2045
    %v2047 = vpop.f32.mrb[0].mxu0
    %2048 = vmatprep.mubr.f32.mxu0 0.0
    %v2049 = vand.u32 %v791, 4294901760
    %2050 = vmatmul.mubr.f32.gmra.mrb[0].mxu0 %v2049
    %v2051 = vpop.f32.mrb[0].mxu0
    %v2052 = vadd.f32 %v1875, %v2051
    %v2053 = vpop.f32.mrb[0].mxu0
    %2054 = vmatprep.mubr.f32.mxu0 0.0
    %v2055 = vand.u32 %v793, 4294901760
    %2056 = vmatmul.mubr.f32.gmra.mrb[0].mxu0 %v2055
    %v2057 = vpop.f32.mrb[0].mxu0
    %v2058 = vadd.f32 %v1881, %v2057
    %v2059 = vpop.f32.mrb[0].mxu0
    %2060 = vmatprep.mubr.f32.mxu0 0.0
    %v2061 = vand.u32 %v795, 4294901760
    %2062 = vmatmul.mubr.f32.gmra.mrb[0].mxu0 %v2061
    %v2063 = vpop.f32.mrb[0].mxu0
    %v2064 = vadd.f32 %v1887, %v2063
    %v2065 = vpop.f32.mrb[0].mxu0
    %2066 = vmatprep.mubr.f32.mxu0 0.0
    %v2067 = vand.u32 %v797, 4294901760
    %2068 = vmatmul.mubr.f32.gmra.mrb[0].mxu0 %v2067
    %v2069 = vpop.f32.mrb[0].mxu0
    %v2070 = vadd.f32 %v1893, %v2069
    %v2071 = vpop.f32.mrb[0].mxu0
    %2072 = vmatprep.mubr.f32.mxu0 0.0
    %v2073 = vand.u32 %v799, 4294901760
    %2074 = vmatmul.mubr.f32.gmra.mrb[0].mxu0 %v2073
    %v2075 = vpop.f32.mrb[0].mxu0
    %v2076 = vadd.f32 %v1899, %v2075
    %v2077 = vpop.f32.mrb[0].mxu0
    %2078 = vmatprep.mubr.f32.mxu0 0.0
    %v2079 = vand.u32 %v801, 4294901760
    %2080 = vmatmul.mubr.f32.gmra.mrb[0].mxu0 %v2079
    %v2081 = vpop.f32.mrb[0].mxu0
    %v2082 = vadd.f32 %v1905, %v2081
    %v2083 = vpop.f32.mrb[0].mxu0
    %2084 = vmatprep.mubr.f32.mxu0 0.0
    %v2085 = vand.u32 %v803, 4294901760
    %2086 = vmatmul.mubr.f32.gmra.mrb[0].mxu0 %v2085
    %v2087 = vpop.f32.mrb[0].mxu0
    %v2088 = vadd.f32 %v1911, %v2087
    %v2089 = vpop.f32.mrb[0].mxu0
    %2090 = vmatprep.mubr.f32.mxu0 0.0
    %v2091 = vand.u32 %v805, 4294901760
    %2092 = vmatmul.mubr.f32.gmra.mrb[0].mxu0 %v2091
    %v2093 = vpop.f32.mrb[0].mxu0
    %v2094 = vadd.f32 %v1917, %v2093
    %v2095 = vpop.f32.mrb[0].mxu0
    %2096 = vmatprep.mubr.f32.mxu0 0.0
    %v2097 = vand.u32 %v807, 4294901760
    %2098 = vmatmul.mubr.f32.gmra.mrb[0].mxu0 %v2097
    %v2099 = vpop.f32.mrb[0].mxu0
    %v2100 = vadd.f32 %v1923, %v2099
    %v2101 = vpop.f32.mrb[0].mxu0
    %2102 = vmatprep.mubr.f32.mxu0 0.0
    %v2103 = vand.u32 %v809, 4294901760
    %2104 = vmatmul.mubr.f32.gmra.mrb[0].mxu0 %v2103
    %v2105 = vpop.f32.mrb[0].mxu0
    %v2106 = vadd.f32 %v1929, %v2105
    %v2107 = vpop.f32.mrb[0].mxu0
    %2108 = vmatprep.mubr.f32.mxu0 0.0
    %v2109 = vand.u32 %v811, 4294901760
    %2110 = vmatmul.mubr.f32.gmra.mrb[0].mxu0 %v2109
    %v2111 = vpop.f32.mrb[0].mxu0
    %v2112 = vadd.f32 %v1935, %v2111
    %v2113 = vpop.f32.mrb[0].mxu0
    %2114 = vmatprep.mubr.f32.mxu0 0.0
    %v2115 = vand.u32 %v813, 4294901760
    %2116 = vmatmul.mubr.f32.gmra.mrb[0].mxu0 %v2115
    %v2117 = vpop.f32.mrb[0].mxu0
    %v2118 = vadd.f32 %v1941, %v2117
    %v2119 = vpop.f32.mrb[0].mxu0
    %2120 = vmatprep.mubr.f32.mxu0 0.0
    %v2121 = vand.u32 %v815, 4294901760
    %2122 = vmatmul.mubr.f32.gmra.mrb[0].mxu0 %v2121
    %v2123 = vpop.f32.mrb[0].mxu0
    %v2124 = vadd.f32 %v1947, %v2123
    %v2125 = vpop.f32.mrb[0].mxu0
    %2126 = vmatprep.mubr.f32.mxu0 0.0
    %v2127 = vand.u32 %v817, 4294901760
    %2128 = vmatmul.mubr.f32.gmra.mrb[0].mxu0 %v2127
    %v2129 = vpop.f32.mrb[0].mxu0
    %v2130 = vadd.f32 %v1953, %v2129
    %v2131 = vpop.f32.mrb[0].mxu0
    %2132 = vmatprep.mubr.f32.mxu0 0.0
    %v2133 = vand.u32 %v819, 4294901760
    %2134 = vmatmul.mubr.f32.gmra.mrb[0].mxu0 %v2133
    %v2135 = vpop.f32.mrb[0].mxu0
    %v2136 = vadd.f32 %v1959, %v2135
    %v2137 = vpop.f32.mrb[0].mxu0
    %2138 = vdwg.mxu0
    %2139 = vmax.xlane.f32.xlu0 %v2046
    %v2140 = vpop.xlane.xlu0 %2139
    %2141 = vmax.xlane.f32.xlu0 %v2052
    %v2142 = vpop.xlane.xlu0 %2141
    %2143 = vmax.xlane.f32.xlu0 %v2058
    %v2144 = vpop.xlane.xlu0 %2143
    %2145 = vmax.xlane.f32.xlu0 %v2064
    %v2146 = vpop.xlane.xlu0 %2145
    %2147 = vmax.xlane.f32.xlu0 %v2070
    %v2148 = vpop.xlane.xlu0 %2147
    %2149 = vmax.xlane.f32.xlu0 %v2076
    %v2150 = vpop.xlane.xlu0 %2149
    %2151 = vmax.xlane.f32.xlu0 %v2082
    %v2152 = vpop.xlane.xlu0 %2151
    %2153 = vmax.xlane.f32.xlu0 %v2088
    %v2154 = vpop.xlane.xlu0 %2153
    %2155 = vmax.xlane.f32.xlu0 %v2094
    %v2156 = vpop.xlane.xlu0 %2155
    %2157 = vmax.xlane.f32.xlu0 %v2100
    %v2158 = vpop.xlane.xlu0 %2157
    %2159 = vmax.xlane.f32.xlu0 %v2106
    %v2160 = vpop.xlane.xlu0 %2159
    %2161 = vmax.xlane.f32.xlu0 %v2112
    %v2162 = vpop.xlane.xlu0 %2161
    %2163 = vmax.xlane.f32.xlu0 %v2118
    %v2164 = vpop.xlane.xlu0 %2163
    %2165 = vmax.xlane.f32.xlu0 %v2124
    %v2166 = vpop.xlane.xlu0 %2165
    %2167 = vmax.xlane.f32.xlu0 %v2130
    %v2168 = vpop.xlane.xlu0 %2167
    %2169 = vmax.xlane.f32.xlu0 %v2136
    %v2170 = vpop.xlane.xlu0 %2169
    %v2171 = vsub.f32 %v2046, %v2140
    %v2172 = vsub.f32 %v2052, %v2142
    %v2173 = vsub.f32 %v2058, %v2144
    %v2174 = vsub.f32 %v2064, %v2146
    %v2175 = vsub.f32 %v2070, %v2148
    %v2176 = vsub.f32 %v2076, %v2150
    %v2177 = vsub.f32 %v2082, %v2152
    %v2178 = vsub.f32 %v2088, %v2154
    %v2179 = vsub.f32 %v2094, %v2156
    %v2180 = vsub.f32 %v2100, %v2158
    %v2181 = vsub.f32 %v2106, %v2160
    %v2182 = vsub.f32 %v2112, %v2162
    %v2183 = vsub.f32 %v2118, %v2164
    %v2184 = vsub.f32 %v2124, %v2166
    %v2185 = vsub.f32 %v2130, %v2168
    %v2186 = vsub.f32 %v2136, %v2170
    %v2187 = vmul.f32 %v2171, 1.442695
    %v2188 = vpow.pop %v2187
    %v2189 = vmul.f32 %v2172, 1.442695
    %v2190 = vpow.pop %v2189
    %v2191 = vmul.f32 %v2173, 1.442695
    %v2192 = vpow.pop %v2191
    %v2193 = vmul.f32 %v2174, 1.442695
    %v2194 = vpow.pop %v2193
    %v2195 = vmul.f32 %v2175, 1.442695
    %v2196 = vpow.pop %v2195
    %v2197 = vmul.f32 %v2176, 1.442695
    %v2198 = vpow.pop %v2197
    %v2199 = vmul.f32 %v2177, 1.442695
    %v2200 = vpow.pop %v2199
    %v2201 = vmul.f32 %v2178, 1.442695
    %v2202 = vpow.pop %v2201
    %v2203 = vmul.f32 %v2179, 1.442695
    %v2204 = vpow.pop %v2203
    %v2205 = vmul.f32 %v2180, 1.442695
    %v2206 = vpow.pop %v2205
    %v2207 = vmul.f32 %v2181, 1.442695
    %v2208 = vpow.pop %v2207
    %v2209 = vmul.f32 %v2182, 1.442695
    %v2210 = vpow.pop %v2209
    %v2211 = vmul.f32 %v2183, 1.442695
    %v2212 = vpow.pop %v2211
    %v2213 = vmul.f32 %v2184, 1.442695
    %v2214 = vpow.pop %v2213
    %v2215 = vmul.f32 %v2185, 1.442695
    %v2216 = vpow.pop %v2215
    %v2217 = vmul.f32 %v2186, 1.442695
    %v2218 = vpow.pop %v2217
    %2219 = vadd.xlane.f32.xlu0 %v2188
    %v2220 = vpop.xlane.xlu0 %2219
    %2221 = vadd.xlane.f32.xlu0 %v2190
    %v2222 = vpop.xlane.xlu0 %2221
    %2223 = vadd.xlane.f32.xlu0 %v2192
    %v2224 = vpop.xlane.xlu0 %2223
    %2225 = vadd.xlane.f32.xlu0 %v2194
    %v2226 = vpop.xlane.xlu0 %2225
    %2227 = vadd.xlane.f32.xlu0 %v2196
    %v2228 = vpop.xlane.xlu0 %2227
    %2229 = vadd.xlane.f32.xlu0 %v2198
    %v2230 = vpop.xlane.xlu0 %2229
    %2231 = vadd.xlane.f32.xlu0 %v2200
    %v2232 = vpop.xlane.xlu0 %2231
    %2233 = vadd.xlane.f32.xlu0 %v2202
    %v2234 = vpop.xlane.xlu0 %2233
    %2235 = vadd.xlane.f32.xlu0 %v2204
    %v2236 = vpop.xlane.xlu0 %2235
    %2237 = vadd.xlane.f32.xlu0 %v2206
    %v2238 = vpop.xlane.xlu0 %2237
    %2239 = vadd.xlane.f32.xlu0 %v2208
    %v2240 = vpop.xlane.xlu0 %2239
    %2241 = vadd.xlane.f32.xlu0 %v2210
    %v2242 = vpop.xlane.xlu0 %2241
    %2243 = vadd.xlane.f32.xlu0 %v2212
    %v2244 = vpop.xlane.xlu0 %2243
    %2245 = vadd.xlane.f32.xlu0 %v2214
    %v2246 = vpop.xlane.xlu0 %2245
    %2247 = vadd.xlane.f32.xlu0 %v2216
    %v2248 = vpop.xlane.xlu0 %2247
    %2249 = vadd.xlane.f32.xlu0 %v2218
    %v2250 = vpop.xlane.xlu0 %2249
    %v2251 = vrcp.pop %v2220
    %v2252 = vmul.f32 %v2188, %v2251
    %v2253 = vrcp.pop %v2222
    %v2254 = vmul.f32 %v2190, %v2253
    %v2255 = vrcp.pop %v2224
    %v2256 = vmul.f32 %v2192, %v2255
    %v2257 = vrcp.pop %v2226
    %v2258 = vmul.f32 %v2194, %v2257
    %v2259 = vrcp.pop %v2228
    %v2260 = vmul.f32 %v2196, %v2259
    %v2261 = vrcp.pop %v2230
    %v2262 = vmul.f32 %v2198, %v2261
    %v2263 = vrcp.pop %v2232
    %v2264 = vmul.f32 %v2200, %v2263
    %v2265 = vrcp.pop %v2234
    %v2266 = vmul.f32 %v2202, %v2265
    %v2267 = vrcp.pop %v2236
    %v2268 = vmul.f32 %v2204, %v2267
    %v2269 = vrcp.pop %v2238
    %v2270 = vmul.f32 %v2206, %v2269
    %v2271 = vrcp.pop %v2240
    %v2272 = vmul.f32 %v2208, %v2271
    %v2273 = vrcp.pop %v2242
    %v2274 = vmul.f32 %v2210, %v2273
    %v2275 = vrcp.pop %v2244
    %v2276 = vmul.f32 %v2212, %v2275
    %v2277 = vrcp.pop %v2246
    %v2278 = vmul.f32 %v2214, %v2277
    %v2279 = vrcp.pop %v2248
    %v2280 = vmul.f32 %v2216, %v2279
    %v2281 = vrcp.pop %v2250
    %v2282 = vmul.f32 %v2218, %v2281
    %2283 = vrot.lane.b32.xlu0 %v691, 64
    %v2284 = vpop.permute.xlu0 %2283
    %2285 = vrot.lane.b32.xlu0 %v697, 64
    %v2286 = vpop.permute.xlu0 %2285
    %2287 = vrot.lane.b32.xlu0 %v703, 64
    %v2288 = vpop.permute.xlu0 %2287
    %2289 = vrot.lane.b32.xlu0 %v709, 64
    %v2290 = vpop.permute.xlu0 %2289
    %2291 = vrot.lane.b32.xlu0 %v717, 64
    %v2292 = vpop.permute.xlu0 %2291
    %2293 = vrot.lane.b32.xlu0 %v719, 64
    %v2294 = vpop.permute.xlu0 %2293
    %2295 = vrot.lane.b32.xlu0 %v721, 64
    %v2296 = vpop.permute.xlu0 %2295
    %2297 = vrot.lane.b32.xlu0 %v723, 64
    %v2298 = vpop.permute.xlu0 %2297
    %2299 = vrot.lane.b32.xlu0 %v725, 64
    %v2300 = vpop.permute.xlu0 %2299
    %2301 = vrot.lane.b32.xlu0 %v727, 64
    %v2302 = vpop.permute.xlu0 %2301
    %2303 = vrot.lane.b32.xlu0 %v729, 64
    %v2304 = vpop.permute.xlu0 %2303
    %2305 = vrot.lane.b32.xlu0 %v731, 64
    %v2306 = vpop.permute.xlu0 %2305
    %2307 = vrot.lane.b32.xlu0 %v733, 64
    %v2308 = vpop.permute.xlu0 %2307
    %2309 = vrot.lane.b32.xlu0 %v735, 64
    %v2310 = vpop.permute.xlu0 %2309
    %2311 = vrot.lane.b32.xlu0 %v737, 64
    %v2312 = vpop.permute.xlu0 %2311
    %2313 = vrot.lane.b32.xlu0 %v739, 64
    %v2314 = vpop.permute.xlu0 %2313
    %2331 = vmatprep.subr.mxu0 0.0
    %v2332 = vand.u32 %v2284, 4294901760
    %2333 = vmatpush1.msra.mxu0 %v2332
    %2334 = vmatprep.subr.mxu0 0.0
    %v2335 = vand.u32 %v2286, 4294901760
    %2336 = vmatpush1.msra.mxu0 %v2335
    %2337 = vmatprep.subr.mxu0 0.0
    %v2338 = vand.u32 %v2288, 4294901760
    %2339 = vmatpush1.msra.mxu0 %v2338
    %2340 = vmatprep.subr.mxu0 0.0
    %v2341 = vand.u32 %v2290, 4294901760
    %2342 = vmatpush1.msra.mxu0 %v2341
    %2343 = vmatprep.subr.mxu0 0.0
    %v2344 = vand.u32 %v2292, 4294901760
    %2345 = vmatpush1.msra.mxu0 %v2344
    %2346 = vmatprep.subr.mxu0 0.0
    %v2347 = vand.u32 %v2294, 4294901760
    %2348 = vmatpush1.msra.mxu0 %v2347
    %2349 = vmatprep.subr.mxu0 0.0
    %v2350 = vand.u32 %v2296, 4294901760
    %2351 = vmatpush1.msra.mxu0 %v2350
    %2352 = vmatprep.subr.mxu0 0.0
    %v2353 = vand.u32 %v2298, 4294901760
    %2354 = vmatpush1.msra.mxu0 %v2353
    %2355 = vmatprep.subr.mxu0 0.0
    %v2356 = vand.u32 %v2300, 4294901760
    %2357 = vmatpush1.msra.mxu0 %v2356
    %2358 = vmatprep.subr.mxu0 0.0
    %v2359 = vand.u32 %v2302, 4294901760
    %2360 = vmatpush1.msra.mxu0 %v2359
    %2361 = vmatprep.subr.mxu0 0.0
    %v2362 = vand.u32 %v2304, 4294901760
    %2363 = vmatpush1.msra.mxu0 %v2362
    %2364 = vmatprep.subr.mxu0 0.0
    %v2365 = vand.u32 %v2306, 4294901760
    %2366 = vmatpush1.msra.mxu0 %v2365
    %2367 = vmatprep.subr.mxu0 0.0
    %v2368 = vand.u32 %v2308, 4294901760
    %2369 = vmatpush1.msra.mxu0 %v2368
    %2370 = vmatprep.subr.mxu0 0.0
    %v2371 = vand.u32 %v2310, 4294901760
    %2372 = vmatpush1.msra.mxu0 %v2371
    %2373 = vmatprep.subr.mxu0 0.0
    %v2374 = vand.u32 %v2312, 4294901760
    %2375 = vmatpush1.msra.mxu0 %v2374
    %2376 = vmatprep.subr.mxu0 0.0
    %v2377 = vand.u32 %v2314, 4294901760
    %2378 = vmatpush1.msra.mxu0 %v2377
    %2379 = vmatprep.subr.mxu0 0.0
    %2380 = vmatpush1.msra.mxu0 0.0
    %2381 = vmatprep.subr.mxu0 0.0
    %2382 = vmatpush1.msra.mxu0 0.0
    %2383 = vmatprep.subr.mxu0 0.0
    %2384 = vmatpush1.msra.mxu0 0.0
    %2385 = vmatprep.subr.mxu0 0.0
    %2386 = vmatpush1.msra.mxu0 0.0
    %2387 = vmatprep.subr.mxu0 0.0
    %2388 = vmatpush1.msra.mxu0 0.0
    %2389 = vmatprep.subr.mxu0 0.0
    %2390 = vmatpush1.msra.mxu0 0.0
    %2391 = vmatprep.subr.mxu0 0.0
    %2392 = vmatpush1.msra.mxu0 0.0
    %2393 = vmatprep.subr.mxu0 0.0
    %2394 = vmatpush1.msra.mxu0 0.0
    %2395 = vmatprep.subr.mxu0 0.0
    %2396 = vmatpush1.msra.mxu0 0.0
    %2397 = vmatprep.subr.mxu0 0.0
    %2398 = vmatpush1.msra.mxu0 0.0
    %2399 = vmatprep.subr.mxu0 0.0
    %2400 = vmatpush1.msra.mxu0 0.0
    %2401 = vmatprep.subr.mxu0 0.0
    %2402 = vmatpush1.msra.mxu0 0.0
    %2403 = vmatprep.subr.mxu0 0.0
    %2404 = vmatpush1.msra.mxu0 0.0
    %2405 = vmatprep.subr.mxu0 0.0
    %2406 = vmatpush1.msra.mxu0 0.0
    %2407 = vmatprep.subr.mxu0 0.0
    %2408 = vmatpush1.msra.mxu0 0.0
    %2409 = vmatprep.subr.mxu0 0.0
    %2410 = vmatpush1.msra.mxu0 0.0
    %2411 = vmatprep.mubr.f32.mxu0 0.0
    %v2412 = vand.u32 %v2252, 4294901760
    %v2413 = vsub.f32 %v2252, %v2412
    %v2414 = vand.u32 %v2413, 4294901760
    %v2415 = vsub.f32 %v2413, %v2414
    %v2416 = vand.u32 %v2415, 4294901760
    %2417 = vmatmul.mubr.f32.gmra.mrb[0].mxu0 %v2416
    %v2418 = vpop.f32.mrb[0].mxu0
    %v2419 = vadd.f32 0.0, %v2418
    %v2420 = vpop.f32.mrb[0].mxu0
    %2421 = vmatprep.mubr.f32.mxu0 0.0
    %v2422 = vand.u32 %v2254, 4294901760
    %v2423 = vsub.f32 %v2254, %v2422
    %v2424 = vand.u32 %v2423, 4294901760
    %v2425 = vsub.f32 %v2423, %v2424
    %v2426 = vand.u32 %v2425, 4294901760
    %2427 = vmatmul.mubr.f32.gmra.mrb[0].mxu0 %v2426
    %v2428 = vpop.f32.mrb[0].mxu0
    %v2429 = vadd.f32 0.0, %v2428
    %v2430 = vpop.f32.mrb[0].mxu0
    %2431 = vmatprep.mubr.f32.mxu0 0.0
    %v2432 = vand.u32 %v2256, 4294901760
    %v2433 = vsub.f32 %v2256, %v2432
    %v2434 = vand.u32 %v2433, 4294901760
    %v2435 = vsub.f32 %v2433, %v2434
    %v2436 = vand.u32 %v2435, 4294901760
    %2437 = vmatmul.mubr.f32.gmra.mrb[0].mxu0 %v2436
    %v2438 = vpop.f32.mrb[0].mxu0
    %v2439 = vadd.f32 0.0, %v2438
    %v2440 = vpop.f32.mrb[0].mxu0
    %2441 = vmatprep.mubr.f32.mxu0 0.0
    %v2442 = vand.u32 %v2258, 4294901760
    %v2443 = vsub.f32 %v2258, %v2442
    %v2444 = vand.u32 %v2443, 4294901760
    %v2445 = vsub.f32 %v2443, %v2444
    %v2446 = vand.u32 %v2445, 4294901760
    %2447 = vmatmul.mubr.f32.gmra.mrb[0].mxu0 %v2446
    %v2448 = vpop.f32.mrb[0].mxu0
    %v2449 = vadd.f32 0.0, %v2448
    %v2450 = vpop.f32.mrb[0].mxu0
    %2451 = vmatprep.mubr.f32.mxu0 0.0
    %v2452 = vand.u32 %v2260, 4294901760
    %v2453 = vsub.f32 %v2260, %v2452
    %v2454 = vand.u32 %v2453, 4294901760
    %v2455 = vsub.f32 %v2453, %v2454
    %v2456 = vand.u32 %v2455, 4294901760
    %2457 = vmatmul.mubr.f32.gmra.mrb[0].mxu0 %v2456
    %v2458 = vpop.f32.mrb[0].mxu0
    %v2459 = vadd.f32 0.0, %v2458
    %v2460 = vpop.f32.mrb[0].mxu0
    %2461 = vmatprep.mubr.f32.mxu0 0.0
    %v2462 = vand.u32 %v2262, 4294901760
    %v2463 = vsub.f32 %v2262, %v2462
    %v2464 = vand.u32 %v2463, 4294901760
    %v2465 = vsub.f32 %v2463, %v2464
    %v2466 = vand.u32 %v2465, 4294901760
    %2467 = vmatmul.mubr.f32.gmra.mrb[0].mxu0 %v2466
    %v2468 = vpop.f32.mrb[0].mxu0
    %v2469 = vadd.f32 0.0, %v2468
    %v2470 = vpop.f32.mrb[0].mxu0
    %2471 = vmatprep.mubr.f32.mxu0 0.0
    %v2472 = vand.u32 %v2264, 4294901760
    %v2473 = vsub.f32 %v2264, %v2472
    %v2474 = vand.u32 %v2473, 4294901760
    %v2475 = vsub.f32 %v2473, %v2474
    %v2476 = vand.u32 %v2475, 4294901760
    %2477 = vmatmul.mubr.f32.gmra.mrb[0].mxu0 %v2476
    %v2478 = vpop.f32.mrb[0].mxu0
    %v2479 = vadd.f32 0.0, %v2478
    %v2480 = vpop.f32.mrb[0].mxu0
    %2481 = vmatprep.mubr.f32.mxu0 0.0
    %v2482 = vand.u32 %v2266, 4294901760
    %v2483 = vsub.f32 %v2266, %v2482
    %v2484 = vand.u32 %v2483, 4294901760
    %v2485 = vsub.f32 %v2483, %v2484
    %v2486 = vand.u32 %v2485, 4294901760
    %2487 = vmatmul.mubr.f32.gmra.mrb[0].mxu0 %v2486
    %v2488 = vpop.f32.mrb[0].mxu0
    %v2489 = vadd.f32 0.0, %v2488
    %v2490 = vpop.f32.mrb[0].mxu0
    %2491 = vmatprep.mubr.f32.mxu0 0.0
    %v2492 = vand.u32 %v2268, 4294901760
    %v2493 = vsub.f32 %v2268, %v2492
    %v2494 = vand.u32 %v2493, 4294901760
    %v2495 = vsub.f32 %v2493, %v2494
    %v2496 = vand.u32 %v2495, 4294901760
    %2497 = vmatmul.mubr.f32.gmra.mrb[0].mxu0 %v2496
    %v2498 = vpop.f32.mrb[0].mxu0
    %v2499 = vadd.f32 0.0, %v2498
    %v2500 = vpop.f32.mrb[0].mxu0
    %2501 = vmatprep.mubr.f32.mxu0 0.0
    %v2502 = vand.u32 %v2270, 4294901760
    %v2503 = vsub.f32 %v2270, %v2502
    %v2504 = vand.u32 %v2503, 4294901760
    %v2505 = vsub.f32 %v2503, %v2504
    %v2506 = vand.u32 %v2505, 4294901760
    %2507 = vmatmul.mubr.f32.gmra.mrb[0].mxu0 %v2506
    %v2508 = vpop.f32.mrb[0].mxu0
    %v2509 = vadd.f32 0.0, %v2508
    %v2510 = vpop.f32.mrb[0].mxu0
    %2511 = vmatprep.mubr.f32.mxu0 0.0
    %v2512 = vand.u32 %v2272, 4294901760
    %v2513 = vsub.f32 %v2272, %v2512
    %v2514 = vand.u32 %v2513, 4294901760
    %v2515 = vsub.f32 %v2513, %v2514
    %v2516 = vand.u32 %v2515, 4294901760
    %2517 = vmatmul.mubr.f32.gmra.mrb[0].mxu0 %v2516
    %v2518 = vpop.f32.mrb[0].mxu0
    %v2519 = vadd.f32 0.0, %v2518
    %v2520 = vpop.f32.mrb[0].mxu0
    %2521 = vmatprep.mubr.f32.mxu0 0.0
    %v2522 = vand.u32 %v2274, 4294901760
    %v2523 = vsub.f32 %v2274, %v2522
    %v2524 = vand.u32 %v2523, 4294901760
    %v2525 = vsub.f32 %v2523, %v2524
    %v2526 = vand.u32 %v2525, 4294901760
    %2527 = vmatmul.mubr.f32.gmra.mrb[0].mxu0 %v2526
    %v2528 = vpop.f32.mrb[0].mxu0
    %v2529 = vadd.f32 0.0, %v2528
    %v2530 = vpop.f32.mrb[0].mxu0
    %2531 = vmatprep.mubr.f32.mxu0 0.0
    %v2532 = vand.u32 %v2276, 4294901760
    %v2533 = vsub.f32 %v2276, %v2532
    %v2534 = vand.u32 %v2533, 4294901760
    %v2535 = vsub.f32 %v2533, %v2534
    %v2536 = vand.u32 %v2535, 4294901760
    %2537 = vmatmul.mubr.f32.gmra.mrb[0].mxu0 %v2536
    %v2538 = vpop.f32.mrb[0].mxu0
    %v2539 = vadd.f32 0.0, %v2538
    %v2540 = vpop.f32.mrb[0].mxu0
    %2541 = vmatprep.mubr.f32.mxu0 0.0
    %v2542 = vand.u32 %v2278, 4294901760
    %v2543 = vsub.f32 %v2278, %v2542
    %v2544 = vand.u32 %v2543, 4294901760
    %v2545 = vsub.f32 %v2543, %v2544
    %v2546 = vand.u32 %v2545, 4294901760
    %2547 = vmatmul.mubr.f32.gmra.mrb[0].mxu0 %v2546
    %v2548 = vpop.f32.mrb[0].mxu0
    %v2549 = vadd.f32 0.0, %v2548
    %v2550 = vpop.f32.mrb[0].mxu0
    %2551 = vmatprep.mubr.f32.mxu0 0.0
    %v2552 = vand.u32 %v2280, 4294901760
    %v2553 = vsub.f32 %v2280, %v2552
    %v2554 = vand.u32 %v2553, 4294901760
    %v2555 = vsub.f32 %v2553, %v2554
    %v2556 = vand.u32 %v2555, 4294901760
    %2557 = vmatmul.mubr.f32.gmra.mrb[0].mxu0 %v2556
    %v2558 = vpop.f32.mrb[0].mxu0
    %v2559 = vadd.f32 0.0, %v2558
    %v2560 = vpop.f32.mrb[0].mxu0
    %2561 = vmatprep.mubr.f32.mxu0 0.0
    %v2562 = vand.u32 %v2282, 4294901760
    %v2563 = vsub.f32 %v2282, %v2562
    %v2564 = vand.u32 %v2563, 4294901760
    %v2565 = vsub.f32 %v2563, %v2564
    %v2566 = vand.u32 %v2565, 4294901760
    %2567 = vmatmul.mubr.f32.gmra.mrb[0].mxu0 %v2566
    %v2568 = vpop.f32.mrb[0].mxu0
    %v2569 = vadd.f32 0.0, %v2568
    %v2570 = vpop.f32.mrb[0].mxu0
    %2571 = vdwg.mxu0
    %2572 = vmatprep.subr.mxu0 0.0
    %v2573 = vand.u32 %v2284, 4294901760
    %v2574 = vsub.f32 %v2284, %v2573
    %v2575 = vand.u32 %v2574, 4294901760
    %v2576 = vsub.f32 %v2574, %v2575
    %v2577 = vand.u32 %v2576, 4294901760
    %2578 = vmatpush1.msra.mxu0 %v2577
    %2579 = vmatprep.subr.mxu0 0.0
    %v2580 = vand.u32 %v2286, 4294901760
    %v2581 = vsub.f32 %v2286, %v2580
    %v2582 = vand.u32 %v2581, 4294901760
    %v2583 = vsub.f32 %v2581, %v2582
    %v2584 = vand.u32 %v2583, 4294901760
    %2585 = vmatpush1.msra.mxu0 %v2584
    %2586 = vmatprep.subr.mxu0 0.0
    %v2587 = vand.u32 %v2288, 4294901760
    %v2588 = vsub.f32 %v2288, %v2587
    %v2589 = vand.u32 %v2588, 4294901760
    %v2590 = vsub.f32 %v2588, %v2589
    %v2591 = vand.u32 %v2590, 4294901760
    %2592 = vmatpush1.msra.mxu0 %v2591
    %2593 = vmatprep.subr.mxu0 0.0
    %v2594 = vand.u32 %v2290, 4294901760
    %v2595 = vsub.f32 %v2290, %v2594
    %v2596 = vand.u32 %v2595, 4294901760
    %v2597 = vsub.f32 %v2595, %v2596
    %v2598 = vand.u32 %v2597, 4294901760
    %2599 = vmatpush1.msra.mxu0 %v2598
    %2600 = vmatprep.subr.mxu0 0.0
    %v2601 = vand.u32 %v2292, 4294901760
    %v2602 = vsub.f32 %v2292, %v2601
    %v2603 = vand.u32 %v2602, 4294901760
    %v2604 = vsub.f32 %v2602, %v2603
    %v2605 = vand.u32 %v2604, 4294901760
    %2606 = vmatpush1.msra.mxu0 %v2605
    %2607 = vmatprep.subr.mxu0 0.0
    %v2608 = vand.u32 %v2294, 4294901760
    %v2609 = vsub.f32 %v2294, %v2608
    %v2610 = vand.u32 %v2609, 4294901760
    %v2611 = vsub.f32 %v2609, %v2610
    %v2612 = vand.u32 %v2611, 4294901760
    %2613 = vmatpush1.msra.mxu0 %v2612
    %2614 = vmatprep.subr.mxu0 0.0
    %v2615 = vand.u32 %v2296, 4294901760
    %v2616 = vsub.f32 %v2296, %v2615
    %v2617 = vand.u32 %v2616, 4294901760
    %v2618 = vsub.f32 %v2616, %v2617
    %v2619 = vand.u32 %v2618, 4294901760
    %2620 = vmatpush1.msra.mxu0 %v2619
    %2621 = vmatprep.subr.mxu0 0.0
    %v2622 = vand.u32 %v2298, 4294901760
    %v2623 = vsub.f32 %v2298, %v2622
    %v2624 = vand.u32 %v2623, 4294901760
    %v2625 = vsub.f32 %v2623, %v2624
    %v2626 = vand.u32 %v2625, 4294901760
    %2627 = vmatpush1.msra.mxu0 %v2626
    %2628 = vmatprep.subr.mxu0 0.0
    %v2629 = vand.u32 %v2300, 4294901760
    %v2630 = vsub.f32 %v2300, %v2629
    %v2631 = vand.u32 %v2630, 4294901760
    %v2632 = vsub.f32 %v2630, %v2631
    %v2633 = vand.u32 %v2632, 4294901760
    %2634 = vmatpush1.msra.mxu0 %v2633
    %2635 = vmatprep.subr.mxu0 0.0
    %v2636 = vand.u32 %v2302, 4294901760
    %v2637 = vsub.f32 %v2302, %v2636
    %v2638 = vand.u32 %v2637, 4294901760
    %v2639 = vsub.f32 %v2637, %v2638
    %v2640 = vand.u32 %v2639, 4294901760
    %2641 = vmatpush1.msra.mxu0 %v2640
    %2642 = vmatprep.subr.mxu0 0.0
    %v2643 = vand.u32 %v2304, 4294901760
    %v2644 = vsub.f32 %v2304, %v2643
    %v2645 = vand.u32 %v2644, 4294901760
    %v2646 = vsub.f32 %v2644, %v2645
    %v2647 = vand.u32 %v2646, 4294901760
    %2648 = vmatpush1.msra.mxu0 %v2647
    %2649 = vmatprep.subr.mxu0 0.0
    %v2650 = vand.u32 %v2306, 4294901760
    %v2651 = vsub.f32 %v2306, %v2650
    %v2652 = vand.u32 %v2651, 4294901760
    %v2653 = vsub.f32 %v2651, %v2652
    %v2654 = vand.u32 %v2653, 4294901760
    %2655 = vmatpush1.msra.mxu0 %v2654
    %2656 = vmatprep.subr.mxu0 0.0
    %v2657 = vand.u32 %v2308, 4294901760
    %v2658 = vsub.f32 %v2308, %v2657
    %v2659 = vand.u32 %v2658, 4294901760
    %v2660 = vsub.f32 %v2658, %v2659
    %v2661 = vand.u32 %v2660, 4294901760
    %2662 = vmatpush1.msra.mxu0 %v2661
    %2663 = vmatprep.subr.mxu0 0.0
    %v2664 = vand.u32 %v2310, 4294901760
    %v2665 = vsub.f32 %v2310, %v2664
    %v2666 = vand.u32 %v2665, 4294901760
    %v2667 = vsub.f32 %v2665, %v2666
    %v2668 = vand.u32 %v2667, 4294901760
    %2669 = vmatpush1.msra.mxu0 %v2668
    %2670 = vmatprep.subr.mxu0 0.0
    %v2671 = vand.u32 %v2312, 4294901760
    %v2672 = vsub.f32 %v2312, %v2671
    %v2673 = vand.u32 %v2672, 4294901760
    %v2674 = vsub.f32 %v2672, %v2673
    %v2675 = vand.u32 %v2674, 4294901760
    %2676 = vmatpush1.msra.mxu0 %v2675
    %2677 = vmatprep.subr.mxu0 0.0
    %v2678 = vand.u32 %v2314, 4294901760
    %v2679 = vsub.f32 %v2314, %v2678
    %v2680 = vand.u32 %v2679, 4294901760
    %v2681 = vsub.f32 %v2679, %v2680
    %v2682 = vand.u32 %v2681, 4294901760
    %2683 = vmatpush1.msra.mxu0 %v2682
    %2684 = vmatprep.subr.mxu0 0.0
    %2685 = vmatpush1.msra.mxu0 0.0
    %2686 = vmatprep.subr.mxu0 0.0
    %2687 = vmatpush1.msra.mxu0 0.0
    %2688 = vmatprep.subr.mxu0 0.0
    %2689 = vmatpush1.msra.mxu0 0.0
    %2690 = vmatprep.subr.mxu0 0.0
    %2691 = vmatpush1.msra.mxu0 0.0
    %2692 = vmatprep.subr.mxu0 0.0
    %2693 = vmatpush1.msra.mxu0 0.0
    %2694 = vmatprep.subr.mxu0 0.0
    %2695 = vmatpush1.msra.mxu0 0.0
    %2696 = vmatprep.subr.mxu0 0.0
    %2697 = vmatpush1.msra.mxu0 0.0
    %2698 = vmatprep.subr.mxu0 0.0
    %2699 = vmatpush1.msra.mxu0 0.0
    %2700 = vmatprep.subr.mxu0 0.0
    %2701 = vmatpush1.msra.mxu0 0.0
    %2702 = vmatprep.subr.mxu0 0.0
    %2703 = vmatpush1.msra.mxu0 0.0
    %2704 = vmatprep.subr.mxu0 0.0
    %2705 = vmatpush1.msra.mxu0 0.0
    %2706 = vmatprep.subr.mxu0 0.0
    %2707 = vmatpush1.msra.mxu0 0.0
    %2708 = vmatprep.subr.mxu0 0.0
    %2709 = vmatpush1.msra.mxu0 0.0
    %2710 = vmatprep.subr.mxu0 0.0
    %2711 = vmatpush1.msra.mxu0 0.0
    %2712 = vmatprep.subr.mxu0 0.0
    %2713 = vmatpush1.msra.mxu0 0.0
    %2714 = vmatprep.subr.mxu0 0.0
    %2715 = vmatpush1.msra.mxu0 0.0
    %2716 = vmatprep.mubr.f32.mxu0 0.0
    %v2717 = vand.u32 %v2252, 4294901760
    %2718 = vmatmul.mubr.f32.gmra.mrb[0].mxu0 %v2717
    %v2719 = vpop.f32.mrb[0].mxu0
    %v2720 = vadd.f32 %v2419, %v2719
    %v2721 = vpop.f32.mrb[0].mxu0
    %2722 = vmatprep.mubr.f32.mxu0 0.0
    %v2723 = vand.u32 %v2254, 4294901760
    %2724 = vmatmul.mubr.f32.gmra.mrb[0].mxu0 %v2723
    %v2725 = vpop.f32.mrb[0].mxu0
    %v2726 = vadd.f32 %v2429, %v2725
    %v2727 = vpop.f32.mrb[0].mxu0
    %2728 = vmatprep.mubr.f32.mxu0 0.0
    %v2729 = vand.u32 %v2256, 4294901760
    %2730 = vmatmul.mubr.f32.gmra.mrb[0].mxu0 %v2729
    %v2731 = vpop.f32.mrb[0].mxu0
    %v2732 = vadd.f32 %v2439, %v2731
    %v2733 = vpop.f32.mrb[0].mxu0
    %2734 = vmatprep.mubr.f32.mxu0 0.0
    %v2735 = vand.u32 %v2258, 4294901760
    %2736 = vmatmul.mubr.f32.gmra.mrb[0].mxu0 %v2735
    %v2737 = vpop.f32.mrb[0].mxu0
    %v2738 = vadd.f32 %v2449, %v2737
    %v2739 = vpop.f32.mrb[0].mxu0
    %2740 = vmatprep.mubr.f32.mxu0 0.0
    %v2741 = vand.u32 %v2260, 4294901760
    %2742 = vmatmul.mubr.f32.gmra.mrb[0].mxu0 %v2741
    %v2743 = vpop.f32.mrb[0].mxu0
    %v2744 = vadd.f32 %v2459, %v2743
    %v2745 = vpop.f32.mrb[0].mxu0
    %2746 = vmatprep.mubr.f32.mxu0 0.0
    %v2747 = vand.u32 %v2262, 4294901760
    %2748 = vmatmul.mubr.f32.gmra.mrb[0].mxu0 %v2747
    %v2749 = vpop.f32.mrb[0].mxu0
    %v2750 = vadd.f32 %v2469, %v2749
    %v2751 = vpop.f32.mrb[0].mxu0
    %2752 = vmatprep.mubr.f32.mxu0 0.0
    %v2753 = vand.u32 %v2264, 4294901760
    %2754 = vmatmul.mubr.f32.gmra.mrb[0].mxu0 %v2753
    %v2755 = vpop.f32.mrb[0].mxu0
    %v2756 = vadd.f32 %v2479, %v2755
    %v2757 = vpop.f32.mrb[0].mxu0
    %2758 = vmatprep.mubr.f32.mxu0 0.0
    %v2759 = vand.u32 %v2266, 4294901760
    %2760 = vmatmul.mubr.f32.gmra.mrb[0].mxu0 %v2759
    %v2761 = vpop.f32.mrb[0].mxu0
    %v2762 = vadd.f32 %v2489, %v2761
    %v2763 = vpop.f32.mrb[0].mxu0
    %2764 = vmatprep.mubr.f32.mxu0 0.0
    %v2765 = vand.u32 %v2268, 4294901760
    %2766 = vmatmul.mubr.f32.gmra.mrb[0].mxu0 %v2765
    %v2767 = vpop.f32.mrb[0].mxu0
    %v2768 = vadd.f32 %v2499, %v2767
    %v2769 = vpop.f32.mrb[0].mxu0
    %2770 = vmatprep.mubr.f32.mxu0 0.0
    %v2771 = vand.u32 %v2270, 4294901760
    %2772 = vmatmul.mubr.f32.gmra.mrb[0].mxu0 %v2771
    %v2773 = vpop.f32.mrb[0].mxu0
    %v2774 = vadd.f32 %v2509, %v2773
    %v2775 = vpop.f32.mrb[0].mxu0
    %2776 = vmatprep.mubr.f32.mxu0 0.0
    %v2777 = vand.u32 %v2272, 4294901760
    %2778 = vmatmul.mubr.f32.gmra.mrb[0].mxu0 %v2777
    %v2779 = vpop.f32.mrb[0].mxu0
    %v2780 = vadd.f32 %v2519, %v2779
    %v2781 = vpop.f32.mrb[0].mxu0
    %2782 = vmatprep.mubr.f32.mxu0 0.0
    %v2783 = vand.u32 %v2274, 4294901760
    %2784 = vmatmul.mubr.f32.gmra.mrb[0].mxu0 %v2783
    %v2785 = vpop.f32.mrb[0].mxu0
    %v2786 = vadd.f32 %v2529, %v2785
    %v2787 = vpop.f32.mrb[0].mxu0
    %2788 = vmatprep.mubr.f32.mxu0 0.0
    %v2789 = vand.u32 %v2276, 4294901760
    %2790 = vmatmul.mubr.f32.gmra.mrb[0].mxu0 %v2789
    %v2791 = vpop.f32.mrb[0].mxu0
    %v2792 = vadd.f32 %v2539, %v2791
    %v2793 = vpop.f32.mrb[0].mxu0
    %2794 = vmatprep.mubr.f32.mxu0 0.0
    %v2795 = vand.u32 %v2278, 4294901760
    %2796 = vmatmul.mubr.f32.gmra.mrb[0].mxu0 %v2795
    %v2797 = vpop.f32.mrb[0].mxu0
    %v2798 = vadd.f32 %v2549, %v2797
    %v2799 = vpop.f32.mrb[0].mxu0
    %2800 = vmatprep.mubr.f32.mxu0 0.0
    %v2801 = vand.u32 %v2280, 4294901760
    %2802 = vmatmul.mubr.f32.gmra.mrb[0].mxu0 %v2801
    %v2803 = vpop.f32.mrb[0].mxu0
    %v2804 = vadd.f32 %v2559, %v2803
    %v2805 = vpop.f32.mrb[0].mxu0
    %2806 = vmatprep.mubr.f32.mxu0 0.0
    %v2807 = vand.u32 %v2282, 4294901760
    %2808 = vmatmul.mubr.f32.gmra.mrb[0].mxu0 %v2807
    %v2809 = vpop.f32.mrb[0].mxu0
    %v2810 = vadd.f32 %v2569, %v2809
    %v2811 = vpop.f32.mrb[0].mxu0
    %2812 = vdwg.mxu0
    %2813 = vmatprep.subr.mxu0 0.0
    %v2814 = vand.u32 %v2284, 4294901760
    %v2815 = vsub.f32 %v2284, %v2814
    %2816 = vmatpush1.msra.mxu0 %v2815
    %2817 = vmatprep.subr.mxu0 0.0
    %v2818 = vand.u32 %v2286, 4294901760
    %v2819 = vsub.f32 %v2286, %v2818
    %2820 = vmatpush1.msra.mxu0 %v2819
    %2821 = vmatprep.subr.mxu0 0.0
    %v2822 = vand.u32 %v2288, 4294901760
    %v2823 = vsub.f32 %v2288, %v2822
    %2824 = vmatpush1.msra.mxu0 %v2823
    %2825 = vmatprep.subr.mxu0 0.0
    %v2826 = vand.u32 %v2290, 4294901760
    %v2827 = vsub.f32 %v2290, %v2826
    %2828 = vmatpush1.msra.mxu0 %v2827
    %2829 = vmatprep.subr.mxu0 0.0
    %v2830 = vand.u32 %v2292, 4294901760
    %v2831 = vsub.f32 %v2292, %v2830
    %2832 = vmatpush1.msra.mxu0 %v2831
    %2833 = vmatprep.subr.mxu0 0.0
    %v2834 = vand.u32 %v2294, 4294901760
    %v2835 = vsub.f32 %v2294, %v2834
    %2836 = vmatpush1.msra.mxu0 %v2835
    %2837 = vmatprep.subr.mxu0 0.0
    %v2838 = vand.u32 %v2296, 4294901760
    %v2839 = vsub.f32 %v2296, %v2838
    %2840 = vmatpush1.msra.mxu0 %v2839
    %2841 = vmatprep.subr.mxu0 0.0
    %v2842 = vand.u32 %v2298, 4294901760
    %v2843 = vsub.f32 %v2298, %v2842
    %2844 = vmatpush1.msra.mxu0 %v2843
    %2845 = vmatprep.subr.mxu0 0.0
    %v2846 = vand.u32 %v2300, 4294901760
    %v2847 = vsub.f32 %v2300, %v2846
    %2848 = vmatpush1.msra.mxu0 %v2847
    %2849 = vmatprep.subr.mxu0 0.0
    %v2850 = vand.u32 %v2302, 4294901760
    %v2851 = vsub.f32 %v2302, %v2850
    %2852 = vmatpush1.msra.mxu0 %v2851
    %2853 = vmatprep.subr.mxu0 0.0
    %v2854 = vand.u32 %v2304, 4294901760
    %v2855 = vsub.f32 %v2304, %v2854
    %2856 = vmatpush1.msra.mxu0 %v2855
    %2857 = vmatprep.subr.mxu0 0.0
    %v2858 = vand.u32 %v2306, 4294901760
    %v2859 = vsub.f32 %v2306, %v2858
    %2860 = vmatpush1.msra.mxu0 %v2859
    %2861 = vmatprep.subr.mxu0 0.0
    %v2862 = vand.u32 %v2308, 4294901760
    %v2863 = vsub.f32 %v2308, %v2862
    %2864 = vmatpush1.msra.mxu0 %v2863
    %2865 = vmatprep.subr.mxu0 0.0
    %v2866 = vand.u32 %v2310, 4294901760
    %v2867 = vsub.f32 %v2310, %v2866
    %2868 = vmatpush1.msra.mxu0 %v2867
    %2869 = vmatprep.subr.mxu0 0.0
    %v2870 = vand.u32 %v2312, 4294901760
    %v2871 = vsub.f32 %v2312, %v2870
    %2872 = vmatpush1.msra.mxu0 %v2871
    %2873 = vmatprep.subr.mxu0 0.0
    %v2874 = vand.u32 %v2314, 4294901760
    %v2875 = vsub.f32 %v2314, %v2874
    %2876 = vmatpush1.msra.mxu0 %v2875
    %2877 = vmatprep.subr.mxu0 0.0
    %2878 = vmatpush1.msra.mxu0 0.0
    %2879 = vmatprep.subr.mxu0 0.0
    %2880 = vmatpush1.msra.mxu0 0.0
    %2881 = vmatprep.subr.mxu0 0.0
    %2882 = vmatpush1.msra.mxu0 0.0
    %2883 = vmatprep.subr.mxu0 0.0
    %2884 = vmatpush1.msra.mxu0 0.0
    %2885 = vmatprep.subr.mxu0 0.0
    %2886 = vmatpush1.msra.mxu0 0.0
    %2887 = vmatprep.subr.mxu0 0.0
    %2888 = vmatpush1.msra.mxu0 0.0
    %2889 = vmatprep.subr.mxu0 0.0
    %2890 = vmatpush1.msra.mxu0 0.0
    %2891 = vmatprep.subr.mxu0 0.0
    %2892 = vmatpush1.msra.mxu0 0.0
    %2893 = vmatprep.subr.mxu0 0.0
    %2894 = vmatpush1.msra.mxu0 0.0
    %2895 = vmatprep.subr.mxu0 0.0
    %2896 = vmatpush1.msra.mxu0 0.0
    %2897 = vmatprep.subr.mxu0 0.0
    %2898 = vmatpush1.msra.mxu0 0.0
    %2899 = vmatprep.subr.mxu0 0.0
    %2900 = vmatpush1.msra.mxu0 0.0
    %2901 = vmatprep.subr.mxu0 0.0
    %2902 = vmatpush1.msra.mxu0 0.0
    %2903 = vmatprep.subr.mxu0 0.0
    %2904 = vmatpush1.msra.mxu0 0.0
    %2905 = vmatprep.subr.mxu0 0.0
    %2906 = vmatpush1.msra.mxu0 0.0
    %2907 = vmatprep.subr.mxu0 0.0
    %2908 = vmatpush1.msra.mxu0 0.0
    %2909 = vmatprep.mubr.f32.mxu0 0.0
    %v2910 = vand.u32 %v2252, 4294901760
    %v2911 = vsub.f32 %v2252, %v2910
    %2912 = vmatmul.mubr.f32.gmra.mrb[0].mxu0 %v2911
    %v2913 = vpop.f32.mrb[0].mxu0
    %v2914 = vadd.f32 %v2720, %v2913
    %v2915 = vpop.f32.mrb[0].mxu0
    %2916 = vmatprep.mubr.f32.mxu0 0.0
    %v2917 = vand.u32 %v2254, 4294901760
    %v2918 = vsub.f32 %v2254, %v2917
    %2919 = vmatmul.mubr.f32.gmra.mrb[0].mxu0 %v2918
    %v2920 = vpop.f32.mrb[0].mxu0
    %v2921 = vadd.f32 %v2726, %v2920
    %v2922 = vpop.f32.mrb[0].mxu0
    %2923 = vmatprep.mubr.f32.mxu0 0.0
    %v2924 = vand.u32 %v2256, 4294901760
    %v2925 = vsub.f32 %v2256, %v2924
    %2926 = vmatmul.mubr.f32.gmra.mrb[0].mxu0 %v2925
    %v2927 = vpop.f32.mrb[0].mxu0
    %v2928 = vadd.f32 %v2732, %v2927
    %v2929 = vpop.f32.mrb[0].mxu0
    %2930 = vmatprep.mubr.f32.mxu0 0.0
    %v2931 = vand.u32 %v2258, 4294901760
    %v2932 = vsub.f32 %v2258, %v2931
    %2933 = vmatmul.mubr.f32.gmra.mrb[0].mxu0 %v2932
    %v2934 = vpop.f32.mrb[0].mxu0
    %v2935 = vadd.f32 %v2738, %v2934
    %v2936 = vpop.f32.mrb[0].mxu0
    %2937 = vmatprep.mubr.f32.mxu0 0.0
    %v2938 = vand.u32 %v2260, 4294901760
    %v2939 = vsub.f32 %v2260, %v2938
    %2940 = vmatmul.mubr.f32.gmra.mrb[0].mxu0 %v2939
    %v2941 = vpop.f32.mrb[0].mxu0
    %v2942 = vadd.f32 %v2744, %v2941
    %v2943 = vpop.f32.mrb[0].mxu0
    %2944 = vmatprep.mubr.f32.mxu0 0.0
    %v2945 = vand.u32 %v2262, 4294901760
    %v2946 = vsub.f32 %v2262, %v2945
    %2947 = vmatmul.mubr.f32.gmra.mrb[0].mxu0 %v2946
    %v2948 = vpop.f32.mrb[0].mxu0
    %v2949 = vadd.f32 %v2750, %v2948
    %v2950 = vpop.f32.mrb[0].mxu0
    %2951 = vmatprep.mubr.f32.mxu0 0.0
    %v2952 = vand.u32 %v2264, 4294901760
    %v2953 = vsub.f32 %v2264, %v2952
    %2954 = vmatmul.mubr.f32.gmra.mrb[0].mxu0 %v2953
    %v2955 = vpop.f32.mrb[0].mxu0
    %v2956 = vadd.f32 %v2756, %v2955
    %v2957 = vpop.f32.mrb[0].mxu0
    %2958 = vmatprep.mubr.f32.mxu0 0.0
    %v2959 = vand.u32 %v2266, 4294901760
    %v2960 = vsub.f32 %v2266, %v2959
    %2961 = vmatmul.mubr.f32.gmra.mrb[0].mxu0 %v2960
    %v2962 = vpop.f32.mrb[0].mxu0
    %v2963 = vadd.f32 %v2762, %v2962
    %v2964 = vpop.f32.mrb[0].mxu0
    %2965 = vmatprep.mubr.f32.mxu0 0.0
    %v2966 = vand.u32 %v2268, 4294901760
    %v2967 = vsub.f32 %v2268, %v2966
    %2968 = vmatmul.mubr.f32.gmra.mrb[0].mxu0 %v2967
    %v2969 = vpop.f32.mrb[0].mxu0
    %v2970 = vadd.f32 %v2768, %v2969
    %v2971 = vpop.f32.mrb[0].mxu0
    %2972 = vmatprep.mubr.f32.mxu0 0.0
    %v2973 = vand.u32 %v2270, 4294901760
    %v2974 = vsub.f32 %v2270, %v2973
    %2975 = vmatmul.mubr.f32.gmra.mrb[0].mxu0 %v2974
    %v2976 = vpop.f32.mrb[0].mxu0
    %v2977 = vadd.f32 %v2774, %v2976
    %v2978 = vpop.f32.mrb[0].mxu0
    %2979 = vmatprep.mubr.f32.mxu0 0.0
    %v2980 = vand.u32 %v2272, 4294901760
    %v2981 = vsub.f32 %v2272, %v2980
    %2982 = vmatmul.mubr.f32.gmra.mrb[0].mxu0 %v2981
    %v2983 = vpop.f32.mrb[0].mxu0
    %v2984 = vadd.f32 %v2780, %v2983
    %v2985 = vpop.f32.mrb[0].mxu0
    %2986 = vmatprep.mubr.f32.mxu0 0.0
    %v2987 = vand.u32 %v2274, 4294901760
    %v2988 = vsub.f32 %v2274, %v2987
    %2989 = vmatmul.mubr.f32.gmra.mrb[0].mxu0 %v2988
    %v2990 = vpop.f32.mrb[0].mxu0
    %v2991 = vadd.f32 %v2786, %v2990
    %v2992 = vpop.f32.mrb[0].mxu0
    %2993 = vmatprep.mubr.f32.mxu0 0.0
    %v2994 = vand.u32 %v2276, 4294901760
    %v2995 = vsub.f32 %v2276, %v2994
    %2996 = vmatmul.mubr.f32.gmra.mrb[0].mxu0 %v2995
    %v2997 = vpop.f32.mrb[0].mxu0
    %v2998 = vadd.f32 %v2792, %v2997
    %v2999 = vpop.f32.mrb[0].mxu0
    %3000 = vmatprep.mubr.f32.mxu0 0.0
    %v3001 = vand.u32 %v2278, 4294901760
    %v3002 = vsub.f32 %v2278, %v3001
    %3003 = vmatmul.mubr.f32.gmra.mrb[0].mxu0 %v3002
    %v3004 = vpop.f32.mrb[0].mxu0
    %v3005 = vadd.f32 %v2798, %v3004
    %v3006 = vpop.f32.mrb[0].mxu0
    %3007 = vmatprep.mubr.f32.mxu0 0.0
    %v3008 = vand.u32 %v2280, 4294901760
    %v3009 = vsub.f32 %v2280, %v3008
    %3010 = vmatmul.mubr.f32.gmra.mrb[0].mxu0 %v3009
    %v3011 = vpop.f32.mrb[0].mxu0
    %v3012 = vadd.f32 %v2804, %v3011
    %v3013 = vpop.f32.mrb[0].mxu0
    %3014 = vmatprep.mubr.f32.mxu0 0.0
    %v3015 = vand.u32 %v2282, 4294901760
    %v3016 = vsub.f32 %v2282, %v3015
    %3017 = vmatmul.mubr.f32.gmra.mrb[0].mxu0 %v3016
    %v3018 = vpop.f32.mrb[0].mxu0
    %v3019 = vadd.f32 %v2810, %v3018
    %v3020 = vpop.f32.mrb[0].mxu0
    %3021 = vdwg.mxu0
    %3022 = vmatprep.subr.mxu0 0.0
    %v3023 = vand.u32 %v2284, 4294901760
    %3024 = vmatpush1.msra.mxu0 %v3023
    %3025 = vmatprep.subr.mxu0 0.0
    %v3026 = vand.u32 %v2286, 4294901760
    %3027 = vmatpush1.msra.mxu0 %v3026
    %3028 = vmatprep.subr.mxu0 0.0
    %v3029 = vand.u32 %v2288, 4294901760
    %3030 = vmatpush1.msra.mxu0 %v3029
    %3031 = vmatprep.subr.mxu0 0.0
    %v3032 = vand.u32 %v2290, 4294901760
    %3033 = vmatpush1.msra.mxu0 %v3032
    %3034 = vmatprep.subr.mxu0 0.0
    %v3035 = vand.u32 %v2292, 4294901760
    %3036 = vmatpush1.msra.mxu0 %v3035
    %3037 = vmatprep.subr.mxu0 0.0
    %v3038 = vand.u32 %v2294, 4294901760
    %3039 = vmatpush1.msra.mxu0 %v3038
    %3040 = vmatprep.subr.mxu0 0.0
    %v3041 = vand.u32 %v2296, 4294901760
    %3042 = vmatpush1.msra.mxu0 %v3041
    %3043 = vmatprep.subr.mxu0 0.0
    %v3044 = vand.u32 %v2298, 4294901760
    %3045 = vmatpush1.msra.mxu0 %v3044
    %3046 = vmatprep.subr.mxu0 0.0
    %v3047 = vand.u32 %v2300, 4294901760
    %3048 = vmatpush1.msra.mxu0 %v3047
    %3049 = vmatprep.subr.mxu0 0.0
    %v3050 = vand.u32 %v2302, 4294901760
    %3051 = vmatpush1.msra.mxu0 %v3050
    %3052 = vmatprep.subr.mxu0 0.0
    %v3053 = vand.u32 %v2304, 4294901760
    %3054 = vmatpush1.msra.mxu0 %v3053
    %3055 = vmatprep.subr.mxu0 0.0
    %v3056 = vand.u32 %v2306, 4294901760
    %3057 = vmatpush1.msra.mxu0 %v3056
    %3058 = vmatprep.subr.mxu0 0.0
    %v3059 = vand.u32 %v2308, 4294901760
    %3060 = vmatpush1.msra.mxu0 %v3059
    %3061 = vmatprep.subr.mxu0 0.0
    %v3062 = vand.u32 %v2310, 4294901760
    %3063 = vmatpush1.msra.mxu0 %v3062
    %3064 = vmatprep.subr.mxu0 0.0
    %v3065 = vand.u32 %v2312, 4294901760
    %3066 = vmatpush1.msra.mxu0 %v3065
    %3067 = vmatprep.subr.mxu0 0.0
    %v3068 = vand.u32 %v2314, 4294901760
    %3069 = vmatpush1.msra.mxu0 %v3068
    %3070 = vmatprep.subr.mxu0 0.0
    %3071 = vmatpush1.msra.mxu0 0.0
    %3072 = vmatprep.subr.mxu0 0.0
    %3073 = vmatpush1.msra.mxu0 0.0
    %3074 = vmatprep.subr.mxu0 0.0
    %3075 = vmatpush1.msra.mxu0 0.0
    %3076 = vmatprep.subr.mxu0 0.0
    %3077 = vmatpush1.msra.mxu0 0.0
    %3078 = vmatprep.subr.mxu0 0.0
    %3079 = vmatpush1.msra.mxu0 0.0
    %3080 = vmatprep.subr.mxu0 0.0
    %3081 = vmatpush1.msra.mxu0 0.0
    %3082 = vmatprep.subr.mxu0 0.0
    %3083 = vmatpush1.msra.mxu0 0.0
    %3084 = vmatprep.subr.mxu0 0.0
    %3085 = vmatpush1.msra.mxu0 0.0
    %3086 = vmatprep.subr.mxu0 0.0
    %3087 = vmatpush1.msra.mxu0 0.0
    %3088 = vmatprep.subr.mxu0 0.0
    %3089 = vmatpush1.msra.mxu0 0.0
    %3090 = vmatprep.subr.mxu0 0.0
    %3091 = vmatpush1.msra.mxu0 0.0
    %3092 = vmatprep.subr.mxu0 0.0
    %3093 = vmatpush1.msra.mxu0 0.0
    %3094 = vmatprep.subr.mxu0 0.0
    %3095 = vmatpush1.msra.mxu0 0.0
    %3096 = vmatprep.subr.mxu0 0.0
    %3097 = vmatpush1.msra.mxu0 0.0
    %3098 = vmatprep.subr.mxu0 0.0
    %3099 = vmatpush1.msra.mxu0 0.0
    %3100 = vmatprep.subr.mxu0 0.0
    %3101 = vmatpush1.msra.mxu0 0.0
    %3102 = vmatprep.mubr.f32.mxu0 0.0
    %v3103 = vand.u32 %v2252, 4294901760
    %v3104 = vsub.f32 %v2252, %v3103
    %v3105 = vand.u32 %v3104, 4294901760
    %3106 = vmatmul.mubr.f32.gmra.mrb[0].mxu0 %v3105
    %v3107 = vpop.f32.mrb[0].mxu0
    %v3108 = vadd.f32 %v2914, %v3107
    %v3109 = vpop.f32.mrb[0].mxu0
    %3110 = vmatprep.mubr.f32.mxu0 0.0
    %v3111 = vand.u32 %v2254, 4294901760
    %v3112 = vsub.f32 %v2254, %v3111
    %v3113 = vand.u32 %v3112, 4294901760
    %3114 = vmatmul.mubr.f32.gmra.mrb[0].mxu0 %v3113
    %v3115 = vpop.f32.mrb[0].mxu0
    %v3116 = vadd.f32 %v2921, %v3115
    %v3117 = vpop.f32.mrb[0].mxu0
    %3118 = vmatprep.mubr.f32.mxu0 0.0
    %v3119 = vand.u32 %v2256, 4294901760
    %v3120 = vsub.f32 %v2256, %v3119
    %v3121 = vand.u32 %v3120, 4294901760
    %3122 = vmatmul.mubr.f32.gmra.mrb[0].mxu0 %v3121
    %v3123 = vpop.f32.mrb[0].mxu0
    %v3124 = vadd.f32 %v2928, %v3123
    %v3125 = vpop.f32.mrb[0].mxu0
    %3126 = vmatprep.mubr.f32.mxu0 0.0
    %v3127 = vand.u32 %v2258, 4294901760
    %v3128 = vsub.f32 %v2258, %v3127
    %v3129 = vand.u32 %v3128, 4294901760
    %3130 = vmatmul.mubr.f32.gmra.mrb[0].mxu0 %v3129
    %v3131 = vpop.f32.mrb[0].mxu0
    %v3132 = vadd.f32 %v2935, %v3131
    %v3133 = vpop.f32.mrb[0].mxu0
    %3134 = vmatprep.mubr.f32.mxu0 0.0
    %v3135 = vand.u32 %v2260, 4294901760
    %v3136 = vsub.f32 %v2260, %v3135
    %v3137 = vand.u32 %v3136, 4294901760
    %3138 = vmatmul.mubr.f32.gmra.mrb[0].mxu0 %v3137
    %v3139 = vpop.f32.mrb[0].mxu0
    %v3140 = vadd.f32 %v2942, %v3139
    %v3141 = vpop.f32.mrb[0].mxu0
    %3142 = vmatprep.mubr.f32.mxu0 0.0
    %v3143 = vand.u32 %v2262, 4294901760
    %v3144 = vsub.f32 %v2262, %v3143
    %v3145 = vand.u32 %v3144, 4294901760
    %3146 = vmatmul.mubr.f32.gmra.mrb[0].mxu0 %v3145
    %v3147 = vpop.f32.mrb[0].mxu0
    %v3148 = vadd.f32 %v2949, %v3147
    %v3149 = vpop.f32.mrb[0].mxu0
    %3150 = vmatprep.mubr.f32.mxu0 0.0
    %v3151 = vand.u32 %v2264, 4294901760
    %v3152 = vsub.f32 %v2264, %v3151
    %v3153 = vand.u32 %v3152, 4294901760
    %3154 = vmatmul.mubr.f32.gmra.mrb[0].mxu0 %v3153
    %v3155 = vpop.f32.mrb[0].mxu0
    %v3156 = vadd.f32 %v2956, %v3155
    %v3157 = vpop.f32.mrb[0].mxu0
    %3158 = vmatprep.mubr.f32.mxu0 0.0
    %v3159 = vand.u32 %v2266, 4294901760
    %v3160 = vsub.f32 %v2266, %v3159
    %v3161 = vand.u32 %v3160, 4294901760
    %3162 = vmatmul.mubr.f32.gmra.mrb[0].mxu0 %v3161
    %v3163 = vpop.f32.mrb[0].mxu0
    %v3164 = vadd.f32 %v2963, %v3163
    %v3165 = vpop.f32.mrb[0].mxu0
    %3166 = vmatprep.mubr.f32.mxu0 0.0
    %v3167 = vand.u32 %v2268, 4294901760
    %v3168 = vsub.f32 %v2268, %v3167
    %v3169 = vand.u32 %v3168, 4294901760
    %3170 = vmatmul.mubr.f32.gmra.mrb[0].mxu0 %v3169
    %v3171 = vpop.f32.mrb[0].mxu0
    %v3172 = vadd.f32 %v2970, %v3171
    %v3173 = vpop.f32.mrb[0].mxu0
    %3174 = vmatprep.mubr.f32.mxu0 0.0
    %v3175 = vand.u32 %v2270, 4294901760
    %v3176 = vsub.f32 %v2270, %v3175
    %v3177 = vand.u32 %v3176, 4294901760
    %3178 = vmatmul.mubr.f32.gmra.mrb[0].mxu0 %v3177
    %v3179 = vpop.f32.mrb[0].mxu0
    %v3180 = vadd.f32 %v2977, %v3179
    %v3181 = vpop.f32.mrb[0].mxu0
    %3182 = vmatprep.mubr.f32.mxu0 0.0
    %v3183 = vand.u32 %v2272, 4294901760
    %v3184 = vsub.f32 %v2272, %v3183
    %v3185 = vand.u32 %v3184, 4294901760
    %3186 = vmatmul.mubr.f32.gmra.mrb[0].mxu0 %v3185
    %v3187 = vpop.f32.mrb[0].mxu0
    %v3188 = vadd.f32 %v2984, %v3187
    %v3189 = vpop.f32.mrb[0].mxu0
    %3190 = vmatprep.mubr.f32.mxu0 0.0
    %v3191 = vand.u32 %v2274, 4294901760
    %v3192 = vsub.f32 %v2274, %v3191
    %v3193 = vand.u32 %v3192, 4294901760
    %3194 = vmatmul.mubr.f32.gmra.mrb[0].mxu0 %v3193
    %v3195 = vpop.f32.mrb[0].mxu0
    %v3196 = vadd.f32 %v2991, %v3195
    %v3197 = vpop.f32.mrb[0].mxu0
    %3198 = vmatprep.mubr.f32.mxu0 0.0
    %v3199 = vand.u32 %v2276, 4294901760
    %v3200 = vsub.f32 %v2276, %v3199
    %v3201 = vand.u32 %v3200, 4294901760
    %3202 = vmatmul.mubr.f32.gmra.mrb[0].mxu0 %v3201
    %v3203 = vpop.f32.mrb[0].mxu0
    %v3204 = vadd.f32 %v2998, %v3203
    %v3205 = vpop.f32.mrb[0].mxu0
    %3206 = vmatprep.mubr.f32.mxu0 0.0
    %v3207 = vand.u32 %v2278, 4294901760
    %v3208 = vsub.f32 %v2278, %v3207
    %v3209 = vand.u32 %v3208, 4294901760
    %3210 = vmatmul.mubr.f32.gmra.mrb[0].mxu0 %v3209
    %v3211 = vpop.f32.mrb[0].mxu0
    %v3212 = vadd.f32 %v3005, %v3211
    %v3213 = vpop.f32.mrb[0].mxu0
    %3214 = vmatprep.mubr.f32.mxu0 0.0
    %v3215 = vand.u32 %v2280, 4294901760
    %v3216 = vsub.f32 %v2280, %v3215
    %v3217 = vand.u32 %v3216, 4294901760
    %3218 = vmatmul.mubr.f32.gmra.mrb[0].mxu0 %v3217
    %v3219 = vpop.f32.mrb[0].mxu0
    %v3220 = vadd.f32 %v3012, %v3219
    %v3221 = vpop.f32.mrb[0].mxu0
    %3222 = vmatprep.mubr.f32.mxu0 0.0
    %v3223 = vand.u32 %v2282, 4294901760
    %v3224 = vsub.f32 %v2282, %v3223
    %v3225 = vand.u32 %v3224, 4294901760
    %3226 = vmatmul.mubr.f32.gmra.mrb[0].mxu0 %v3225
    %v3227 = vpop.f32.mrb[0].mxu0
    %v3228 = vadd.f32 %v3019, %v3227
    %v3229 = vpop.f32.mrb[0].mxu0
    %3230 = vdwg.mxu0
    %3231 = vmatprep.subr.mxu0 0.0
    %v3232 = vand.u32 %v2284, 4294901760
    %v3233 = vsub.f32 %v2284, %v3232
    %v3234 = vand.u32 %v3233, 4294901760
    %3235 = vmatpush1.msra.mxu0 %v3234
    %3236 = vmatprep.subr.mxu0 0.0
    %v3237 = vand.u32 %v2286, 4294901760
    %v3238 = vsub.f32 %v2286, %v3237
    %v3239 = vand.u32 %v3238, 4294901760
    %3240 = vmatpush1.msra.mxu0 %v3239
    %3241 = vmatprep.subr.mxu0 0.0
    %v3242 = vand.u32 %v2288, 4294901760
    %v3243 = vsub.f32 %v2288, %v3242
    %v3244 = vand.u32 %v3243, 4294901760
    %3245 = vmatpush1.msra.mxu0 %v3244
    %3246 = vmatprep.subr.mxu0 0.0
    %v3247 = vand.u32 %v2290, 4294901760
    %v3248 = vsub.f32 %v2290, %v3247
    %v3249 = vand.u32 %v3248, 4294901760
    %3250 = vmatpush1.msra.mxu0 %v3249
    %3251 = vmatprep.subr.mxu0 0.0
    %v3252 = vand.u32 %v2292, 4294901760
    %v3253 = vsub.f32 %v2292, %v3252
    %v3254 = vand.u32 %v3253, 4294901760
    %3255 = vmatpush1.msra.mxu0 %v3254
    %3256 = vmatprep.subr.mxu0 0.0
    %v3257 = vand.u32 %v2294, 4294901760
    %v3258 = vsub.f32 %v2294, %v3257
    %v3259 = vand.u32 %v3258, 4294901760
    %3260 = vmatpush1.msra.mxu0 %v3259
    %3261 = vmatprep.subr.mxu0 0.0
    %v3262 = vand.u32 %v2296, 4294901760
    %v3263 = vsub.f32 %v2296, %v3262
    %v3264 = vand.u32 %v3263, 4294901760
    %3265 = vmatpush1.msra.mxu0 %v3264
    %3266 = vmatprep.subr.mxu0 0.0
    %v3267 = vand.u32 %v2298, 4294901760
    %v3268 = vsub.f32 %v2298, %v3267
    %v3269 = vand.u32 %v3268, 4294901760
    %3270 = vmatpush1.msra.mxu0 %v3269
    %3271 = vmatprep.subr.mxu0 0.0
    %v3272 = vand.u32 %v2300, 4294901760
    %v3273 = vsub.f32 %v2300, %v3272
    %v3274 = vand.u32 %v3273, 4294901760
    %3275 = vmatpush1.msra.mxu0 %v3274
    %3276 = vmatprep.subr.mxu0 0.0
    %v3277 = vand.u32 %v2302, 4294901760
    %v3278 = vsub.f32 %v2302, %v3277
    %v3279 = vand.u32 %v3278, 4294901760
    %3280 = vmatpush1.msra.mxu0 %v3279
    %3281 = vmatprep.subr.mxu0 0.0
    %v3282 = vand.u32 %v2304, 4294901760
    %v3283 = vsub.f32 %v2304, %v3282
    %v3284 = vand.u32 %v3283, 4294901760
    %3285 = vmatpush1.msra.mxu0 %v3284
    %3286 = vmatprep.subr.mxu0 0.0
    %v3287 = vand.u32 %v2306, 4294901760
    %v3288 = vsub.f32 %v2306, %v3287
    %v3289 = vand.u32 %v3288, 4294901760
    %3290 = vmatpush1.msra.mxu0 %v3289
    %3291 = vmatprep.subr.mxu0 0.0
    %v3292 = vand.u32 %v2308, 4294901760
    %v3293 = vsub.f32 %v2308, %v3292
    %v3294 = vand.u32 %v3293, 4294901760
    %3295 = vmatpush1.msra.mxu0 %v3294
    %3296 = vmatprep.subr.mxu0 0.0
    %v3297 = vand.u32 %v2310, 4294901760
    %v3298 = vsub.f32 %v2310, %v3297
    %v3299 = vand.u32 %v3298, 4294901760
    %3300 = vmatpush1.msra.mxu0 %v3299
    %3301 = vmatprep.subr.mxu0 0.0
    %v3302 = vand.u32 %v2312, 4294901760
    %v3303 = vsub.f32 %v2312, %v3302
    %v3304 = vand.u32 %v3303, 4294901760
    %3305 = vmatpush1.msra.mxu0 %v3304
    %3306 = vmatprep.subr.mxu0 0.0
    %v3307 = vand.u32 %v2314, 4294901760
    %v3308 = vsub.f32 %v2314, %v3307
    %v3309 = vand.u32 %v3308, 4294901760
    %3310 = vmatpush1.msra.mxu0 %v3309
    %3311 = vmatprep.subr.mxu0 0.0
    %3312 = vmatpush1.msra.mxu0 0.0
    %3313 = vmatprep.subr.mxu0 0.0
    %3314 = vmatpush1.msra.mxu0 0.0
    %3315 = vmatprep.subr.mxu0 0.0
    %3316 = vmatpush1.msra.mxu0 0.0
    %3317 = vmatprep.subr.mxu0 0.0
    %3318 = vmatpush1.msra.mxu0 0.0
    %3319 = vmatprep.subr.mxu0 0.0
    %3320 = vmatpush1.msra.mxu0 0.0
    %3321 = vmatprep.subr.mxu0 0.0
    %3322 = vmatpush1.msra.mxu0 0.0
    %3323 = vmatprep.subr.mxu0 0.0
    %3324 = vmatpush1.msra.mxu0 0.0
    %3325 = vmatprep.subr.mxu0 0.0
    %3326 = vmatpush1.msra.mxu0 0.0
    %3327 = vmatprep.subr.mxu0 0.0
    %3328 = vmatpush1.msra.mxu0 0.0
    %3329 = vmatprep.subr.mxu0 0.0
    %3330 = vmatpush1.msra.mxu0 0.0
    %3331 = vmatprep.subr.mxu0 0.0
    %3332 = vmatpush1.msra.mxu0 0.0
    %3333 = vmatprep.subr.mxu0 0.0
    %3334 = vmatpush1.msra.mxu0 0.0
    %3335 = vmatprep.subr.mxu0 0.0
    %3336 = vmatpush1.msra.mxu0 0.0
    %3337 = vmatprep.subr.mxu0 0.0
    %3338 = vmatpush1.msra.mxu0 0.0
    %3339 = vmatprep.subr.mxu0 0.0
    %3340 = vmatpush1.msra.mxu0 0.0
    %3341 = vmatprep.subr.mxu0 0.0
    %3342 = vmatpush1.msra.mxu0 0.0
    %3343 = vmatprep.mubr.f32.mxu0 0.0
    %v3344 = vand.u32 %v2252, 4294901760
    %3345 = vmatmul.mubr.f32.gmra.mrb[0].mxu0 %v3344
    %v3346 = vpop.f32.mrb[0].mxu0
    %v3347 = vadd.f32 %v3108, %v3346
    %v3348 = vpop.f32.mrb[0].mxu0
    %3349 = vmatprep.mubr.f32.mxu0 0.0
    %v3350 = vand.u32 %v2254, 4294901760
    %3351 = vmatmul.mubr.f32.gmra.mrb[0].mxu0 %v3350
    %v3352 = vpop.f32.mrb[0].mxu0
    %v3353 = vadd.f32 %v3116, %v3352
    %v3354 = vpop.f32.mrb[0].mxu0
    %3355 = vmatprep.mubr.f32.mxu0 0.0
    %v3356 = vand.u32 %v2256, 4294901760
    %3357 = vmatmul.mubr.f32.gmra.mrb[0].mxu0 %v3356
    %v3358 = vpop.f32.mrb[0].mxu0
    %v3359 = vadd.f32 %v3124, %v3358
    %v3360 = vpop.f32.mrb[0].mxu0
    %3361 = vmatprep.mubr.f32.mxu0 0.0
    %v3362 = vand.u32 %v2258, 4294901760
    %3363 = vmatmul.mubr.f32.gmra.mrb[0].mxu0 %v3362
    %v3364 = vpop.f32.mrb[0].mxu0
    %v3365 = vadd.f32 %v3132, %v3364
    %v3366 = vpop.f32.mrb[0].mxu0
    %3367 = vmatprep.mubr.f32.mxu0 0.0
    %v3368 = vand.u32 %v2260, 4294901760
    %3369 = vmatmul.mubr.f32.gmra.mrb[0].mxu0 %v3368
    %v3370 = vpop.f32.mrb[0].mxu0
    %v3371 = vadd.f32 %v3140, %v3370
    %v3372 = vpop.f32.mrb[0].mxu0
    %3373 = vmatprep.mubr.f32.mxu0 0.0
    %v3374 = vand.u32 %v2262, 4294901760
    %3375 = vmatmul.mubr.f32.gmra.mrb[0].mxu0 %v3374
    %v3376 = vpop.f32.mrb[0].mxu0
    %v3377 = vadd.f32 %v3148, %v3376
    %v3378 = vpop.f32.mrb[0].mxu0
    %3379 = vmatprep.mubr.f32.mxu0 0.0
    %v3380 = vand.u32 %v2264, 4294901760
    %3381 = vmatmul.mubr.f32.gmra.mrb[0].mxu0 %v3380
    %v3382 = vpop.f32.mrb[0].mxu0
    %v3383 = vadd.f32 %v3156, %v3382
    %v3384 = vpop.f32.mrb[0].mxu0
    %3385 = vmatprep.mubr.f32.mxu0 0.0
    %v3386 = vand.u32 %v2266, 4294901760
    %3387 = vmatmul.mubr.f32.gmra.mrb[0].mxu0 %v3386
    %v3388 = vpop.f32.mrb[0].mxu0
    %v3389 = vadd.f32 %v3164, %v3388
    %v3390 = vpop.f32.mrb[0].mxu0
    %3391 = vmatprep.mubr.f32.mxu0 0.0
    %v3392 = vand.u32 %v2268, 4294901760
    %3393 = vmatmul.mubr.f32.gmra.mrb[0].mxu0 %v3392
    %v3394 = vpop.f32.mrb[0].mxu0
    %v3395 = vadd.f32 %v3172, %v3394
    %v3396 = vpop.f32.mrb[0].mxu0
    %3397 = vmatprep.mubr.f32.mxu0 0.0
    %v3398 = vand.u32 %v2270, 4294901760
    %3399 = vmatmul.mubr.f32.gmra.mrb[0].mxu0 %v3398
    %v3400 = vpop.f32.mrb[0].mxu0
    %v3401 = vadd.f32 %v3180, %v3400
    %v3402 = vpop.f32.mrb[0].mxu0
    %3403 = vmatprep.mubr.f32.mxu0 0.0
    %v3404 = vand.u32 %v2272, 4294901760
    %3405 = vmatmul.mubr.f32.gmra.mrb[0].mxu0 %v3404
    %v3406 = vpop.f32.mrb[0].mxu0
    %v3407 = vadd.f32 %v3188, %v3406
    %v3408 = vpop.f32.mrb[0].mxu0
    %3409 = vmatprep.mubr.f32.mxu0 0.0
    %v3410 = vand.u32 %v2274, 4294901760
    %3411 = vmatmul.mubr.f32.gmra.mrb[0].mxu0 %v3410
    %v3412 = vpop.f32.mrb[0].mxu0
    %v3413 = vadd.f32 %v3196, %v3412
    %v3414 = vpop.f32.mrb[0].mxu0
    %3415 = vmatprep.mubr.f32.mxu0 0.0
    %v3416 = vand.u32 %v2276, 4294901760
    %3417 = vmatmul.mubr.f32.gmra.mrb[0].mxu0 %v3416
    %v3418 = vpop.f32.mrb[0].mxu0
    %v3419 = vadd.f32 %v3204, %v3418
    %v3420 = vpop.f32.mrb[0].mxu0
    %3421 = vmatprep.mubr.f32.mxu0 0.0
    %v3422 = vand.u32 %v2278, 4294901760
    %3423 = vmatmul.mubr.f32.gmra.mrb[0].mxu0 %v3422
    %v3424 = vpop.f32.mrb[0].mxu0
    %v3425 = vadd.f32 %v3212, %v3424
    %v3426 = vpop.f32.mrb[0].mxu0
    %3427 = vmatprep.mubr.f32.mxu0 0.0
    %v3428 = vand.u32 %v2280, 4294901760
    %3429 = vmatmul.mubr.f32.gmra.mrb[0].mxu0 %v3428
    %v3430 = vpop.f32.mrb[0].mxu0
    %v3431 = vadd.f32 %v3220, %v3430
    %v3432 = vpop.f32.mrb[0].mxu0
    %3433 = vmatprep.mubr.f32.mxu0 0.0
    %v3434 = vand.u32 %v2282, 4294901760
    %3435 = vmatmul.mubr.f32.gmra.mrb[0].mxu0 %v3434
    %v3436 = vpop.f32.mrb[0].mxu0
    %v3437 = vadd.f32 %v3228, %v3436
    %v3438 = vpop.f32.mrb[0].mxu0
    %3439 = vdwg.mxu0
    %3440 = vmatprep.subr.mxu0 0.0
    %v3441 = vand.u32 %v2284, 4294901760
    %3442 = vmatpush1.msra.mxu0 %v3441
    %3443 = vmatprep.subr.mxu0 0.0
    %v3444 = vand.u32 %v2286, 4294901760
    %3445 = vmatpush1.msra.mxu0 %v3444
    %3446 = vmatprep.subr.mxu0 0.0
    %v3447 = vand.u32 %v2288, 4294901760
    %3448 = vmatpush1.msra.mxu0 %v3447
    %3449 = vmatprep.subr.mxu0 0.0
    %v3450 = vand.u32 %v2290, 4294901760
    %3451 = vmatpush1.msra.mxu0 %v3450
    %3452 = vmatprep.subr.mxu0 0.0
    %v3453 = vand.u32 %v2292, 4294901760
    %3454 = vmatpush1.msra.mxu0 %v3453
    %3455 = vmatprep.subr.mxu0 0.0
    %v3456 = vand.u32 %v2294, 4294901760
    %3457 = vmatpush1.msra.mxu0 %v3456
    %3458 = vmatprep.subr.mxu0 0.0
    %v3459 = vand.u32 %v2296, 4294901760
    %3460 = vmatpush1.msra.mxu0 %v3459
    %3461 = vmatprep.subr.mxu0 0.0
    %v3462 = vand.u32 %v2298, 4294901760
    %3463 = vmatpush1.msra.mxu0 %v3462
    %3464 = vmatprep.subr.mxu0 0.0
    %v3465 = vand.u32 %v2300, 4294901760
    %3466 = vmatpush1.msra.mxu0 %v3465
    %3467 = vmatprep.subr.mxu0 0.0
    %v3468 = vand.u32 %v2302, 4294901760
    %3469 = vmatpush1.msra.mxu0 %v3468
    %3470 = vmatprep.subr.mxu0 0.0
    %v3471 = vand.u32 %v2304, 4294901760
    %3472 = vmatpush1.msra.mxu0 %v3471
    %3473 = vmatprep.subr.mxu0 0.0
    %v3474 = vand.u32 %v2306, 4294901760
    %3475 = vmatpush1.msra.mxu0 %v3474
    %3476 = vmatprep.subr.mxu0 0.0
    %v3477 = vand.u32 %v2308, 4294901760
    %3478 = vmatpush1.msra.mxu0 %v3477
    %3479 = vmatprep.subr.mxu0 0.0
    %v3480 = vand.u32 %v2310, 4294901760
    %3481 = vmatpush1.msra.mxu0 %v3480
    %3482 = vmatprep.subr.mxu0 0.0
    %v3483 = vand.u32 %v2312, 4294901760
    %3484 = vmatpush1.msra.mxu0 %v3483
    %3485 = vmatprep.subr.mxu0 0.0
    %v3486 = vand.u32 %v2314, 4294901760
    %3487 = vmatpush1.msra.mxu0 %v3486
    %3488 = vmatprep.subr.mxu0 0.0
    %3489 = vmatpush1.msra.mxu0 0.0
    %3490 = vmatprep.subr.mxu0 0.0
    %3491 = vmatpush1.msra.mxu0 0.0
    %3492 = vmatprep.subr.mxu0 0.0
    %3493 = vmatpush1.msra.mxu0 0.0
    %3494 = vmatprep.subr.mxu0 0.0
    %3495 = vmatpush1.msra.mxu0 0.0
    %3496 = vmatprep.subr.mxu0 0.0
    %3497 = vmatpush1.msra.mxu0 0.0
    %3498 = vmatprep.subr.mxu0 0.0
    %3499 = vmatpush1.msra.mxu0 0.0
    %3500 = vmatprep.subr.mxu0 0.0
    %3501 = vmatpush1.msra.mxu0 0.0
    %3502 = vmatprep.subr.mxu0 0.0
    %3503 = vmatpush1.msra.mxu0 0.0
    %3504 = vmatprep.subr.mxu0 0.0
    %3505 = vmatpush1.msra.mxu0 0.0
    %3506 = vmatprep.subr.mxu0 0.0
    %3507 = vmatpush1.msra.mxu0 0.0
    %3508 = vmatprep.subr.mxu0 0.0
    %3509 = vmatpush1.msra.mxu0 0.0
    %3510 = vmatprep.subr.mxu0 0.0
    %3511 = vmatpush1.msra.mxu0 0.0
    %3512 = vmatprep.subr.mxu0 0.0
    %3513 = vmatpush1.msra.mxu0 0.0
    %3514 = vmatprep.subr.mxu0 0.0
    %3515 = vmatpush1.msra.mxu0 0.0
    %3516 = vmatprep.subr.mxu0 0.0
    %3517 = vmatpush1.msra.mxu0 0.0
    %3518 = vmatprep.subr.mxu0 0.0
    %3519 = vmatpush1.msra.mxu0 0.0
    %3520 = vmatprep.mubr.f32.mxu0 0.0
    %v3521 = vand.u32 %v2252, 4294901760
    %3522 = vmatmul.mubr.f32.gmra.mrb[0].mxu0 %v3521
    %v3523 = vpop.f32.mrb[0].mxu0
    %v3524 = vadd.f32 %v3347, %v3523
    %v3525 = vpop.f32.mrb[0].mxu0
    %3526 = vmatprep.mubr.f32.mxu0 0.0
    %v3527 = vand.u32 %v2254, 4294901760
    %3528 = vmatmul.mubr.f32.gmra.mrb[0].mxu0 %v3527
    %v3529 = vpop.f32.mrb[0].mxu0
    %v3530 = vadd.f32 %v3353, %v3529
    %v3531 = vpop.f32.mrb[0].mxu0
    %3532 = vmatprep.mubr.f32.mxu0 0.0
    %v3533 = vand.u32 %v2256, 4294901760
    %3534 = vmatmul.mubr.f32.gmra.mrb[0].mxu0 %v3533
    %v3535 = vpop.f32.mrb[0].mxu0
    %v3536 = vadd.f32 %v3359, %v3535
    %v3537 = vpop.f32.mrb[0].mxu0
    %3538 = vmatprep.mubr.f32.mxu0 0.0
    %v3539 = vand.u32 %v2258, 4294901760
    %3540 = vmatmul.mubr.f32.gmra.mrb[0].mxu0 %v3539
    %v3541 = vpop.f32.mrb[0].mxu0
    %v3542 = vadd.f32 %v3365, %v3541
    %v3543 = vpop.f32.mrb[0].mxu0
    %3544 = vmatprep.mubr.f32.mxu0 0.0
    %v3545 = vand.u32 %v2260, 4294901760
    %3546 = vmatmul.mubr.f32.gmra.mrb[0].mxu0 %v3545
    %v3547 = vpop.f32.mrb[0].mxu0
    %v3548 = vadd.f32 %v3371, %v3547
    %v3549 = vpop.f32.mrb[0].mxu0
    %3550 = vmatprep.mubr.f32.mxu0 0.0
    %v3551 = vand.u32 %v2262, 4294901760
    %3552 = vmatmul.mubr.f32.gmra.mrb[0].mxu0 %v3551
    %v3553 = vpop.f32.mrb[0].mxu0
    %v3554 = vadd.f32 %v3377, %v3553
    %v3555 = vpop.f32.mrb[0].mxu0
    %3556 = vmatprep.mubr.f32.mxu0 0.0
    %v3557 = vand.u32 %v2264, 4294901760
    %3558 = vmatmul.mubr.f32.gmra.mrb[0].mxu0 %v3557
    %v3559 = vpop.f32.mrb[0].mxu0
    %v3560 = vadd.f32 %v3383, %v3559
    %v3561 = vpop.f32.mrb[0].mxu0
    %3562 = vmatprep.mubr.f32.mxu0 0.0
    %v3563 = vand.u32 %v2266, 4294901760
    %3564 = vmatmul.mubr.f32.gmra.mrb[0].mxu0 %v3563
    %v3565 = vpop.f32.mrb[0].mxu0
    %v3566 = vadd.f32 %v3389, %v3565
    %v3567 = vpop.f32.mrb[0].mxu0
    %3568 = vmatprep.mubr.f32.mxu0 0.0
    %v3569 = vand.u32 %v2268, 4294901760
    %3570 = vmatmul.mubr.f32.gmra.mrb[0].mxu0 %v3569
    %v3571 = vpop.f32.mrb[0].mxu0
    %v3572 = vadd.f32 %v3395, %v3571
    %v3573 = vpop.f32.mrb[0].mxu0
    %3574 = vmatprep.mubr.f32.mxu0 0.0
    %v3575 = vand.u32 %v2270, 4294901760
    %3576 = vmatmul.mubr.f32.gmra.mrb[0].mxu0 %v3575
    %v3577 = vpop.f32.mrb[0].mxu0
    %v3578 = vadd.f32 %v3401, %v3577
    %v3579 = vpop.f32.mrb[0].mxu0
    %3580 = vmatprep.mubr.f32.mxu0 0.0
    %v3581 = vand.u32 %v2272, 4294901760
    %3582 = vmatmul.mubr.f32.gmra.mrb[0].mxu0 %v3581
    %v3583 = vpop.f32.mrb[0].mxu0
    %v3584 = vadd.f32 %v3407, %v3583
    %v3585 = vpop.f32.mrb[0].mxu0
    %3586 = vmatprep.mubr.f32.mxu0 0.0
    %v3587 = vand.u32 %v2274, 4294901760
    %3588 = vmatmul.mubr.f32.gmra.mrb[0].mxu0 %v3587
    %v3589 = vpop.f32.mrb[0].mxu0
    %v3590 = vadd.f32 %v3413, %v3589
    %v3591 = vpop.f32.mrb[0].mxu0
    %3592 = vmatprep.mubr.f32.mxu0 0.0
    %v3593 = vand.u32 %v2276, 4294901760
    %3594 = vmatmul.mubr.f32.gmra.mrb[0].mxu0 %v3593
    %v3595 = vpop.f32.mrb[0].mxu0
    %v3596 = vadd.f32 %v3419, %v3595
    %v3597 = vpop.f32.mrb[0].mxu0
    %3598 = vmatprep.mubr.f32.mxu0 0.0
    %v3599 = vand.u32 %v2278, 4294901760
    %3600 = vmatmul.mubr.f32.gmra.mrb[0].mxu0 %v3599
    %v3601 = vpop.f32.mrb[0].mxu0
    %v3602 = vadd.f32 %v3425, %v3601
    %v3603 = vpop.f32.mrb[0].mxu0
    %3604 = vmatprep.mubr.f32.mxu0 0.0
    %v3605 = vand.u32 %v2280, 4294901760
    %3606 = vmatmul.mubr.f32.gmra.mrb[0].mxu0 %v3605
    %v3607 = vpop.f32.mrb[0].mxu0
    %v3608 = vadd.f32 %v3431, %v3607
    %v3609 = vpop.f32.mrb[0].mxu0
    %3610 = vmatprep.mubr.f32.mxu0 0.0
    %v3611 = vand.u32 %v2282, 4294901760
    %3612 = vmatmul.mubr.f32.gmra.mrb[0].mxu0 %v3611
    %v3613 = vpop.f32.mrb[0].mxu0
    %v3614 = vadd.f32 %v3437, %v3613
    %v3615 = vpop.f32.mrb[0].mxu0
    %3616 = vdwg.mxu0
    %3621 = vrot.lane.b32.xlu0 %v3548, 8
    %v3622 = vpop.permute.xlu0 %3621
    %3623 = vrot.lane.b32.xlu0 %v3554, 8
    %v3624 = vpop.permute.xlu0 %3623
    %3625 = vrot.lane.b32.xlu0 %v3560, 8
    %v3626 = vpop.permute.xlu0 %3625
    %3627 = vrot.lane.b32.xlu0 %v3566, 8
    %v3628 = vpop.permute.xlu0 %3627
    %3637 = vrot.lane.b32.xlu0 %v3572, 16
    %v3638 = vpop.permute.xlu0 %3637
    %3639 = vrot.lane.b32.xlu0 %v3578, 16
    %v3640 = vpop.permute.xlu0 %3639
    %3641 = vrot.lane.b32.xlu0 %v3584, 16
    %v3642 = vpop.permute.xlu0 %3641
    %3643 = vrot.lane.b32.xlu0 %v3590, 16
    %v3644 = vpop.permute.xlu0 %3643
    %3653 = vrot.lane.b32.xlu0 %v3596, 24
    %v3654 = vpop.permute.xlu0 %3653
    %3655 = vrot.lane.b32.xlu0 %v3602, 24
    %v3656 = vpop.permute.xlu0 %3655
    %3657 = vrot.lane.b32.xlu0 %v3608, 24
    %v3658 = vpop.permute.xlu0 %3657
    %3659 = vrot.lane.b32.xlu0 %v3614, 24
    %v3660 = vpop.permute.xlu0 %3659
    %v3665 = vsel %vm788, %v3524, %v3622
    %v3666 = vsel %vm788, %v3530, %v3624
    %v3667 = vsel %vm788, %v3536, %v3626
    %v3668 = vsel %vm788, %v3542, %v3628
    %vm3669 = vcmask 130048
    %v3670 = vsel %vm3669, %v3665, %v3638
    %v3671 = vsel %vm3669, %v3666, %v3640
    %v3672 = vsel %vm3669, %v3667, %v3642
    %v3673 = vsel %vm3669, %v3668, %v3644
    %vm3674 = vcmask 195584
    %v3675 = vsel %vm3674, %v3670, %v3654
    %v3676 = vsel %vm3674, %v3671, %v3656
    %v3677 = vsel %vm3674, %v3672, %v3658
    %v3678 = vsel %vm3674, %v3673, %v3660
    %v3679 = vlaneseq
    %v3680 = vshrl.u32 %v3679, 7
    %v3681 = vsub.s32 1, %v3680
    %v3682 = vrot.slane %v80, %v3681
    %v3684 = vsel %vm85, %v3675, 0
    %v3687 = vsel %vm85, %v3676, 0
    %v3690 = vsel %vm85, %v3677, 0
    %v3693 = vsel %vm85, %v3678, 0
    %3695 = vmatprep.subr.mxu0 0.0
    %v3696 = vand.u32 %v64, 4294901760
    %3697 = vmatpush1.msra.mxu0 %v3696
    %3698 = vmatprep.subr.mxu0 0.0
    %v3699 = vand.u32 %v65, 4294901760
    %3700 = vmatpush1.msra.mxu0 %v3699
    %3701 = vmatprep.subr.mxu0 0.0
    %v3702 = vand.u32 %v66, 4294901760
    %3703 = vmatpush1.msra.mxu0 %v3702
    %3704 = vmatprep.subr.mxu0 0.0
    %v3705 = vand.u32 %v67, 4294901760
    %3706 = vmatpush1.msra.mxu0 %v3705
    %3707 = vmatprep.subr.mxu0 0.0
    %3708 = vmatpush1.msra.mxu0 0.0
    %3709 = vmatprep.subr.mxu0 0.0
    %3710 = vmatpush1.msra.mxu0 0.0
    %3711 = vmatprep.subr.mxu0 0.0
    %3712 = vmatpush1.msra.mxu0 0.0
    %3713 = vmatprep.subr.mxu0 0.0
    %3714 = vmatpush1.msra.mxu0 0.0
    %3715 = vmatprep.subr.mxu0 0.0
    %3716 = vmatpush1.msra.mxu0 0.0
    %3717 = vmatprep.subr.mxu0 0.0
    %3718 = vmatpush1.msra.mxu0 0.0
    %3719 = vmatprep.subr.mxu0 0.0
    %3720 = vmatpush1.msra.mxu0 0.0
    %3721 = vmatprep.subr.mxu0 0.0
    %3722 = vmatpush1.msra.mxu0 0.0
    %3723 = vmatprep.subr.mxu0 0.0
    %3724 = vmatpush1.msra.mxu0 0.0
    %3725 = vmatprep.subr.mxu0 0.0
    %3726 = vmatpush1.msra.mxu0 0.0
    %3727 = vmatprep.subr.mxu0 0.0
    %3728 = vmatpush1.msra.mxu0 0.0
    %3729 = vmatprep.subr.mxu0 0.0
    %3730 = vmatpush1.msra.mxu0 0.0
    %3731 = vmatprep.subr.mxu0 0.0
    %3732 = vmatpush1.msra.mxu0 0.0
    %3733 = vmatprep.subr.mxu0 0.0
    %3734 = vmatpush1.msra.mxu0 0.0
    %3735 = vmatprep.subr.mxu0 0.0
    %3736 = vmatpush1.msra.mxu0 0.0
    %3737 = vmatprep.subr.mxu0 0.0
    %3738 = vmatpush1.msra.mxu0 0.0
    %3739 = vmatprep.subr.mxu0 0.0
    %3740 = vmatpush1.msra.mxu0 0.0
    %3741 = vmatprep.subr.mxu0 0.0
    %3742 = vmatpush1.msra.mxu0 0.0
    %3743 = vmatprep.subr.mxu0 0.0
    %3744 = vmatpush1.msra.mxu0 0.0
    %3745 = vmatprep.subr.mxu0 0.0
    %3746 = vmatpush1.msra.mxu0 0.0
    %3747 = vmatprep.subr.mxu0 0.0
    %3748 = vmatpush1.msra.mxu0 0.0
    %3749 = vmatprep.subr.mxu0 0.0
    %3750 = vmatpush1.msra.mxu0 0.0
    %3751 = vmatprep.subr.mxu0 0.0
    %3752 = vmatpush1.msra.mxu0 0.0
    %3753 = vmatprep.subr.mxu0 0.0
    %3754 = vmatpush1.msra.mxu0 0.0
    %3755 = vmatprep.subr.mxu0 0.0
    %3756 = vmatpush1.msra.mxu0 0.0
    %3757 = vmatprep.subr.mxu0 0.0
    %3758 = vmatpush1.msra.mxu0 0.0
    %3759 = vmatprep.subr.mxu0 0.0
    %3760 = vmatpush1.msra.mxu0 0.0
    %3761 = vmatprep.subr.mxu0 0.0
    %3762 = vmatpush1.msra.mxu0 0.0
    %3763 = vmatprep.mubr.f32.mxu0 0.0
    %v3764 = vand.u32 %v3684, 4294901760
    %v3765 = vsub.f32 %v3684, %v3764
    %v3766 = vand.u32 %v3765, 4294901760
    %v3767 = vsub.f32 %v3765, %v3766
    %v3768 = vand.u32 %v3767, 4294901760
    %3769 = vmatmul.mubr.f32.gmra.mrb[0].mxu0 %v3768
    %v3770 = vpop.f32.mrb[0].mxu0
    %v3771 = vadd.f32 %v3682, %v3770
    %v3772 = vpop.f32.mrb[0].mxu0
    %3773 = vmatprep.mubr.f32.mxu0 0.0
    %v3774 = vand.u32 %v3687, 4294901760
    %v3775 = vsub.f32 %v3687, %v3774
    %v3776 = vand.u32 %v3775, 4294901760
    %v3777 = vsub.f32 %v3775, %v3776
    %v3778 = vand.u32 %v3777, 4294901760
    %3779 = vmatmul.mubr.f32.gmra.mrb[0].mxu0 %v3778
    %v3780 = vpop.f32.mrb[0].mxu0
    %v3781 = vadd.f32 %v3682, %v3780
    %v3782 = vpop.f32.mrb[0].mxu0
    %3783 = vmatprep.mubr.f32.mxu0 0.0
    %v3784 = vand.u32 %v3690, 4294901760
    %v3785 = vsub.f32 %v3690, %v3784
    %v3786 = vand.u32 %v3785, 4294901760
    %v3787 = vsub.f32 %v3785, %v3786
    %v3788 = vand.u32 %v3787, 4294901760
    %3789 = vmatmul.mubr.f32.gmra.mrb[0].mxu0 %v3788
    %v3790 = vpop.f32.mrb[0].mxu0
    %v3791 = vadd.f32 %v3682, %v3790
    %v3792 = vpop.f32.mrb[0].mxu0
    %3793 = vmatprep.mubr.f32.mxu0 0.0
    %v3794 = vand.u32 %v3693, 4294901760
    %v3795 = vsub.f32 %v3693, %v3794
    %v3796 = vand.u32 %v3795, 4294901760
    %v3797 = vsub.f32 %v3795, %v3796
    %v3798 = vand.u32 %v3797, 4294901760
    %3799 = vmatmul.mubr.f32.gmra.mrb[0].mxu0 %v3798
    %v3800 = vpop.f32.mrb[0].mxu0
    %v3801 = vadd.f32 %v3682, %v3800
    %v3802 = vpop.f32.mrb[0].mxu0
    %3803 = vdwg.mxu0
    %3804 = vmatprep.subr.mxu0 0.0
    %v3805 = vand.u32 %v64, 4294901760
    %v3806 = vsub.f32 %v64, %v3805
    %v3807 = vand.u32 %v3806, 4294901760
    %v3808 = vsub.f32 %v3806, %v3807
    %v3809 = vand.u32 %v3808, 4294901760
    %3810 = vmatpush1.msra.mxu0 %v3809
    %3811 = vmatprep.subr.mxu0 0.0
    %v3812 = vand.u32 %v65, 4294901760
    %v3813 = vsub.f32 %v65, %v3812
    %v3814 = vand.u32 %v3813, 4294901760
    %v3815 = vsub.f32 %v3813, %v3814
    %v3816 = vand.u32 %v3815, 4294901760
    %3817 = vmatpush1.msra.mxu0 %v3816
    %3818 = vmatprep.subr.mxu0 0.0
    %v3819 = vand.u32 %v66, 4294901760
    %v3820 = vsub.f32 %v66, %v3819
    %v3821 = vand.u32 %v3820, 4294901760
    %v3822 = vsub.f32 %v3820, %v3821
    %v3823 = vand.u32 %v3822, 4294901760
    %3824 = vmatpush1.msra.mxu0 %v3823
    %3825 = vmatprep.subr.mxu0 0.0
    %v3826 = vand.u32 %v67, 4294901760
    %v3827 = vsub.f32 %v67, %v3826
    %v3828 = vand.u32 %v3827, 4294901760
    %v3829 = vsub.f32 %v3827, %v3828
    %v3830 = vand.u32 %v3829, 4294901760
    %3831 = vmatpush1.msra.mxu0 %v3830
    %3832 = vmatprep.subr.mxu0 0.0
    %3833 = vmatpush1.msra.mxu0 0.0
    %3834 = vmatprep.subr.mxu0 0.0
    %3835 = vmatpush1.msra.mxu0 0.0
    %3836 = vmatprep.subr.mxu0 0.0
    %3837 = vmatpush1.msra.mxu0 0.0
    %3838 = vmatprep.subr.mxu0 0.0
    %3839 = vmatpush1.msra.mxu0 0.0
    %3840 = vmatprep.subr.mxu0 0.0
    %3841 = vmatpush1.msra.mxu0 0.0
    %3842 = vmatprep.subr.mxu0 0.0
    %3843 = vmatpush1.msra.mxu0 0.0
    %3844 = vmatprep.subr.mxu0 0.0
    %3845 = vmatpush1.msra.mxu0 0.0
    %3846 = vmatprep.subr.mxu0 0.0
    %3847 = vmatpush1.msra.mxu0 0.0
    %3848 = vmatprep.subr.mxu0 0.0
    %3849 = vmatpush1.msra.mxu0 0.0
    %3850 = vmatprep.subr.mxu0 0.0
    %3851 = vmatpush1.msra.mxu0 0.0
    %3852 = vmatprep.subr.mxu0 0.0
    %3853 = vmatpush1.msra.mxu0 0.0
    %3854 = vmatprep.subr.mxu0 0.0
    %3855 = vmatpush1.msra.mxu0 0.0
    %3856 = vmatprep.subr.mxu0 0.0
    %3857 = vmatpush1.msra.mxu0 0.0
    %3858 = vmatprep.subr.mxu0 0.0
    %3859 = vmatpush1.msra.mxu0 0.0
    %3860 = vmatprep.subr.mxu0 0.0
    %3861 = vmatpush1.msra.mxu0 0.0
    %3862 = vmatprep.subr.mxu0 0.0
    %3863 = vmatpush1.msra.mxu0 0.0
    %3864 = vmatprep.subr.mxu0 0.0
    %3865 = vmatpush1.msra.mxu0 0.0
    %3866 = vmatprep.subr.mxu0 0.0
    %3867 = vmatpush1.msra.mxu0 0.0
    %3868 = vmatprep.subr.mxu0 0.0
    %3869 = vmatpush1.msra.mxu0 0.0
    %3870 = vmatprep.subr.mxu0 0.0
    %3871 = vmatpush1.msra.mxu0 0.0
    %3872 = vmatprep.subr.mxu0 0.0
    %3873 = vmatpush1.msra.mxu0 0.0
    %3874 = vmatprep.subr.mxu0 0.0
    %3875 = vmatpush1.msra.mxu0 0.0
    %3876 = vmatprep.subr.mxu0 0.0
    %3877 = vmatpush1.msra.mxu0 0.0
    %3878 = vmatprep.subr.mxu0 0.0
    %3879 = vmatpush1.msra.mxu0 0.0
    %3880 = vmatprep.subr.mxu0 0.0
    %3881 = vmatpush1.msra.mxu0 0.0
    %3882 = vmatprep.subr.mxu0 0.0
    %3883 = vmatpush1.msra.mxu0 0.0
    %3884 = vmatprep.subr.mxu0 0.0
    %3885 = vmatpush1.msra.mxu0 0.0
    %3886 = vmatprep.subr.mxu0 0.0
    %3887 = vmatpush1.msra.mxu0 0.0
    %3888 = vmatprep.mubr.f32.mxu0 0.0
    %v3889 = vand.u32 %v3684, 4294901760
    %3890 = vmatmul.mubr.f32.gmra.mrb[0].mxu0 %v3889
    %v3891 = vpop.f32.mrb[0].mxu0
    %v3892 = vadd.f32 %v3771, %v3891
    %v3893 = vpop.f32.mrb[0].mxu0
    %3894 = vmatprep.mubr.f32.mxu0 0.0
    %v3895 = vand.u32 %v3687, 4294901760
    %3896 = vmatmul.mubr.f32.gmra.mrb[0].mxu0 %v3895
    %v3897 = vpop.f32.mrb[0].mxu0
    %v3898 = vadd.f32 %v3781, %v3897
    %v3899 = vpop.f32.mrb[0].mxu0
    %3900 = vmatprep.mubr.f32.mxu0 0.0
    %v3901 = vand.u32 %v3690, 4294901760
    %3902 = vmatmul.mubr.f32.gmra.mrb[0].mxu0 %v3901
    %v3903 = vpop.f32.mrb[0].mxu0
    %v3904 = vadd.f32 %v3791, %v3903
    %v3905 = vpop.f32.mrb[0].mxu0
    %3906 = vmatprep.mubr.f32.mxu0 0.0
    %v3907 = vand.u32 %v3693, 4294901760
    %3908 = vmatmul.mubr.f32.gmra.mrb[0].mxu0 %v3907
    %v3909 = vpop.f32.mrb[0].mxu0
    %v3910 = vadd.f32 %v3801, %v3909
    %v3911 = vpop.f32.mrb[0].mxu0
    %3912 = vdwg.mxu0
    %3913 = vmatprep.subr.mxu0 0.0
    %v3914 = vand.u32 %v64, 4294901760
    %v3915 = vsub.f32 %v64, %v3914
    %3916 = vmatpush1.msra.mxu0 %v3915
    %3917 = vmatprep.subr.mxu0 0.0
    %v3918 = vand.u32 %v65, 4294901760
    %v3919 = vsub.f32 %v65, %v3918
    %3920 = vmatpush1.msra.mxu0 %v3919
    %3921 = vmatprep.subr.mxu0 0.0
    %v3922 = vand.u32 %v66, 4294901760
    %v3923 = vsub.f32 %v66, %v3922
    %3924 = vmatpush1.msra.mxu0 %v3923
    %3925 = vmatprep.subr.mxu0 0.0
    %v3926 = vand.u32 %v67, 4294901760
    %v3927 = vsub.f32 %v67, %v3926
    %3928 = vmatpush1.msra.mxu0 %v3927
    %3929 = vmatprep.subr.mxu0 0.0
    %3930 = vmatpush1.msra.mxu0 0.0
    %3931 = vmatprep.subr.mxu0 0.0
    %3932 = vmatpush1.msra.mxu0 0.0
    %3933 = vmatprep.subr.mxu0 0.0
    %3934 = vmatpush1.msra.mxu0 0.0
    %3935 = vmatprep.subr.mxu0 0.0
    %3936 = vmatpush1.msra.mxu0 0.0
    %3937 = vmatprep.subr.mxu0 0.0
    %3938 = vmatpush1.msra.mxu0 0.0
    %3939 = vmatprep.subr.mxu0 0.0
    %3940 = vmatpush1.msra.mxu0 0.0
    %3941 = vmatprep.subr.mxu0 0.0
    %3942 = vmatpush1.msra.mxu0 0.0
    %3943 = vmatprep.subr.mxu0 0.0
    %3944 = vmatpush1.msra.mxu0 0.0
    %3945 = vmatprep.subr.mxu0 0.0
    %3946 = vmatpush1.msra.mxu0 0.0
    %3947 = vmatprep.subr.mxu0 0.0
    %3948 = vmatpush1.msra.mxu0 0.0
    %3949 = vmatprep.subr.mxu0 0.0
    %3950 = vmatpush1.msra.mxu0 0.0
    %3951 = vmatprep.subr.mxu0 0.0
    %3952 = vmatpush1.msra.mxu0 0.0
    %3953 = vmatprep.subr.mxu0 0.0
    %3954 = vmatpush1.msra.mxu0 0.0
    %3955 = vmatprep.subr.mxu0 0.0
    %3956 = vmatpush1.msra.mxu0 0.0
    %3957 = vmatprep.subr.mxu0 0.0
    %3958 = vmatpush1.msra.mxu0 0.0
    %3959 = vmatprep.subr.mxu0 0.0
    %3960 = vmatpush1.msra.mxu0 0.0
    %3961 = vmatprep.subr.mxu0 0.0
    %3962 = vmatpush1.msra.mxu0 0.0
    %3963 = vmatprep.subr.mxu0 0.0
    %3964 = vmatpush1.msra.mxu0 0.0
    %3965 = vmatprep.subr.mxu0 0.0
    %3966 = vmatpush1.msra.mxu0 0.0
    %3967 = vmatprep.subr.mxu0 0.0
    %3968 = vmatpush1.msra.mxu0 0.0
    %3969 = vmatprep.subr.mxu0 0.0
    %3970 = vmatpush1.msra.mxu0 0.0
    %3971 = vmatprep.subr.mxu0 0.0
    %3972 = vmatpush1.msra.mxu0 0.0
    %3973 = vmatprep.subr.mxu0 0.0
    %3974 = vmatpush1.msra.mxu0 0.0
    %3975 = vmatprep.subr.mxu0 0.0
    %3976 = vmatpush1.msra.mxu0 0.0
    %3977 = vmatprep.subr.mxu0 0.0
    %3978 = vmatpush1.msra.mxu0 0.0
    %3979 = vmatprep.subr.mxu0 0.0
    %3980 = vmatpush1.msra.mxu0 0.0
    %3981 = vmatprep.subr.mxu0 0.0
    %3982 = vmatpush1.msra.mxu0 0.0
    %3983 = vmatprep.subr.mxu0 0.0
    %3984 = vmatpush1.msra.mxu0 0.0
    %3985 = vmatprep.mubr.f32.mxu0 0.0
    %v3986 = vand.u32 %v3684, 4294901760
    %v3987 = vsub.f32 %v3684, %v3986
    %3988 = vmatmul.mubr.f32.gmra.mrb[0].mxu0 %v3987
    %v3989 = vpop.f32.mrb[0].mxu0
    %v3990 = vadd.f32 %v3892, %v3989
    %v3991 = vpop.f32.mrb[0].mxu0
    %3992 = vmatprep.mubr.f32.mxu0 0.0
    %v3993 = vand.u32 %v3687, 4294901760
    %v3994 = vsub.f32 %v3687, %v3993
    %3995 = vmatmul.mubr.f32.gmra.mrb[0].mxu0 %v3994
    %v3996 = vpop.f32.mrb[0].mxu0
    %v3997 = vadd.f32 %v3898, %v3996
    %v3998 = vpop.f32.mrb[0].mxu0
    %3999 = vmatprep.mubr.f32.mxu0 0.0
    %v4000 = vand.u32 %v3690, 4294901760
    %v4001 = vsub.f32 %v3690, %v4000
    %4002 = vmatmul.mubr.f32.gmra.mrb[0].mxu0 %v4001
    %v4003 = vpop.f32.mrb[0].mxu0
    %v4004 = vadd.f32 %v3904, %v4003
    %v4005 = vpop.f32.mrb[0].mxu0
    %4006 = vmatprep.mubr.f32.mxu0 0.0
    %v4007 = vand.u32 %v3693, 4294901760
    %v4008 = vsub.f32 %v3693, %v4007
    %4009 = vmatmul.mubr.f32.gmra.mrb[0].mxu0 %v4008
    %v4010 = vpop.f32.mrb[0].mxu0
    %v4011 = vadd.f32 %v3910, %v4010
    %v4012 = vpop.f32.mrb[0].mxu0
    %4013 = vdwg.mxu0
    %4014 = vmatprep.subr.mxu0 0.0
    %v4015 = vand.u32 %v64, 4294901760
    %4016 = vmatpush1.msra.mxu0 %v4015
    %4017 = vmatprep.subr.mxu0 0.0
    %v4018 = vand.u32 %v65, 4294901760
    %4019 = vmatpush1.msra.mxu0 %v4018
    %4020 = vmatprep.subr.mxu0 0.0
    %v4021 = vand.u32 %v66, 4294901760
    %4022 = vmatpush1.msra.mxu0 %v4021
    %4023 = vmatprep.subr.mxu0 0.0
    %v4024 = vand.u32 %v67, 4294901760
    %4025 = vmatpush1.msra.mxu0 %v4024
    %4026 = vmatprep.subr.mxu0 0.0
    %4027 = vmatpush1.msra.mxu0 0.0
    %4028 = vmatprep.subr.mxu0 0.0
    %4029 = vmatpush1.msra.mxu0 0.0
    %4030 = vmatprep.subr.mxu0 0.0
    %4031 = vmatpush1.msra.mxu0 0.0
    %4032 = vmatprep.subr.mxu0 0.0
    %4033 = vmatpush1.msra.mxu0 0.0
    %4034 = vmatprep.subr.mxu0 0.0
    %4035 = vmatpush1.msra.mxu0 0.0
    %4036 = vmatprep.subr.mxu0 0.0
    %4037 = vmatpush1.msra.mxu0 0.0
    %4038 = vmatprep.subr.mxu0 0.0
    %4039 = vmatpush1.msra.mxu0 0.0
    %4040 = vmatprep.subr.mxu0 0.0
    %4041 = vmatpush1.msra.mxu0 0.0
    %4042 = vmatprep.subr.mxu0 0.0
    %4043 = vmatpush1.msra.mxu0 0.0
    %4044 = vmatprep.subr.mxu0 0.0
    %4045 = vmatpush1.msra.mxu0 0.0
    %4046 = vmatprep.subr.mxu0 0.0
    %4047 = vmatpush1.msra.mxu0 0.0
    %4048 = vmatprep.subr.mxu0 0.0
    %4049 = vmatpush1.msra.mxu0 0.0
    %4050 = vmatprep.subr.mxu0 0.0
    %4051 = vmatpush1.msra.mxu0 0.0
    %4052 = vmatprep.subr.mxu0 0.0
    %4053 = vmatpush1.msra.mxu0 0.0
    %4054 = vmatprep.subr.mxu0 0.0
    %4055 = vmatpush1.msra.mxu0 0.0
    %4056 = vmatprep.subr.mxu0 0.0
    %4057 = vmatpush1.msra.mxu0 0.0
    %4058 = vmatprep.subr.mxu0 0.0
    %4059 = vmatpush1.msra.mxu0 0.0
    %4060 = vmatprep.subr.mxu0 0.0
    %4061 = vmatpush1.msra.mxu0 0.0
    %4062 = vmatprep.subr.mxu0 0.0
    %4063 = vmatpush1.msra.mxu0 0.0
    %4064 = vmatprep.subr.mxu0 0.0
    %4065 = vmatpush1.msra.mxu0 0.0
    %4066 = vmatprep.subr.mxu0 0.0
    %4067 = vmatpush1.msra.mxu0 0.0
    %4068 = vmatprep.subr.mxu0 0.0
    %4069 = vmatpush1.msra.mxu0 0.0
    %4070 = vmatprep.subr.mxu0 0.0
    %4071 = vmatpush1.msra.mxu0 0.0
    %4072 = vmatprep.subr.mxu0 0.0
    %4073 = vmatpush1.msra.mxu0 0.0
    %4074 = vmatprep.subr.mxu0 0.0
    %4075 = vmatpush1.msra.mxu0 0.0
    %4076 = vmatprep.subr.mxu0 0.0
    %4077 = vmatpush1.msra.mxu0 0.0
    %4078 = vmatprep.subr.mxu0 0.0
    %4079 = vmatpush1.msra.mxu0 0.0
    %4080 = vmatprep.subr.mxu0 0.0
    %4081 = vmatpush1.msra.mxu0 0.0
    %4082 = vmatprep.mubr.f32.mxu0 0.0
    %v4083 = vand.u32 %v3684, 4294901760
    %v4084 = vsub.f32 %v3684, %v4083
    %v4085 = vand.u32 %v4084, 4294901760
    %4086 = vmatmul.mubr.f32.gmra.mrb[0].mxu0 %v4085
    %v4087 = vpop.f32.mrb[0].mxu0
    %v4088 = vadd.f32 %v3990, %v4087
    %v4089 = vpop.f32.mrb[0].mxu0
    %4090 = vmatprep.mubr.f32.mxu0 0.0
    %v4091 = vand.u32 %v3687, 4294901760
    %v4092 = vsub.f32 %v3687, %v4091
    %v4093 = vand.u32 %v4092, 4294901760
    %4094 = vmatmul.mubr.f32.gmra.mrb[0].mxu0 %v4093
    %v4095 = vpop.f32.mrb[0].mxu0
    %v4096 = vadd.f32 %v3997, %v4095
    %v4097 = vpop.f32.mrb[0].mxu0
    %4098 = vmatprep.mubr.f32.mxu0 0.0
    %v4099 = vand.u32 %v3690, 4294901760
    %v4100 = vsub.f32 %v3690, %v4099
    %v4101 = vand.u32 %v4100, 4294901760
    %4102 = vmatmul.mubr.f32.gmra.mrb[0].mxu0 %v4101
    %v4103 = vpop.f32.mrb[0].mxu0
    %v4104 = vadd.f32 %v4004, %v4103
    %v4105 = vpop.f32.mrb[0].mxu0
    %4106 = vmatprep.mubr.f32.mxu0 0.0
    %v4107 = vand.u32 %v3693, 4294901760
    %v4108 = vsub.f32 %v3693, %v4107
    %v4109 = vand.u32 %v4108, 4294901760
    %4110 = vmatmul.mubr.f32.gmra.mrb[0].mxu0 %v4109
    %v4111 = vpop.f32.mrb[0].mxu0
    %v4112 = vadd.f32 %v4011, %v4111
    %v4113 = vpop.f32.mrb[0].mxu0
    %4114 = vdwg.mxu0
    %4115 = vmatprep.subr.mxu0 0.0
    %v4116 = vand.u32 %v64, 4294901760
    %v4117 = vsub.f32 %v64, %v4116
    %v4118 = vand.u32 %v4117, 4294901760
    %4119 = vmatpush1.msra.mxu0 %v4118
    %4120 = vmatprep.subr.mxu0 0.0
    %v4121 = vand.u32 %v65, 4294901760
    %v4122 = vsub.f32 %v65, %v4121
    %v4123 = vand.u32 %v4122, 4294901760
    %4124 = vmatpush1.msra.mxu0 %v4123
    %4125 = vmatprep.subr.mxu0 0.0
    %v4126 = vand.u32 %v66, 4294901760
    %v4127 = vsub.f32 %v66, %v4126
    %v4128 = vand.u32 %v4127, 4294901760
    %4129 = vmatpush1.msra.mxu0 %v4128
    %4130 = vmatprep.subr.mxu0 0.0
    %v4131 = vand.u32 %v67, 4294901760
    %v4132 = vsub.f32 %v67, %v4131
    %v4133 = vand.u32 %v4132, 4294901760
    %4134 = vmatpush1.msra.mxu0 %v4133
    %4135 = vmatprep.subr.mxu0 0.0
    %4136 = vmatpush1.msra.mxu0 0.0
    %4137 = vmatprep.subr.mxu0 0.0
    %4138 = vmatpush1.msra.mxu0 0.0
    %4139 = vmatprep.subr.mxu0 0.0
    %4140 = vmatpush1.msra.mxu0 0.0
    %4141 = vmatprep.subr.mxu0 0.0
    %4142 = vmatpush1.msra.mxu0 0.0
    %4143 = vmatprep.subr.mxu0 0.0
    %4144 = vmatpush1.msra.mxu0 0.0
    %4145 = vmatprep.subr.mxu0 0.0
    %4146 = vmatpush1.msra.mxu0 0.0
    %4147 = vmatprep.subr.mxu0 0.0
    %4148 = vmatpush1.msra.mxu0 0.0
    %4149 = vmatprep.subr.mxu0 0.0
    %4150 = vmatpush1.msra.mxu0 0.0
    %4151 = vmatprep.subr.mxu0 0.0
    %4152 = vmatpush1.msra.mxu0 0.0
    %4153 = vmatprep.subr.mxu0 0.0
    %4154 = vmatpush1.msra.mxu0 0.0
    %4155 = vmatprep.subr.mxu0 0.0
    %4156 = vmatpush1.msra.mxu0 0.0
    %4157 = vmatprep.subr.mxu0 0.0
    %4158 = vmatpush1.msra.mxu0 0.0
    %4159 = vmatprep.subr.mxu0 0.0
    %4160 = vmatpush1.msra.mxu0 0.0
    %4161 = vmatprep.subr.mxu0 0.0
    %4162 = vmatpush1.msra.mxu0 0.0
    %4163 = vmatprep.subr.mxu0 0.0
    %4164 = vmatpush1.msra.mxu0 0.0
    %4165 = vmatprep.subr.mxu0 0.0
    %4166 = vmatpush1.msra.mxu0 0.0
    %4167 = vmatprep.subr.mxu0 0.0
    %4168 = vmatpush1.msra.mxu0 0.0
    %4169 = vmatprep.subr.mxu0 0.0
    %4170 = vmatpush1.msra.mxu0 0.0
    %4171 = vmatprep.subr.mxu0 0.0
    %4172 = vmatpush1.msra.mxu0 0.0
    %4173 = vmatprep.subr.mxu0 0.0
    %4174 = vmatpush1.msra.mxu0 0.0
    %4175 = vmatprep.subr.mxu0 0.0
    %4176 = vmatpush1.msra.mxu0 0.0
    %4177 = vmatprep.subr.mxu0 0.0
    %4178 = vmatpush1.msra.mxu0 0.0
    %4179 = vmatprep.subr.mxu0 0.0
    %4180 = vmatpush1.msra.mxu0 0.0
    %4181 = vmatprep.subr.mxu0 0.0
    %4182 = vmatpush1.msra.mxu0 0.0
    %4183 = vmatprep.subr.mxu0 0.0
    %4184 = vmatpush1.msra.mxu0 0.0
    %4185 = vmatprep.subr.mxu0 0.0
    %4186 = vmatpush1.msra.mxu0 0.0
    %4187 = vmatprep.subr.mxu0 0.0
    %4188 = vmatpush1.msra.mxu0 0.0
    %4189 = vmatprep.subr.mxu0 0.0
    %4190 = vmatpush1.msra.mxu0 0.0
    %4191 = vmatprep.mubr.f32.mxu0 0.0
    %v4192 = vand.u32 %v3684, 4294901760
    %4193 = vmatmul.mubr.f32.gmra.mrb[0].mxu0 %v4192
    %v4194 = vpop.f32.mrb[0].mxu0
    %v4195 = vadd.f32 %v4088, %v4194
    %v4196 = vpop.f32.mrb[0].mxu0
    %4197 = vmatprep.mubr.f32.mxu0 0.0
    %v4198 = vand.u32 %v3687, 4294901760
    %4199 = vmatmul.mubr.f32.gmra.mrb[0].mxu0 %v4198
    %v4200 = vpop.f32.mrb[0].mxu0
    %v4201 = vadd.f32 %v4096, %v4200
    %v4202 = vpop.f32.mrb[0].mxu0
    %4203 = vmatprep.mubr.f32.mxu0 0.0
    %v4204 = vand.u32 %v3690, 4294901760
    %4205 = vmatmul.mubr.f32.gmra.mrb[0].mxu0 %v4204
    %v4206 = vpop.f32.mrb[0].mxu0
    %v4207 = vadd.f32 %v4104, %v4206
    %v4208 = vpop.f32.mrb[0].mxu0
    %4209 = vmatprep.mubr.f32.mxu0 0.0
    %v4210 = vand.u32 %v3693, 4294901760
    %4211 = vmatmul.mubr.f32.gmra.mrb[0].mxu0 %v4210
    %v4212 = vpop.f32.mrb[0].mxu0
    %v4213 = vadd.f32 %v4112, %v4212
    %v4214 = vpop.f32.mrb[0].mxu0
    %4215 = vdwg.mxu0
    %4216 = vmatprep.subr.mxu0 0.0
    %v4217 = vand.u32 %v64, 4294901760
    %4218 = vmatpush1.msra.mxu0 %v4217
    %4219 = vmatprep.subr.mxu0 0.0
    %v4220 = vand.u32 %v65, 4294901760
    %4221 = vmatpush1.msra.mxu0 %v4220
    %4222 = vmatprep.subr.mxu0 0.0
    %v4223 = vand.u32 %v66, 4294901760
    %4224 = vmatpush1.msra.mxu0 %v4223
    %4225 = vmatprep.subr.mxu0 0.0
    %v4226 = vand.u32 %v67, 4294901760
    %4227 = vmatpush1.msra.mxu0 %v4226
    %4228 = vmatprep.subr.mxu0 0.0
    %4229 = vmatpush1.msra.mxu0 0.0
    %4230 = vmatprep.subr.mxu0 0.0
    %4231 = vmatpush1.msra.mxu0 0.0
    %4232 = vmatprep.subr.mxu0 0.0
    %4233 = vmatpush1.msra.mxu0 0.0
    %4234 = vmatprep.subr.mxu0 0.0
    %4235 = vmatpush1.msra.mxu0 0.0
    %4236 = vmatprep.subr.mxu0 0.0
    %4237 = vmatpush1.msra.mxu0 0.0
    %4238 = vmatprep.subr.mxu0 0.0
    %4239 = vmatpush1.msra.mxu0 0.0
    %4240 = vmatprep.subr.mxu0 0.0
    %4241 = vmatpush1.msra.mxu0 0.0
    %4242 = vmatprep.subr.mxu0 0.0
    %4243 = vmatpush1.msra.mxu0 0.0
    %4244 = vmatprep.subr.mxu0 0.0
    %4245 = vmatpush1.msra.mxu0 0.0
    %4246 = vmatprep.subr.mxu0 0.0
    %4247 = vmatpush1.msra.mxu0 0.0
    %4248 = vmatprep.subr.mxu0 0.0
    %4249 = vmatpush1.msra.mxu0 0.0
    %4250 = vmatprep.subr.mxu0 0.0
    %4251 = vmatpush1.msra.mxu0 0.0
    %4252 = vmatprep.subr.mxu0 0.0
    %4253 = vmatpush1.msra.mxu0 0.0
    %4254 = vmatprep.subr.mxu0 0.0
    %4255 = vmatpush1.msra.mxu0 0.0
    %4256 = vmatprep.subr.mxu0 0.0
    %4257 = vmatpush1.msra.mxu0 0.0
    %4258 = vmatprep.subr.mxu0 0.0
    %4259 = vmatpush1.msra.mxu0 0.0
    %4260 = vmatprep.subr.mxu0 0.0
    %4261 = vmatpush1.msra.mxu0 0.0
    %4262 = vmatprep.subr.mxu0 0.0
    %4263 = vmatpush1.msra.mxu0 0.0
    %4264 = vmatprep.subr.mxu0 0.0
    %4265 = vmatpush1.msra.mxu0 0.0
    %4266 = vmatprep.subr.mxu0 0.0
    %4267 = vmatpush1.msra.mxu0 0.0
    %4268 = vmatprep.subr.mxu0 0.0
    %4269 = vmatpush1.msra.mxu0 0.0
    %4270 = vmatprep.subr.mxu0 0.0
    %4271 = vmatpush1.msra.mxu0 0.0
    %4272 = vmatprep.subr.mxu0 0.0
    %4273 = vmatpush1.msra.mxu0 0.0
    %4274 = vmatprep.subr.mxu0 0.0
    %4275 = vmatpush1.msra.mxu0 0.0
    %4276 = vmatprep.subr.mxu0 0.0
    %4277 = vmatpush1.msra.mxu0 0.0
    %4278 = vmatprep.subr.mxu0 0.0
    %4279 = vmatpush1.msra.mxu0 0.0
    %4280 = vmatprep.subr.mxu0 0.0
    %4281 = vmatpush1.msra.mxu0 0.0
    %4282 = vmatprep.subr.mxu0 0.0
    %4283 = vmatpush1.msra.mxu0 0.0
    %4284 = vmatprep.mubr.f32.mxu0 0.0
    %v4285 = vand.u32 %v3684, 4294901760
    %4286 = vmatmul.mubr.f32.gmra.mrb[0].mxu0 %v4285
    %v4287 = vpop.f32.mrb[0].mxu0
    %v4288 = vadd.f32 %v4195, %v4287
    %v4289 = vpop.f32.mrb[0].mxu0
    %4290 = vmatprep.mubr.f32.mxu0 0.0
    %v4291 = vand.u32 %v3687, 4294901760
    %4292 = vmatmul.mubr.f32.gmra.mrb[0].mxu0 %v4291
    %v4293 = vpop.f32.mrb[0].mxu0
    %v4294 = vadd.f32 %v4201, %v4293
    %v4295 = vpop.f32.mrb[0].mxu0
    %4296 = vmatprep.mubr.f32.mxu0 0.0
    %v4297 = vand.u32 %v3690, 4294901760
    %4298 = vmatmul.mubr.f32.gmra.mrb[0].mxu0 %v4297
    %v4299 = vpop.f32.mrb[0].mxu0
    %v4300 = vadd.f32 %v4207, %v4299
    %v4301 = vpop.f32.mrb[0].mxu0
    %4302 = vmatprep.mubr.f32.mxu0 0.0
    %v4303 = vand.u32 %v3693, 4294901760
    %4304 = vmatmul.mubr.f32.gmra.mrb[0].mxu0 %v4303
    %v4305 = vpop.f32.mrb[0].mxu0
    %v4306 = vadd.f32 %v4213, %v4305
    %v4307 = vpop.f32.mrb[0].mxu0
    %4308 = vdwg.mxu0
    %v4309 = vsel %vm85, %v4288, 0.0
    %4310 = vadd.xlane.f32.xlu0 %v4309
    %v4311 = vpop.xlane.xlu0 %4310
    %v4312 = vsel %vm85, %v4294, 0.0
    %4313 = vadd.xlane.f32.xlu0 %v4312
    %v4314 = vpop.xlane.xlu0 %4313
    %v4315 = vsel %vm85, %v4300, 0.0
    %4316 = vadd.xlane.f32.xlu0 %v4315
    %v4317 = vpop.xlane.xlu0 %4316
    %v4318 = vsel %vm85, %v4306, 0.0
    %4319 = vadd.xlane.f32.xlu0 %v4318
    %v4320 = vpop.xlane.xlu0 %4319
    %v4321 = vrcp.pop 32.0
    %v4322 = vmul.f32 %v4311, %v4321
    %v4323 = vmul.f32 %v4314, %v4321
    %v4324 = vmul.f32 %v4317, %v4321
    %v4325 = vmul.f32 %v4320, %v4321
    %v4326 = vsub.f32 %v4288, %v4322
    %v4327 = vsub.f32 %v4294, %v4323
    %v4328 = vsub.f32 %v4300, %v4324
    %v4329 = vsub.f32 %v4306, %v4325
    %v4330 = vmul.f32 %v4326, %v4326
    %v4331 = vmul.f32 %v4327, %v4327
    %v4332 = vmul.f32 %v4328, %v4328
    %v4333 = vmul.f32 %v4329, %v4329
    %v4334 = vsel %vm85, %v4330, 0.0
    %4335 = vadd.xlane.f32.xlu0 %v4334
    %v4336 = vpop.xlane.xlu0 %4335
    %v4337 = vsel %vm85, %v4331, 0.0
    %4338 = vadd.xlane.f32.xlu0 %v4337
    %v4339 = vpop.xlane.xlu0 %4338
    %v4340 = vsel %vm85, %v4332, 0.0
    %4341 = vadd.xlane.f32.xlu0 %v4340
    %v4342 = vpop.xlane.xlu0 %4341
    %v4343 = vsel %vm85, %v4333, 0.0
    %4344 = vadd.xlane.f32.xlu0 %v4343
    %v4345 = vpop.xlane.xlu0 %4344
    %v4346 = vmul.f32 %v4336, %v4321
    %v4347 = vmul.f32 %v4339, %v4321
    %v4348 = vmul.f32 %v4342, %v4321
    %v4349 = vmul.f32 %v4345, %v4321
    %v4350 = vadd.f32 %v4346, 1e-05
    %v4351 = vadd.f32 %v4347, 1e-05
    %v4352 = vadd.f32 %v4348, 1e-05
    %v4353 = vadd.f32 %v4349, 1e-05
    %v4354 = vrsqrt.pop %v4350
    %v4355 = vrsqrt.pop %v4351
    %v4356 = vrsqrt.pop %v4352
    %v4357 = vrsqrt.pop %v4353
    %v4358 = vmul.f32 %v4326, %v4354
    %v4359 = vmul.f32 %v4327, %v4355
    %v4360 = vmul.f32 %v4328, %v4356
    %v4361 = vmul.f32 %v4329, %v4357
    %v4362 = vlaneseq
    %v4363 = vshrl.u32 %v4362, 7
    %v4364 = vsub.s32 4, %v4363
    %v4365 = vrot.slane %v80, %v4364
    %v4366 = vmul.f32 %v4358, %v4365
    %v4367 = vmul.f32 %v4359, %v4365
    %v4368 = vmul.f32 %v4360, %v4365
    %v4369 = vmul.f32 %v4361, %v4365
    %v4370 = vlaneseq
    %v4371 = vshrl.u32 %v4370, 7
    %v4372 = vsub.s32 5, %v4371
    %v4373 = vrot.slane %v80, %v4372
    %v4374 = vadd.f32 %v4366, %v4373
    %v4375 = vadd.f32 %v4367, %v4373
    %v4376 = vadd.f32 %v4368, %v4373
    %v4377 = vadd.f32 %v4369, %v4373
    %v4378 = vlaneseq
    %v4379 = vshrl.u32 %v4378, 7
    %v4380 = vsub.s32 2, %v4379
    %v4381 = vrot.slane %v80, %v4380
    %v4383 = vsel %vm85, %v4374, 0
    %v4386 = vsel %vm85, %v4375, 0
    %v4389 = vsel %vm85, %v4376, 0
    %v4392 = vsel %vm85, %v4377, 0
    %4394 = vmatprep.subr.mxu0 0.0
    %v4395 = vand.u32 %v68, 4294901760
    %4396 = vmatpush1.msra.mxu0 %v4395
    %4397 = vmatprep.subr.mxu0 0.0
    %v4398 = vand.u32 %v69, 4294901760
    %4399 = vmatpush1.msra.mxu0 %v4398
    %4400 = vmatprep.subr.mxu0 0.0
    %v4401 = vand.u32 %v70, 4294901760
    %4402 = vmatpush1.msra.mxu0 %v4401
    %4403 = vmatprep.subr.mxu0 0.0
    %v4404 = vand.u32 %v71, 4294901760
    %4405 = vmatpush1.msra.mxu0 %v4404
    %4406 = vmatprep.subr.mxu0 0.0
    %4407 = vmatpush1.msra.mxu0 0.0
    %4408 = vmatprep.subr.mxu0 0.0
    %4409 = vmatpush1.msra.mxu0 0.0
    %4410 = vmatprep.subr.mxu0 0.0
    %4411 = vmatpush1.msra.mxu0 0.0
    %4412 = vmatprep.subr.mxu0 0.0
    %4413 = vmatpush1.msra.mxu0 0.0
    %4414 = vmatprep.subr.mxu0 0.0
    %4415 = vmatpush1.msra.mxu0 0.0
    %4416 = vmatprep.subr.mxu0 0.0
    %4417 = vmatpush1.msra.mxu0 0.0
    %4418 = vmatprep.subr.mxu0 0.0
    %4419 = vmatpush1.msra.mxu0 0.0
    %4420 = vmatprep.subr.mxu0 0.0
    %4421 = vmatpush1.msra.mxu0 0.0
    %4422 = vmatprep.subr.mxu0 0.0
    %4423 = vmatpush1.msra.mxu0 0.0
    %4424 = vmatprep.subr.mxu0 0.0
    %4425 = vmatpush1.msra.mxu0 0.0
    %4426 = vmatprep.subr.mxu0 0.0
    %4427 = vmatpush1.msra.mxu0 0.0
    %4428 = vmatprep.subr.mxu0 0.0
    %4429 = vmatpush1.msra.mxu0 0.0
    %4430 = vmatprep.subr.mxu0 0.0
    %4431 = vmatpush1.msra.mxu0 0.0
    %4432 = vmatprep.subr.mxu0 0.0
    %4433 = vmatpush1.msra.mxu0 0.0
    %4434 = vmatprep.subr.mxu0 0.0
    %4435 = vmatpush1.msra.mxu0 0.0
    %4436 = vmatprep.subr.mxu0 0.0
    %4437 = vmatpush1.msra.mxu0 0.0
    %4438 = vmatprep.subr.mxu0 0.0
    %4439 = vmatpush1.msra.mxu0 0.0
    %4440 = vmatprep.subr.mxu0 0.0
    %4441 = vmatpush1.msra.mxu0 0.0
    %4442 = vmatprep.subr.mxu0 0.0
    %4443 = vmatpush1.msra.mxu0 0.0
    %4444 = vmatprep.subr.mxu0 0.0
    %4445 = vmatpush1.msra.mxu0 0.0
    %4446 = vmatprep.subr.mxu0 0.0
    %4447 = vmatpush1.msra.mxu0 0.0
    %4448 = vmatprep.subr.mxu0 0.0
    %4449 = vmatpush1.msra.mxu0 0.0
    %4450 = vmatprep.subr.mxu0 0.0
    %4451 = vmatpush1.msra.mxu0 0.0
    %4452 = vmatprep.subr.mxu0 0.0
    %4453 = vmatpush1.msra.mxu0 0.0
    %4454 = vmatprep.subr.mxu0 0.0
    %4455 = vmatpush1.msra.mxu0 0.0
    %4456 = vmatprep.subr.mxu0 0.0
    %4457 = vmatpush1.msra.mxu0 0.0
    %4458 = vmatprep.subr.mxu0 0.0
    %4459 = vmatpush1.msra.mxu0 0.0
    %4460 = vmatprep.subr.mxu0 0.0
    %4461 = vmatpush1.msra.mxu0 0.0
    %4462 = vmatprep.mubr.f32.mxu0 0.0
    %v4463 = vand.u32 %v4383, 4294901760
    %v4464 = vsub.f32 %v4383, %v4463
    %v4465 = vand.u32 %v4464, 4294901760
    %v4466 = vsub.f32 %v4464, %v4465
    %v4467 = vand.u32 %v4466, 4294901760
    %4468 = vmatmul.mubr.f32.gmra.mrb[0].mxu0 %v4467
    %v4469 = vpop.f32.mrb[0].mxu0
    %v4470 = vadd.f32 %v4381, %v4469
    %v4471 = vpop.f32.mrb[0].mxu0
    %4472 = vmatprep.mubr.f32.mxu0 0.0
    %v4473 = vand.u32 %v4386, 4294901760
    %v4474 = vsub.f32 %v4386, %v4473
    %v4475 = vand.u32 %v4474, 4294901760
    %v4476 = vsub.f32 %v4474, %v4475
    %v4477 = vand.u32 %v4476, 4294901760
    %4478 = vmatmul.mubr.f32.gmra.mrb[0].mxu0 %v4477
    %v4479 = vpop.f32.mrb[0].mxu0
    %v4480 = vadd.f32 %v4381, %v4479
    %v4481 = vpop.f32.mrb[0].mxu0
    %4482 = vmatprep.mubr.f32.mxu0 0.0
    %v4483 = vand.u32 %v4389, 4294901760
    %v4484 = vsub.f32 %v4389, %v4483
    %v4485 = vand.u32 %v4484, 4294901760
    %v4486 = vsub.f32 %v4484, %v4485
    %v4487 = vand.u32 %v4486, 4294901760
    %4488 = vmatmul.mubr.f32.gmra.mrb[0].mxu0 %v4487
    %v4489 = vpop.f32.mrb[0].mxu0
    %v4490 = vadd.f32 %v4381, %v4489
    %v4491 = vpop.f32.mrb[0].mxu0
    %4492 = vmatprep.mubr.f32.mxu0 0.0
    %v4493 = vand.u32 %v4392, 4294901760
    %v4494 = vsub.f32 %v4392, %v4493
    %v4495 = vand.u32 %v4494, 4294901760
    %v4496 = vsub.f32 %v4494, %v4495
    %v4497 = vand.u32 %v4496, 4294901760
    %4498 = vmatmul.mubr.f32.gmra.mrb[0].mxu0 %v4497
    %v4499 = vpop.f32.mrb[0].mxu0
    %v4500 = vadd.f32 %v4381, %v4499
    %v4501 = vpop.f32.mrb[0].mxu0
    %4502 = vdwg.mxu0
    %4503 = vmatprep.subr.mxu0 0.0
    %v4504 = vand.u32 %v68, 4294901760
    %v4505 = vsub.f32 %v68, %v4504
    %v4506 = vand.u32 %v4505, 4294901760
    %v4507 = vsub.f32 %v4505, %v4506
    %v4508 = vand.u32 %v4507, 4294901760
    %4509 = vmatpush1.msra.mxu0 %v4508
    %4510 = vmatprep.subr.mxu0 0.0
    %v4511 = vand.u32 %v69, 4294901760
    %v4512 = vsub.f32 %v69, %v4511
    %v4513 = vand.u32 %v4512, 4294901760
    %v4514 = vsub.f32 %v4512, %v4513
    %v4515 = vand.u32 %v4514, 4294901760
    %4516 = vmatpush1.msra.mxu0 %v4515
    %4517 = vmatprep.subr.mxu0 0.0
    %v4518 = vand.u32 %v70, 4294901760
    %v4519 = vsub.f32 %v70, %v4518
    %v4520 = vand.u32 %v4519, 4294901760
    %v4521 = vsub.f32 %v4519, %v4520
    %v4522 = vand.u32 %v4521, 4294901760
    %4523 = vmatpush1.msra.mxu0 %v4522
    %4524 = vmatprep.subr.mxu0 0.0
    %v4525 = vand.u32 %v71, 4294901760
    %v4526 = vsub.f32 %v71, %v4525
    %v4527 = vand.u32 %v4526, 4294901760
    %v4528 = vsub.f32 %v4526, %v4527
    %v4529 = vand.u32 %v4528, 4294901760
    %4530 = vmatpush1.msra.mxu0 %v4529
    %4531 = vmatprep.subr.mxu0 0.0
    %4532 = vmatpush1.msra.mxu0 0.0
    %4533 = vmatprep.subr.mxu0 0.0
    %4534 = vmatpush1.msra.mxu0 0.0
    %4535 = vmatprep.subr.mxu0 0.0
    %4536 = vmatpush1.msra.mxu0 0.0
    %4537 = vmatprep.subr.mxu0 0.0
    %4538 = vmatpush1.msra.mxu0 0.0
    %4539 = vmatprep.subr.mxu0 0.0
    %4540 = vmatpush1.msra.mxu0 0.0
    %4541 = vmatprep.subr.mxu0 0.0
    %4542 = vmatpush1.msra.mxu0 0.0
    %4543 = vmatprep.subr.mxu0 0.0
    %4544 = vmatpush1.msra.mxu0 0.0
    %4545 = vmatprep.subr.mxu0 0.0
    %4546 = vmatpush1.msra.mxu0 0.0
    %4547 = vmatprep.subr.mxu0 0.0
    %4548 = vmatpush1.msra.mxu0 0.0
    %4549 = vmatprep.subr.mxu0 0.0
    %4550 = vmatpush1.msra.mxu0 0.0
    %4551 = vmatprep.subr.mxu0 0.0
    %4552 = vmatpush1.msra.mxu0 0.0
    %4553 = vmatprep.subr.mxu0 0.0
    %4554 = vmatpush1.msra.mxu0 0.0
    %4555 = vmatprep.subr.mxu0 0.0
    %4556 = vmatpush1.msra.mxu0 0.0
    %4557 = vmatprep.subr.mxu0 0.0
    %4558 = vmatpush1.msra.mxu0 0.0
    %4559 = vmatprep.subr.mxu0 0.0
    %4560 = vmatpush1.msra.mxu0 0.0
    %4561 = vmatprep.subr.mxu0 0.0
    %4562 = vmatpush1.msra.mxu0 0.0
    %4563 = vmatprep.subr.mxu0 0.0
    %4564 = vmatpush1.msra.mxu0 0.0
    %4565 = vmatprep.subr.mxu0 0.0
    %4566 = vmatpush1.msra.mxu0 0.0
    %4567 = vmatprep.subr.mxu0 0.0
    %4568 = vmatpush1.msra.mxu0 0.0
    %4569 = vmatprep.subr.mxu0 0.0
    %4570 = vmatpush1.msra.mxu0 0.0
    %4571 = vmatprep.subr.mxu0 0.0
    %4572 = vmatpush1.msra.mxu0 0.0
    %4573 = vmatprep.subr.mxu0 0.0
    %4574 = vmatpush1.msra.mxu0 0.0
    %4575 = vmatprep.subr.mxu0 0.0
    %4576 = vmatpush1.msra.mxu0 0.0
    %4577 = vmatprep.subr.mxu0 0.0
    %4578 = vmatpush1.msra.mxu0 0.0
    %4579 = vmatprep.subr.mxu0 0.0
    %4580 = vmatpush1.msra.mxu0 0.0
    %4581 = vmatprep.subr.mxu0 0.0
    %4582 = vmatpush1.msra.mxu0 0.0
    %4583 = vmatprep.subr.mxu0 0.0
    %4584 = vmatpush1.msra.mxu0 0.0
    %4585 = vmatprep.subr.mxu0 0.0
    %4586 = vmatpush1.msra.mxu0 0.0
    %4587 = vmatprep.mubr.f32.mxu0 0.0
    %v4588 = vand.u32 %v4383, 4294901760
    %4589 = vmatmul.mubr.f32.gmra.mrb[0].mxu0 %v4588
    %v4590 = vpop.f32.mrb[0].mxu0
    %v4591 = vadd.f32 %v4470, %v4590
    %v4592 = vpop.f32.mrb[0].mxu0
    %4593 = vmatprep.mubr.f32.mxu0 0.0
    %v4594 = vand.u32 %v4386, 4294901760
    %4595 = vmatmul.mubr.f32.gmra.mrb[0].mxu0 %v4594
    %v4596 = vpop.f32.mrb[0].mxu0
    %v4597 = vadd.f32 %v4480, %v4596
    %v4598 = vpop.f32.mrb[0].mxu0
    %4599 = vmatprep.mubr.f32.mxu0 0.0
    %v4600 = vand.u32 %v4389, 4294901760
    %4601 = vmatmul.mubr.f32.gmra.mrb[0].mxu0 %v4600
    %v4602 = vpop.f32.mrb[0].mxu0
    %v4603 = vadd.f32 %v4490, %v4602
    %v4604 = vpop.f32.mrb[0].mxu0
    %4605 = vmatprep.mubr.f32.mxu0 0.0
    %v4606 = vand.u32 %v4392, 4294901760
    %4607 = vmatmul.mubr.f32.gmra.mrb[0].mxu0 %v4606
    %v4608 = vpop.f32.mrb[0].mxu0
    %v4609 = vadd.f32 %v4500, %v4608
    %v4610 = vpop.f32.mrb[0].mxu0
    %4611 = vdwg.mxu0
    %4612 = vmatprep.subr.mxu0 0.0
    %v4613 = vand.u32 %v68, 4294901760
    %v4614 = vsub.f32 %v68, %v4613
    %4615 = vmatpush1.msra.mxu0 %v4614
    %4616 = vmatprep.subr.mxu0 0.0
    %v4617 = vand.u32 %v69, 4294901760
    %v4618 = vsub.f32 %v69, %v4617
    %4619 = vmatpush1.msra.mxu0 %v4618
    %4620 = vmatprep.subr.mxu0 0.0
    %v4621 = vand.u32 %v70, 4294901760
    %v4622 = vsub.f32 %v70, %v4621
    %4623 = vmatpush1.msra.mxu0 %v4622
    %4624 = vmatprep.subr.mxu0 0.0
    %v4625 = vand.u32 %v71, 4294901760
    %v4626 = vsub.f32 %v71, %v4625
    %4627 = vmatpush1.msra.mxu0 %v4626
    %4628 = vmatprep.subr.mxu0 0.0
    %4629 = vmatpush1.msra.mxu0 0.0
    %4630 = vmatprep.subr.mxu0 0.0
    %4631 = vmatpush1.msra.mxu0 0.0
    %4632 = vmatprep.subr.mxu0 0.0
    %4633 = vmatpush1.msra.mxu0 0.0
    %4634 = vmatprep.subr.mxu0 0.0
    %4635 = vmatpush1.msra.mxu0 0.0
    %4636 = vmatprep.subr.mxu0 0.0
    %4637 = vmatpush1.msra.mxu0 0.0
    %4638 = vmatprep.subr.mxu0 0.0
    %4639 = vmatpush1.msra.mxu0 0.0
    %4640 = vmatprep.subr.mxu0 0.0
    %4641 = vmatpush1.msra.mxu0 0.0
    %4642 = vmatprep.subr.mxu0 0.0
    %4643 = vmatpush1.msra.mxu0 0.0
    %4644 = vmatprep.subr.mxu0 0.0
    %4645 = vmatpush1.msra.mxu0 0.0
    %4646 = vmatprep.subr.mxu0 0.0
    %4647 = vmatpush1.msra.mxu0 0.0
    %4648 = vmatprep.subr.mxu0 0.0
    %4649 = vmatpush1.msra.mxu0 0.0
    %4650 = vmatprep.subr.mxu0 0.0
    %4651 = vmatpush1.msra.mxu0 0.0
    %4652 = vmatprep.subr.mxu0 0.0
    %4653 = vmatpush1.msra.mxu0 0.0
    %4654 = vmatprep.subr.mxu0 0.0
    %4655 = vmatpush1.msra.mxu0 0.0
    %4656 = vmatprep.subr.mxu0 0.0
    %4657 = vmatpush1.msra.mxu0 0.0
    %4658 = vmatprep.subr.mxu0 0.0
    %4659 = vmatpush1.msra.mxu0 0.0
    %4660 = vmatprep.subr.mxu0 0.0
    %4661 = vmatpush1.msra.mxu0 0.0
    %4662 = vmatprep.subr.mxu0 0.0
    %4663 = vmatpush1.msra.mxu0 0.0
    %4664 = vmatprep.subr.mxu0 0.0
    %4665 = vmatpush1.msra.mxu0 0.0
    %4666 = vmatprep.subr.mxu0 0.0
    %4667 = vmatpush1.msra.mxu0 0.0
    %4668 = vmatprep.subr.mxu0 0.0
    %4669 = vmatpush1.msra.mxu0 0.0
    %4670 = vmatprep.subr.mxu0 0.0
    %4671 = vmatpush1.msra.mxu0 0.0
    %4672 = vmatprep.subr.mxu0 0.0
    %4673 = vmatpush1.msra.mxu0 0.0
    %4674 = vmatprep.subr.mxu0 0.0
    %4675 = vmatpush1.msra.mxu0 0.0
    %4676 = vmatprep.subr.mxu0 0.0
    %4677 = vmatpush1.msra.mxu0 0.0
    %4678 = vmatprep.subr.mxu0 0.0
    %4679 = vmatpush1.msra.mxu0 0.0
    %4680 = vmatprep.subr.mxu0 0.0
    %4681 = vmatpush1.msra.mxu0 0.0
    %4682 = vmatprep.subr.mxu0 0.0
    %4683 = vmatpush1.msra.mxu0 0.0
    %4684 = vmatprep.mubr.f32.mxu0 0.0
    %v4685 = vand.u32 %v4383, 4294901760
    %v4686 = vsub.f32 %v4383, %v4685
    %4687 = vmatmul.mubr.f32.gmra.mrb[0].mxu0 %v4686
    %v4688 = vpop.f32.mrb[0].mxu0
    %v4689 = vadd.f32 %v4591, %v4688
    %v4690 = vpop.f32.mrb[0].mxu0
    %4691 = vmatprep.mubr.f32.mxu0 0.0
    %v4692 = vand.u32 %v4386, 4294901760
    %v4693 = vsub.f32 %v4386, %v4692
    %4694 = vmatmul.mubr.f32.gmra.mrb[0].mxu0 %v4693
    %v4695 = vpop.f32.mrb[0].mxu0
    %v4696 = vadd.f32 %v4597, %v4695
    %v4697 = vpop.f32.mrb[0].mxu0
    %4698 = vmatprep.mubr.f32.mxu0 0.0
    %v4699 = vand.u32 %v4389, 4294901760
    %v4700 = vsub.f32 %v4389, %v4699
    %4701 = vmatmul.mubr.f32.gmra.mrb[0].mxu0 %v4700
    %v4702 = vpop.f32.mrb[0].mxu0
    %v4703 = vadd.f32 %v4603, %v4702
    %v4704 = vpop.f32.mrb[0].mxu0
    %4705 = vmatprep.mubr.f32.mxu0 0.0
    %v4706 = vand.u32 %v4392, 4294901760
    %v4707 = vsub.f32 %v4392, %v4706
    %4708 = vmatmul.mubr.f32.gmra.mrb[0].mxu0 %v4707
    %v4709 = vpop.f32.mrb[0].mxu0
    %v4710 = vadd.f32 %v4609, %v4709
    %v4711 = vpop.f32.mrb[0].mxu0
    %4712 = vdwg.mxu0
    %4713 = vmatprep.subr.mxu0 0.0
    %v4714 = vand.u32 %v68, 4294901760
    %4715 = vmatpush1.msra.mxu0 %v4714
    %4716 = vmatprep.subr.mxu0 0.0
    %v4717 = vand.u32 %v69, 4294901760
    %4718 = vmatpush1.msra.mxu0 %v4717
    %4719 = vmatprep.subr.mxu0 0.0
    %v4720 = vand.u32 %v70, 4294901760
    %4721 = vmatpush1.msra.mxu0 %v4720
    %4722 = vmatprep.subr.mxu0 0.0
    %v4723 = vand.u32 %v71, 4294901760
    %4724 = vmatpush1.msra.mxu0 %v4723
    %4725 = vmatprep.subr.mxu0 0.0
    %4726 = vmatpush1.msra.mxu0 0.0
    %4727 = vmatprep.subr.mxu0 0.0
    %4728 = vmatpush1.msra.mxu0 0.0
    %4729 = vmatprep.subr.mxu0 0.0
    %4730 = vmatpush1.msra.mxu0 0.0
    %4731 = vmatprep.subr.mxu0 0.0
    %4732 = vmatpush1.msra.mxu0 0.0
    %4733 = vmatprep.subr.mxu0 0.0
    %4734 = vmatpush1.msra.mxu0 0.0
    %4735 = vmatprep.subr.mxu0 0.0
    %4736 = vmatpush1.msra.mxu0 0.0
    %4737 = vmatprep.subr.mxu0 0.0
    %4738 = vmatpush1.msra.mxu0 0.0
    %4739 = vmatprep.subr.mxu0 0.0
    %4740 = vmatpush1.msra.mxu0 0.0
    %4741 = vmatprep.subr.mxu0 0.0
    %4742 = vmatpush1.msra.mxu0 0.0
    %4743 = vmatprep.subr.mxu0 0.0
    %4744 = vmatpush1.msra.mxu0 0.0
    %4745 = vmatprep.subr.mxu0 0.0
    %4746 = vmatpush1.msra.mxu0 0.0
    %4747 = vmatprep.subr.mxu0 0.0
    %4748 = vmatpush1.msra.mxu0 0.0
    %4749 = vmatprep.subr.mxu0 0.0
    %4750 = vmatpush1.msra.mxu0 0.0
    %4751 = vmatprep.subr.mxu0 0.0
    %4752 = vmatpush1.msra.mxu0 0.0
    %4753 = vmatprep.subr.mxu0 0.0
    %4754 = vmatpush1.msra.mxu0 0.0
    %4755 = vmatprep.subr.mxu0 0.0
    %4756 = vmatpush1.msra.mxu0 0.0
    %4757 = vmatprep.subr.mxu0 0.0
    %4758 = vmatpush1.msra.mxu0 0.0
    %4759 = vmatprep.subr.mxu0 0.0
    %4760 = vmatpush1.msra.mxu0 0.0
    %4761 = vmatprep.subr.mxu0 0.0
    %4762 = vmatpush1.msra.mxu0 0.0
    %4763 = vmatprep.subr.mxu0 0.0
    %4764 = vmatpush1.msra.mxu0 0.0
    %4765 = vmatprep.subr.mxu0 0.0
    %4766 = vmatpush1.msra.mxu0 0.0
    %4767 = vmatprep.subr.mxu0 0.0
    %4768 = vmatpush1.msra.mxu0 0.0
    %4769 = vmatprep.subr.mxu0 0.0
    %4770 = vmatpush1.msra.mxu0 0.0
    %4771 = vmatprep.subr.mxu0 0.0
    %4772 = vmatpush1.msra.mxu0 0.0
    %4773 = vmatprep.subr.mxu0 0.0
    %4774 = vmatpush1.msra.mxu0 0.0
    %4775 = vmatprep.subr.mxu0 0.0
    %4776 = vmatpush1.msra.mxu0 0.0
    %4777 = vmatprep.subr.mxu0 0.0
    %4778 = vmatpush1.msra.mxu0 0.0
    %4779 = vmatprep.subr.mxu0 0.0
    %4780 = vmatpush1.msra.mxu0 0.0
    %4781 = vmatprep.mubr.f32.mxu0 0.0
    %v4782 = vand.u32 %v4383, 4294901760
    %v4783 = vsub.f32 %v4383, %v4782
    %v4784 = vand.u32 %v4783, 4294901760
    %4785 = vmatmul.mubr.f32.gmra.mrb[0].mxu0 %v4784
    %v4786 = vpop.f32.mrb[0].mxu0
    %v4787 = vadd.f32 %v4689, %v4786
    %v4788 = vpop.f32.mrb[0].mxu0
    %4789 = vmatprep.mubr.f32.mxu0 0.0
    %v4790 = vand.u32 %v4386, 4294901760
    %v4791 = vsub.f32 %v4386, %v4790
    %v4792 = vand.u32 %v4791, 4294901760
    %4793 = vmatmul.mubr.f32.gmra.mrb[0].mxu0 %v4792
    %v4794 = vpop.f32.mrb[0].mxu0
    %v4795 = vadd.f32 %v4696, %v4794
    %v4796 = vpop.f32.mrb[0].mxu0
    %4797 = vmatprep.mubr.f32.mxu0 0.0
    %v4798 = vand.u32 %v4389, 4294901760
    %v4799 = vsub.f32 %v4389, %v4798
    %v4800 = vand.u32 %v4799, 4294901760
    %4801 = vmatmul.mubr.f32.gmra.mrb[0].mxu0 %v4800
    %v4802 = vpop.f32.mrb[0].mxu0
    %v4803 = vadd.f32 %v4703, %v4802
    %v4804 = vpop.f32.mrb[0].mxu0
    %4805 = vmatprep.mubr.f32.mxu0 0.0
    %v4806 = vand.u32 %v4392, 4294901760
    %v4807 = vsub.f32 %v4392, %v4806
    %v4808 = vand.u32 %v4807, 4294901760
    %4809 = vmatmul.mubr.f32.gmra.mrb[0].mxu0 %v4808
    %v4810 = vpop.f32.mrb[0].mxu0
    %v4811 = vadd.f32 %v4710, %v4810
    %v4812 = vpop.f32.mrb[0].mxu0
    %4813 = vdwg.mxu0
    %4814 = vmatprep.subr.mxu0 0.0
    %v4815 = vand.u32 %v68, 4294901760
    %v4816 = vsub.f32 %v68, %v4815
    %v4817 = vand.u32 %v4816, 4294901760
    %4818 = vmatpush1.msra.mxu0 %v4817
    %4819 = vmatprep.subr.mxu0 0.0
    %v4820 = vand.u32 %v69, 4294901760
    %v4821 = vsub.f32 %v69, %v4820
    %v4822 = vand.u32 %v4821, 4294901760
    %4823 = vmatpush1.msra.mxu0 %v4822
    %4824 = vmatprep.subr.mxu0 0.0
    %v4825 = vand.u32 %v70, 4294901760
    %v4826 = vsub.f32 %v70, %v4825
    %v4827 = vand.u32 %v4826, 4294901760
    %4828 = vmatpush1.msra.mxu0 %v4827
    %4829 = vmatprep.subr.mxu0 0.0
    %v4830 = vand.u32 %v71, 4294901760
    %v4831 = vsub.f32 %v71, %v4830
    %v4832 = vand.u32 %v4831, 4294901760
    %4833 = vmatpush1.msra.mxu0 %v4832
    %4834 = vmatprep.subr.mxu0 0.0
    %4835 = vmatpush1.msra.mxu0 0.0
    %4836 = vmatprep.subr.mxu0 0.0
    %4837 = vmatpush1.msra.mxu0 0.0
    %4838 = vmatprep.subr.mxu0 0.0
    %4839 = vmatpush1.msra.mxu0 0.0
    %4840 = vmatprep.subr.mxu0 0.0
    %4841 = vmatpush1.msra.mxu0 0.0
    %4842 = vmatprep.subr.mxu0 0.0
    %4843 = vmatpush1.msra.mxu0 0.0
    %4844 = vmatprep.subr.mxu0 0.0
    %4845 = vmatpush1.msra.mxu0 0.0
    %4846 = vmatprep.subr.mxu0 0.0
    %4847 = vmatpush1.msra.mxu0 0.0
    %4848 = vmatprep.subr.mxu0 0.0
    %4849 = vmatpush1.msra.mxu0 0.0
    %4850 = vmatprep.subr.mxu0 0.0
    %4851 = vmatpush1.msra.mxu0 0.0
    %4852 = vmatprep.subr.mxu0 0.0
    %4853 = vmatpush1.msra.mxu0 0.0
    %4854 = vmatprep.subr.mxu0 0.0
    %4855 = vmatpush1.msra.mxu0 0.0
    %4856 = vmatprep.subr.mxu0 0.0
    %4857 = vmatpush1.msra.mxu0 0.0
    %4858 = vmatprep.subr.mxu0 0.0
    %4859 = vmatpush1.msra.mxu0 0.0
    %4860 = vmatprep.subr.mxu0 0.0
    %4861 = vmatpush1.msra.mxu0 0.0
    %4862 = vmatprep.subr.mxu0 0.0
    %4863 = vmatpush1.msra.mxu0 0.0
    %4864 = vmatprep.subr.mxu0 0.0
    %4865 = vmatpush1.msra.mxu0 0.0
    %4866 = vmatprep.subr.mxu0 0.0
    %4867 = vmatpush1.msra.mxu0 0.0
    %4868 = vmatprep.subr.mxu0 0.0
    %4869 = vmatpush1.msra.mxu0 0.0
    %4870 = vmatprep.subr.mxu0 0.0
    %4871 = vmatpush1.msra.mxu0 0.0
    %4872 = vmatprep.subr.mxu0 0.0
    %4873 = vmatpush1.msra.mxu0 0.0
    %4874 = vmatprep.subr.mxu0 0.0
    %4875 = vmatpush1.msra.mxu0 0.0
    %4876 = vmatprep.subr.mxu0 0.0
    %4877 = vmatpush1.msra.mxu0 0.0
    %4878 = vmatprep.subr.mxu0 0.0
    %4879 = vmatpush1.msra.mxu0 0.0
    %4880 = vmatprep.subr.mxu0 0.0
    %4881 = vmatpush1.msra.mxu0 0.0
    %4882 = vmatprep.subr.mxu0 0.0
    %4883 = vmatpush1.msra.mxu0 0.0
    %4884 = vmatprep.subr.mxu0 0.0
    %4885 = vmatpush1.msra.mxu0 0.0
    %4886 = vmatprep.subr.mxu0 0.0
    %4887 = vmatpush1.msra.mxu0 0.0
    %4888 = vmatprep.subr.mxu0 0.0
    %4889 = vmatpush1.msra.mxu0 0.0
    %4890 = vmatprep.mubr.f32.mxu0 0.0
    %v4891 = vand.u32 %v4383, 4294901760
    %4892 = vmatmul.mubr.f32.gmra.mrb[0].mxu0 %v4891
    %v4893 = vpop.f32.mrb[0].mxu0
    %v4894 = vadd.f32 %v4787, %v4893
    %v4895 = vpop.f32.mrb[0].mxu0
    %4896 = vmatprep.mubr.f32.mxu0 0.0
    %v4897 = vand.u32 %v4386, 4294901760
    %4898 = vmatmul.mubr.f32.gmra.mrb[0].mxu0 %v4897
    %v4899 = vpop.f32.mrb[0].mxu0
    %v4900 = vadd.f32 %v4795, %v4899
    %v4901 = vpop.f32.mrb[0].mxu0
    %4902 = vmatprep.mubr.f32.mxu0 0.0
    %v4903 = vand.u32 %v4389, 4294901760
    %4904 = vmatmul.mubr.f32.gmra.mrb[0].mxu0 %v4903
    %v4905 = vpop.f32.mrb[0].mxu0
    %v4906 = vadd.f32 %v4803, %v4905
    %v4907 = vpop.f32.mrb[0].mxu0
    %4908 = vmatprep.mubr.f32.mxu0 0.0
    %v4909 = vand.u32 %v4392, 4294901760
    %4910 = vmatmul.mubr.f32.gmra.mrb[0].mxu0 %v4909
    %v4911 = vpop.f32.mrb[0].mxu0
    %v4912 = vadd.f32 %v4811, %v4911
    %v4913 = vpop.f32.mrb[0].mxu0
    %4914 = vdwg.mxu0
    %4915 = vmatprep.subr.mxu0 0.0
    %v4916 = vand.u32 %v68, 4294901760
    %4917 = vmatpush1.msra.mxu0 %v4916
    %4918 = vmatprep.subr.mxu0 0.0
    %v4919 = vand.u32 %v69, 4294901760
    %4920 = vmatpush1.msra.mxu0 %v4919
    %4921 = vmatprep.subr.mxu0 0.0
    %v4922 = vand.u32 %v70, 4294901760
    %4923 = vmatpush1.msra.mxu0 %v4922
    %4924 = vmatprep.subr.mxu0 0.0
    %v4925 = vand.u32 %v71, 4294901760
    %4926 = vmatpush1.msra.mxu0 %v4925
    %4927 = vmatprep.subr.mxu0 0.0
    %4928 = vmatpush1.msra.mxu0 0.0
    %4929 = vmatprep.subr.mxu0 0.0
    %4930 = vmatpush1.msra.mxu0 0.0
    %4931 = vmatprep.subr.mxu0 0.0
    %4932 = vmatpush1.msra.mxu0 0.0
    %4933 = vmatprep.subr.mxu0 0.0
    %4934 = vmatpush1.msra.mxu0 0.0
    %4935 = vmatprep.subr.mxu0 0.0
    %4936 = vmatpush1.msra.mxu0 0.0
    %4937 = vmatprep.subr.mxu0 0.0
    %4938 = vmatpush1.msra.mxu0 0.0
    %4939 = vmatprep.subr.mxu0 0.0
    %4940 = vmatpush1.msra.mxu0 0.0
    %4941 = vmatprep.subr.mxu0 0.0
    %4942 = vmatpush1.msra.mxu0 0.0
    %4943 = vmatprep.subr.mxu0 0.0
    %4944 = vmatpush1.msra.mxu0 0.0
    %4945 = vmatprep.subr.mxu0 0.0
    %4946 = vmatpush1.msra.mxu0 0.0
    %4947 = vmatprep.subr.mxu0 0.0
    %4948 = vmatpush1.msra.mxu0 0.0
    %4949 = vmatprep.subr.mxu0 0.0
    %4950 = vmatpush1.msra.mxu0 0.0
    %4951 = vmatprep.subr.mxu0 0.0
    %4952 = vmatpush1.msra.mxu0 0.0
    %4953 = vmatprep.subr.mxu0 0.0
    %4954 = vmatpush1.msra.mxu0 0.0
    %4955 = vmatprep.subr.mxu0 0.0
    %4956 = vmatpush1.msra.mxu0 0.0
    %4957 = vmatprep.subr.mxu0 0.0
    %4958 = vmatpush1.msra.mxu0 0.0
    %4959 = vmatprep.subr.mxu0 0.0
    %4960 = vmatpush1.msra.mxu0 0.0
    %4961 = vmatprep.subr.mxu0 0.0
    %4962 = vmatpush1.msra.mxu0 0.0
    %4963 = vmatprep.subr.mxu0 0.0
    %4964 = vmatpush1.msra.mxu0 0.0
    %4965 = vmatprep.subr.mxu0 0.0
    %4966 = vmatpush1.msra.mxu0 0.0
    %4967 = vmatprep.subr.mxu0 0.0
    %4968 = vmatpush1.msra.mxu0 0.0
    %4969 = vmatprep.subr.mxu0 0.0
    %4970 = vmatpush1.msra.mxu0 0.0
    %4971 = vmatprep.subr.mxu0 0.0
    %4972 = vmatpush1.msra.mxu0 0.0
    %4973 = vmatprep.subr.mxu0 0.0
    %4974 = vmatpush1.msra.mxu0 0.0
    %4975 = vmatprep.subr.mxu0 0.0
    %4976 = vmatpush1.msra.mxu0 0.0
    %4977 = vmatprep.subr.mxu0 0.0
    %4978 = vmatpush1.msra.mxu0 0.0
    %4979 = vmatprep.subr.mxu0 0.0
    %4980 = vmatpush1.msra.mxu0 0.0
    %4981 = vmatprep.subr.mxu0 0.0
    %4982 = vmatpush1.msra.mxu0 0.0
    %4983 = vmatprep.mubr.f32.mxu0 0.0
    %v4984 = vand.u32 %v4383, 4294901760
    %4985 = vmatmul.mubr.f32.gmra.mrb[0].mxu0 %v4984
    %v4986 = vpop.f32.mrb[0].mxu0
    %v4987 = vadd.f32 %v4894, %v4986
    %v4988 = vpop.f32.mrb[0].mxu0
    %4989 = vmatprep.mubr.f32.mxu0 0.0
    %v4990 = vand.u32 %v4386, 4294901760
    %4991 = vmatmul.mubr.f32.gmra.mrb[0].mxu0 %v4990
    %v4992 = vpop.f32.mrb[0].mxu0
    %v4993 = vadd.f32 %v4900, %v4992
    %v4994 = vpop.f32.mrb[0].mxu0
    %4995 = vmatprep.mubr.f32.mxu0 0.0
    %v4996 = vand.u32 %v4389, 4294901760
    %4997 = vmatmul.mubr.f32.gmra.mrb[0].mxu0 %v4996
    %v4998 = vpop.f32.mrb[0].mxu0
    %v4999 = vadd.f32 %v4906, %v4998
    %v5000 = vpop.f32.mrb[0].mxu0
    %5001 = vmatprep.mubr.f32.mxu0 0.0
    %v5002 = vand.u32 %v4392, 4294901760
    %5003 = vmatmul.mubr.f32.gmra.mrb[0].mxu0 %v5002
    %v5004 = vpop.f32.mrb[0].mxu0
    %v5005 = vadd.f32 %v4912, %v5004
    %v5006 = vpop.f32.mrb[0].mxu0
    %5007 = vdwg.mxu0
    %vm5008 = vcmp.ge.f32.partialorder %v4987, 0.0
    %vm5009 = vcmp.ge.f32.partialorder %v4993, 0.0
    %vm5010 = vcmp.ge.f32.partialorder %v4999, 0.0
    %vm5011 = vcmp.ge.f32.partialorder %v5005, 0.0
    %v5012 = vmul.f32 %v4987, 0.01
    %v5013 = vmul.f32 %v4993, 0.01
    %v5014 = vmul.f32 %v4999, 0.01
    %v5015 = vmul.f32 %v5005, 0.01
    %v5016 = vsel %vm5008, %v4987, %v5012
    %v5017 = vsel %vm5009, %v4993, %v5013
    %v5018 = vsel %vm5010, %v4999, %v5014
    %v5019 = vsel %vm5011, %v5005, %v5015
    %vm5020 = vcmask 523264
    %v5022 = vsel %vm5020, %v5016, 0
    %v5025 = vsel %vm5020, %v5017, 0
    %v5028 = vsel %vm5020, %v5018, 0
    %v5031 = vsel %vm5020, %v5019, 0
    %5033 = vmatprep.subr.mxu0 0.0
    %v5034 = vand.u32 %v72, 4294901760
    %5035 = vmatpush1.msra.mxu0 %v5034
    %5036 = vmatprep.subr.mxu0 0.0
    %v5037 = vand.u32 %v73, 4294901760
    %5038 = vmatpush1.msra.mxu0 %v5037
    %5039 = vmatprep.subr.mxu0 0.0
    %v5040 = vand.u32 %v74, 4294901760
    %5041 = vmatpush1.msra.mxu0 %v5040
    %5042 = vmatprep.subr.mxu0 0.0
    %v5043 = vand.u32 %v75, 4294901760
    %5044 = vmatpush1.msra.mxu0 %v5043
    %5045 = vmatprep.subr.mxu0 0.0
    %v5046 = vand.u32 %v76, 4294901760
    %5047 = vmatpush1.msra.mxu0 %v5046
    %5048 = vmatprep.subr.mxu0 0.0
    %v5049 = vand.u32 %v77, 4294901760
    %5050 = vmatpush1.msra.mxu0 %v5049
    %5051 = vmatprep.subr.mxu0 0.0
    %v5052 = vand.u32 %v78, 4294901760
    %5053 = vmatpush1.msra.mxu0 %v5052
    %5054 = vmatprep.subr.mxu0 0.0
    %v5055 = vand.u32 %v79, 4294901760
    %5056 = vmatpush1.msra.mxu0 %v5055
    %5057 = vmatprep.subr.mxu0 0.0
    %5058 = vmatpush1.msra.mxu0 0.0
    %5059 = vmatprep.subr.mxu0 0.0
    %5060 = vmatpush1.msra.mxu0 0.0
    %5061 = vmatprep.subr.mxu0 0.0
    %5062 = vmatpush1.msra.mxu0 0.0
    %5063 = vmatprep.subr.mxu0 0.0
    %5064 = vmatpush1.msra.mxu0 0.0
    %5065 = vmatprep.subr.mxu0 0.0
    %5066 = vmatpush1.msra.mxu0 0.0
    %5067 = vmatprep.subr.mxu0 0.0
    %5068 = vmatpush1.msra.mxu0 0.0
    %5069 = vmatprep.subr.mxu0 0.0
    %5070 = vmatpush1.msra.mxu0 0.0
    %5071 = vmatprep.subr.mxu0 0.0
    %5072 = vmatpush1.msra.mxu0 0.0
    %5073 = vmatprep.subr.mxu0 0.0
    %5074 = vmatpush1.msra.mxu0 0.0
    %5075 = vmatprep.subr.mxu0 0.0
    %5076 = vmatpush1.msra.mxu0 0.0
    %5077 = vmatprep.subr.mxu0 0.0
    %5078 = vmatpush1.msra.mxu0 0.0
    %5079 = vmatprep.subr.mxu0 0.0
    %5080 = vmatpush1.msra.mxu0 0.0
    %5081 = vmatprep.subr.mxu0 0.0
    %5082 = vmatpush1.msra.mxu0 0.0
    %5083 = vmatprep.subr.mxu0 0.0
    %5084 = vmatpush1.msra.mxu0 0.0
    %5085 = vmatprep.subr.mxu0 0.0
    %5086 = vmatpush1.msra.mxu0 0.0
    %5087 = vmatprep.subr.mxu0 0.0
    %5088 = vmatpush1.msra.mxu0 0.0
    %5089 = vmatprep.subr.mxu0 0.0
    %5090 = vmatpush1.msra.mxu0 0.0
    %5091 = vmatprep.subr.mxu0 0.0
    %5092 = vmatpush1.msra.mxu0 0.0
    %5093 = vmatprep.subr.mxu0 0.0
    %5094 = vmatpush1.msra.mxu0 0.0
    %5095 = vmatprep.subr.mxu0 0.0
    %5096 = vmatpush1.msra.mxu0 0.0
    %5097 = vmatprep.subr.mxu0 0.0
    %5098 = vmatpush1.msra.mxu0 0.0
    %5099 = vmatprep.subr.mxu0 0.0
    %5100 = vmatpush1.msra.mxu0 0.0
    %5101 = vmatprep.subr.mxu0 0.0
    %5102 = vmatpush1.msra.mxu0 0.0
    %5103 = vmatprep.subr.mxu0 0.0
    %5104 = vmatpush1.msra.mxu0 0.0
    %5105 = vmatprep.mubr.f32.mxu0 0.0
    %v5106 = vand.u32 %v5022, 4294901760
    %v5107 = vsub.f32 %v5022, %v5106
    %v5108 = vand.u32 %v5107, 4294901760
    %v5109 = vsub.f32 %v5107, %v5108
    %v5110 = vand.u32 %v5109, 4294901760
    %5111 = vmatmul.mubr.f32.gmra.mrb[0].mxu0 %v5110
    %v5112 = vpop.f32.mrb[0].mxu0
    %v5113 = vadd.f32 0.0, %v5112
    %v5114 = vpop.f32.mrb[0].mxu0
    %5115 = vmatprep.mubr.f32.mxu0 0.0
    %v5116 = vand.u32 %v5025, 4294901760
    %v5117 = vsub.f32 %v5025, %v5116
    %v5118 = vand.u32 %v5117, 4294901760
    %v5119 = vsub.f32 %v5117, %v5118
    %v5120 = vand.u32 %v5119, 4294901760
    %5121 = vmatmul.mubr.f32.gmra.mrb[0].mxu0 %v5120
    %v5122 = vpop.f32.mrb[0].mxu0
    %v5123 = vadd.f32 0.0, %v5122
    %v5124 = vpop.f32.mrb[0].mxu0
    %5125 = vmatprep.mubr.f32.mxu0 0.0
    %v5126 = vand.u32 %v5028, 4294901760
    %v5127 = vsub.f32 %v5028, %v5126
    %v5128 = vand.u32 %v5127, 4294901760
    %v5129 = vsub.f32 %v5127, %v5128
    %v5130 = vand.u32 %v5129, 4294901760
    %5131 = vmatmul.mubr.f32.gmra.mrb[0].mxu0 %v5130
    %v5132 = vpop.f32.mrb[0].mxu0
    %v5133 = vadd.f32 0.0, %v5132
    %v5134 = vpop.f32.mrb[0].mxu0
    %5135 = vmatprep.mubr.f32.mxu0 0.0
    %v5136 = vand.u32 %v5031, 4294901760
    %v5137 = vsub.f32 %v5031, %v5136
    %v5138 = vand.u32 %v5137, 4294901760
    %v5139 = vsub.f32 %v5137, %v5138
    %v5140 = vand.u32 %v5139, 4294901760
    %5141 = vmatmul.mubr.f32.gmra.mrb[0].mxu0 %v5140
    %v5142 = vpop.f32.mrb[0].mxu0
    %v5143 = vadd.f32 0.0, %v5142
    %v5144 = vpop.f32.mrb[0].mxu0
    %5145 = vdwg.mxu0
    %5146 = vmatprep.subr.mxu0 0.0
    %v5147 = vand.u32 %v72, 4294901760
    %v5148 = vsub.f32 %v72, %v5147
    %v5149 = vand.u32 %v5148, 4294901760
    %v5150 = vsub.f32 %v5148, %v5149
    %v5151 = vand.u32 %v5150, 4294901760
    %5152 = vmatpush1.msra.mxu0 %v5151
    %5153 = vmatprep.subr.mxu0 0.0
    %v5154 = vand.u32 %v73, 4294901760
    %v5155 = vsub.f32 %v73, %v5154
    %v5156 = vand.u32 %v5155, 4294901760
    %v5157 = vsub.f32 %v5155, %v5156
    %v5158 = vand.u32 %v5157, 4294901760
    %5159 = vmatpush1.msra.mxu0 %v5158
    %5160 = vmatprep.subr.mxu0 0.0
    %v5161 = vand.u32 %v74, 4294901760
    %v5162 = vsub.f32 %v74, %v5161
    %v5163 = vand.u32 %v5162, 4294901760
    %v5164 = vsub.f32 %v5162, %v5163
    %v5165 = vand.u32 %v5164, 4294901760
    %5166 = vmatpush1.msra.mxu0 %v5165
    %5167 = vmatprep.subr.mxu0 0.0
    %v5168 = vand.u32 %v75, 4294901760
    %v5169 = vsub.f32 %v75, %v5168
    %v5170 = vand.u32 %v5169, 4294901760
    %v5171 = vsub.f32 %v5169, %v5170
    %v5172 = vand.u32 %v5171, 4294901760
    %5173 = vmatpush1.msra.mxu0 %v5172
    %5174 = vmatprep.subr.mxu0 0.0
    %v5175 = vand.u32 %v76, 4294901760
    %v5176 = vsub.f32 %v76, %v5175
    %v5177 = vand.u32 %v5176, 4294901760
    %v5178 = vsub.f32 %v5176, %v5177
    %v5179 = vand.u32 %v5178, 4294901760
    %5180 = vmatpush1.msra.mxu0 %v5179
    %5181 = vmatprep.subr.mxu0 0.0
    %v5182 = vand.u32 %v77, 4294901760
    %v5183 = vsub.f32 %v77, %v5182
    %v5184 = vand.u32 %v5183, 4294901760
    %v5185 = vsub.f32 %v5183, %v5184
    %v5186 = vand.u32 %v5185, 4294901760
    %5187 = vmatpush1.msra.mxu0 %v5186
    %5188 = vmatprep.subr.mxu0 0.0
    %v5189 = vand.u32 %v78, 4294901760
    %v5190 = vsub.f32 %v78, %v5189
    %v5191 = vand.u32 %v5190, 4294901760
    %v5192 = vsub.f32 %v5190, %v5191
    %v5193 = vand.u32 %v5192, 4294901760
    %5194 = vmatpush1.msra.mxu0 %v5193
    %5195 = vmatprep.subr.mxu0 0.0
    %v5196 = vand.u32 %v79, 4294901760
    %v5197 = vsub.f32 %v79, %v5196
    %v5198 = vand.u32 %v5197, 4294901760
    %v5199 = vsub.f32 %v5197, %v5198
    %v5200 = vand.u32 %v5199, 4294901760
    %5201 = vmatpush1.msra.mxu0 %v5200
    %5202 = vmatprep.subr.mxu0 0.0
    %5203 = vmatpush1.msra.mxu0 0.0
    %5204 = vmatprep.subr.mxu0 0.0
    %5205 = vmatpush1.msra.mxu0 0.0
    %5206 = vmatprep.subr.mxu0 0.0
    %5207 = vmatpush1.msra.mxu0 0.0
    %5208 = vmatprep.subr.mxu0 0.0
    %5209 = vmatpush1.msra.mxu0 0.0
    %5210 = vmatprep.subr.mxu0 0.0
    %5211 = vmatpush1.msra.mxu0 0.0
    %5212 = vmatprep.subr.mxu0 0.0
    %5213 = vmatpush1.msra.mxu0 0.0
    %5214 = vmatprep.subr.mxu0 0.0
    %5215 = vmatpush1.msra.mxu0 0.0
    %5216 = vmatprep.subr.mxu0 0.0
    %5217 = vmatpush1.msra.mxu0 0.0
    %5218 = vmatprep.subr.mxu0 0.0
    %5219 = vmatpush1.msra.mxu0 0.0
    %5220 = vmatprep.subr.mxu0 0.0
    %5221 = vmatpush1.msra.mxu0 0.0
    %5222 = vmatprep.subr.mxu0 0.0
    %5223 = vmatpush1.msra.mxu0 0.0
    %5224 = vmatprep.subr.mxu0 0.0
    %5225 = vmatpush1.msra.mxu0 0.0
    %5226 = vmatprep.subr.mxu0 0.0
    %5227 = vmatpush1.msra.mxu0 0.0
    %5228 = vmatprep.subr.mxu0 0.0
    %5229 = vmatpush1.msra.mxu0 0.0
    %5230 = vmatprep.subr.mxu0 0.0
    %5231 = vmatpush1.msra.mxu0 0.0
    %5232 = vmatprep.subr.mxu0 0.0
    %5233 = vmatpush1.msra.mxu0 0.0
    %5234 = vmatprep.subr.mxu0 0.0
    %5235 = vmatpush1.msra.mxu0 0.0
    %5236 = vmatprep.subr.mxu0 0.0
    %5237 = vmatpush1.msra.mxu0 0.0
    %5238 = vmatprep.subr.mxu0 0.0
    %5239 = vmatpush1.msra.mxu0 0.0
    %5240 = vmatprep.subr.mxu0 0.0
    %5241 = vmatpush1.msra.mxu0 0.0
    %5242 = vmatprep.subr.mxu0 0.0
    %5243 = vmatpush1.msra.mxu0 0.0
    %5244 = vmatprep.subr.mxu0 0.0
    %5245 = vmatpush1.msra.mxu0 0.0
    %5246 = vmatprep.subr.mxu0 0.0
    %5247 = vmatpush1.msra.mxu0 0.0
    %5248 = vmatprep.subr.mxu0 0.0
    %5249 = vmatpush1.msra.mxu0 0.0
    %5250 = vmatprep.mubr.f32.mxu0 0.0
    %v5251 = vand.u32 %v5022, 4294901760
    %5252 = vmatmul.mubr.f32.gmra.mrb[0].mxu0 %v5251
    %v5253 = vpop.f32.mrb[0].mxu0
    %v5254 = vadd.f32 %v5113, %v5253
    %v5255 = vpop.f32.mrb[0].mxu0
    %5256 = vmatprep.mubr.f32.mxu0 0.0
    %v5257 = vand.u32 %v5025, 4294901760
    %5258 = vmatmul.mubr.f32.gmra.mrb[0].mxu0 %v5257
    %v5259 = vpop.f32.mrb[0].mxu0
    %v5260 = vadd.f32 %v5123, %v5259
    %v5261 = vpop.f32.mrb[0].mxu0
    %5262 = vmatprep.mubr.f32.mxu0 0.0
    %v5263 = vand.u32 %v5028, 4294901760
    %5264 = vmatmul.mubr.f32.gmra.mrb[0].mxu0 %v5263
    %v5265 = vpop.f32.mrb[0].mxu0
    %v5266 = vadd.f32 %v5133, %v5265
    %v5267 = vpop.f32.mrb[0].mxu0
    %5268 = vmatprep.mubr.f32.mxu0 0.0
    %v5269 = vand.u32 %v5031, 4294901760
    %5270 = vmatmul.mubr.f32.gmra.mrb[0].mxu0 %v5269
    %v5271 = vpop.f32.mrb[0].mxu0
    %v5272 = vadd.f32 %v5143, %v5271
    %v5273 = vpop.f32.mrb[0].mxu0
    %5274 = vdwg.mxu0
    %5275 = vmatprep.subr.mxu0 0.0
    %v5276 = vand.u32 %v72, 4294901760
    %v5277 = vsub.f32 %v72, %v5276
    %5278 = vmatpush1.msra.mxu0 %v5277
    %5279 = vmatprep.subr.mxu0 0.0
    %v5280 = vand.u32 %v73, 4294901760
    %v5281 = vsub.f32 %v73, %v5280
    %5282 = vmatpush1.msra.mxu0 %v5281
    %5283 = vmatprep.subr.mxu0 0.0
    %v5284 = vand.u32 %v74, 4294901760
    %v5285 = vsub.f32 %v74, %v5284
    %5286 = vmatpush1.msra.mxu0 %v5285
    %5287 = vmatprep.subr.mxu0 0.0
    %v5288 = vand.u32 %v75, 4294901760
    %v5289 = vsub.f32 %v75, %v5288
    %5290 = vmatpush1.msra.mxu0 %v5289
    %5291 = vmatprep.subr.mxu0 0.0
    %v5292 = vand.u32 %v76, 4294901760
    %v5293 = vsub.f32 %v76, %v5292
    %5294 = vmatpush1.msra.mxu0 %v5293
    %5295 = vmatprep.subr.mxu0 0.0
    %v5296 = vand.u32 %v77, 4294901760
    %v5297 = vsub.f32 %v77, %v5296
    %5298 = vmatpush1.msra.mxu0 %v5297
    %5299 = vmatprep.subr.mxu0 0.0
    %v5300 = vand.u32 %v78, 4294901760
    %v5301 = vsub.f32 %v78, %v5300
    %5302 = vmatpush1.msra.mxu0 %v5301
    %5303 = vmatprep.subr.mxu0 0.0
    %v5304 = vand.u32 %v79, 4294901760
    %v5305 = vsub.f32 %v79, %v5304
    %5306 = vmatpush1.msra.mxu0 %v5305
    %5307 = vmatprep.subr.mxu0 0.0
    %5308 = vmatpush1.msra.mxu0 0.0
    %5309 = vmatprep.subr.mxu0 0.0
    %5310 = vmatpush1.msra.mxu0 0.0
    %5311 = vmatprep.subr.mxu0 0.0
    %5312 = vmatpush1.msra.mxu0 0.0
    %5313 = vmatprep.subr.mxu0 0.0
    %5314 = vmatpush1.msra.mxu0 0.0
    %5315 = vmatprep.subr.mxu0 0.0
    %5316 = vmatpush1.msra.mxu0 0.0
    %5317 = vmatprep.subr.mxu0 0.0
    %5318 = vmatpush1.msra.mxu0 0.0
    %5319 = vmatprep.subr.mxu0 0.0
    %5320 = vmatpush1.msra.mxu0 0.0
    %5321 = vmatprep.subr.mxu0 0.0
    %5322 = vmatpush1.msra.mxu0 0.0
    %5323 = vmatprep.subr.mxu0 0.0
    %5324 = vmatpush1.msra.mxu0 0.0
    %5325 = vmatprep.subr.mxu0 0.0
    %5326 = vmatpush1.msra.mxu0 0.0
    %5327 = vmatprep.subr.mxu0 0.0
    %5328 = vmatpush1.msra.mxu0 0.0
    %5329 = vmatprep.subr.mxu0 0.0
    %5330 = vmatpush1.msra.mxu0 0.0
    %5331 = vmatprep.subr.mxu0 0.0
    %5332 = vmatpush1.msra.mxu0 0.0
    %5333 = vmatprep.subr.mxu0 0.0
    %5334 = vmatpush1.msra.mxu0 0.0
    %5335 = vmatprep.subr.mxu0 0.0
    %5336 = vmatpush1.msra.mxu0 0.0
    %5337 = vmatprep.subr.mxu0 0.0
    %5338 = vmatpush1.msra.mxu0 0.0
    %5339 = vmatprep.subr.mxu0 0.0
    %5340 = vmatpush1.msra.mxu0 0.0
    %5341 = vmatprep.subr.mxu0 0.0
    %5342 = vmatpush1.msra.mxu0 0.0
    %5343 = vmatprep.subr.mxu0 0.0
    %5344 = vmatpush1.msra.mxu0 0.0
    %5345 = vmatprep.subr.mxu0 0.0
    %5346 = vmatpush1.msra.mxu0 0.0
    %5347 = vmatprep.subr.mxu0 0.0
    %5348 = vmatpush1.msra.mxu0 0.0
    %5349 = vmatprep.subr.mxu0 0.0
    %5350 = vmatpush1.msra.mxu0 0.0
    %5351 = vmatprep.subr.mxu0 0.0
    %5352 = vmatpush1.msra.mxu0 0.0
    %5353 = vmatprep.subr.mxu0 0.0
    %5354 = vmatpush1.msra.mxu0 0.0
    %5355 = vmatprep.mubr.f32.mxu0 0.0
    %v5356 = vand.u32 %v5022, 4294901760
    %v5357 = vsub.f32 %v5022, %v5356
    %5358 = vmatmul.mubr.f32.gmra.mrb[0].mxu0 %v5357
    %v5359 = vpop.f32.mrb[0].mxu0
    %v5360 = vadd.f32 %v5254, %v5359
    %v5361 = vpop.f32.mrb[0].mxu0
    %5362 = vmatprep.mubr.f32.mxu0 0.0
    %v5363 = vand.u32 %v5025, 4294901760
    %v5364 = vsub.f32 %v5025, %v5363
    %5365 = vmatmul.mubr.f32.gmra.mrb[0].mxu0 %v5364
    %v5366 = vpop.f32.mrb[0].mxu0
    %v5367 = vadd.f32 %v5260, %v5366
    %v5368 = vpop.f32.mrb[0].mxu0
    %5369 = vmatprep.mubr.f32.mxu0 0.0
    %v5370 = vand.u32 %v5028, 4294901760
    %v5371 = vsub.f32 %v5028, %v5370
    %5372 = vmatmul.mubr.f32.gmra.mrb[0].mxu0 %v5371
    %v5373 = vpop.f32.mrb[0].mxu0
    %v5374 = vadd.f32 %v5266, %v5373
    %v5375 = vpop.f32.mrb[0].mxu0
    %5376 = vmatprep.mubr.f32.mxu0 0.0
    %v5377 = vand.u32 %v5031, 4294901760
    %v5378 = vsub.f32 %v5031, %v5377
    %5379 = vmatmul.mubr.f32.gmra.mrb[0].mxu0 %v5378
    %v5380 = vpop.f32.mrb[0].mxu0
    %v5381 = vadd.f32 %v5272, %v5380
    %v5382 = vpop.f32.mrb[0].mxu0
    %5383 = vdwg.mxu0
    %5384 = vmatprep.subr.mxu0 0.0
    %v5385 = vand.u32 %v72, 4294901760
    %5386 = vmatpush1.msra.mxu0 %v5385
    %5387 = vmatprep.subr.mxu0 0.0
    %v5388 = vand.u32 %v73, 4294901760
    %5389 = vmatpush1.msra.mxu0 %v5388
    %5390 = vmatprep.subr.mxu0 0.0
    %v5391 = vand.u32 %v74, 4294901760
    %5392 = vmatpush1.msra.mxu0 %v5391
    %5393 = vmatprep.subr.mxu0 0.0
    %v5394 = vand.u32 %v75, 4294901760
    %5395 = vmatpush1.msra.mxu0 %v5394
    %5396 = vmatprep.subr.mxu0 0.0
    %v5397 = vand.u32 %v76, 4294901760
    %5398 = vmatpush1.msra.mxu0 %v5397
    %5399 = vmatprep.subr.mxu0 0.0
    %v5400 = vand.u32 %v77, 4294901760
    %5401 = vmatpush1.msra.mxu0 %v5400
    %5402 = vmatprep.subr.mxu0 0.0
    %v5403 = vand.u32 %v78, 4294901760
    %5404 = vmatpush1.msra.mxu0 %v5403
    %5405 = vmatprep.subr.mxu0 0.0
    %v5406 = vand.u32 %v79, 4294901760
    %5407 = vmatpush1.msra.mxu0 %v5406
    %5408 = vmatprep.subr.mxu0 0.0
    %5409 = vmatpush1.msra.mxu0 0.0
    %5410 = vmatprep.subr.mxu0 0.0
    %5411 = vmatpush1.msra.mxu0 0.0
    %5412 = vmatprep.subr.mxu0 0.0
    %5413 = vmatpush1.msra.mxu0 0.0
    %5414 = vmatprep.subr.mxu0 0.0
    %5415 = vmatpush1.msra.mxu0 0.0
    %5416 = vmatprep.subr.mxu0 0.0
    %5417 = vmatpush1.msra.mxu0 0.0
    %5418 = vmatprep.subr.mxu0 0.0
    %5419 = vmatpush1.msra.mxu0 0.0
    %5420 = vmatprep.subr.mxu0 0.0
    %5421 = vmatpush1.msra.mxu0 0.0
    %5422 = vmatprep.subr.mxu0 0.0
    %5423 = vmatpush1.msra.mxu0 0.0
    %5424 = vmatprep.subr.mxu0 0.0
    %5425 = vmatpush1.msra.mxu0 0.0
    %5426 = vmatprep.subr.mxu0 0.0
    %5427 = vmatpush1.msra.mxu0 0.0
    %5428 = vmatprep.subr.mxu0 0.0
    %5429 = vmatpush1.msra.mxu0 0.0
    %5430 = vmatprep.subr.mxu0 0.0
    %5431 = vmatpush1.msra.mxu0 0.0
    %5432 = vmatprep.subr.mxu0 0.0
    %5433 = vmatpush1.msra.mxu0 0.0
    %5434 = vmatprep.subr.mxu0 0.0
    %5435 = vmatpush1.msra.mxu0 0.0
    %5436 = vmatprep.subr.mxu0 0.0
    %5437 = vmatpush1.msra.mxu0 0.0
    %5438 = vmatprep.subr.mxu0 0.0
    %5439 = vmatpush1.msra.mxu0 0.0
    %5440 = vmatprep.subr.mxu0 0.0
    %5441 = vmatpush1.msra.mxu0 0.0
    %5442 = vmatprep.subr.mxu0 0.0
    %5443 = vmatpush1.msra.mxu0 0.0
    %5444 = vmatprep.subr.mxu0 0.0
    %5445 = vmatpush1.msra.mxu0 0.0
    %5446 = vmatprep.subr.mxu0 0.0
    %5447 = vmatpush1.msra.mxu0 0.0
    %5448 = vmatprep.subr.mxu0 0.0
    %5449 = vmatpush1.msra.mxu0 0.0
    %5450 = vmatprep.subr.mxu0 0.0
    %5451 = vmatpush1.msra.mxu0 0.0
    %5452 = vmatprep.subr.mxu0 0.0
    %5453 = vmatpush1.msra.mxu0 0.0
    %5454 = vmatprep.subr.mxu0 0.0
    %5455 = vmatpush1.msra.mxu0 0.0
    %5456 = vmatprep.mubr.f32.mxu0 0.0
    %v5457 = vand.u32 %v5022, 4294901760
    %v5458 = vsub.f32 %v5022, %v5457
    %v5459 = vand.u32 %v5458, 4294901760
    %5460 = vmatmul.mubr.f32.gmra.mrb[0].mxu0 %v5459
    %v5461 = vpop.f32.mrb[0].mxu0
    %v5462 = vadd.f32 %v5360, %v5461
    %v5463 = vpop.f32.mrb[0].mxu0
    %5464 = vmatprep.mubr.f32.mxu0 0.0
    %v5465 = vand.u32 %v5025, 4294901760
    %v5466 = vsub.f32 %v5025, %v5465
    %v5467 = vand.u32 %v5466, 4294901760
    %5468 = vmatmul.mubr.f32.gmra.mrb[0].mxu0 %v5467
    %v5469 = vpop.f32.mrb[0].mxu0
    %v5470 = vadd.f32 %v5367, %v5469
    %v5471 = vpop.f32.mrb[0].mxu0
    %5472 = vmatprep.mubr.f32.mxu0 0.0
    %v5473 = vand.u32 %v5028, 4294901760
    %v5474 = vsub.f32 %v5028, %v5473
    %v5475 = vand.u32 %v5474, 4294901760
    %5476 = vmatmul.mubr.f32.gmra.mrb[0].mxu0 %v5475
    %v5477 = vpop.f32.mrb[0].mxu0
    %v5478 = vadd.f32 %v5374, %v5477
    %v5479 = vpop.f32.mrb[0].mxu0
    %5480 = vmatprep.mubr.f32.mxu0 0.0
    %v5481 = vand.u32 %v5031, 4294901760
    %v5482 = vsub.f32 %v5031, %v5481
    %v5483 = vand.u32 %v5482, 4294901760
    %5484 = vmatmul.mubr.f32.gmra.mrb[0].mxu0 %v5483
    %v5485 = vpop.f32.mrb[0].mxu0
    %v5486 = vadd.f32 %v5381, %v5485
    %v5487 = vpop.f32.mrb[0].mxu0
    %5488 = vdwg.mxu0
    %5489 = vmatprep.subr.mxu0 0.0
    %v5490 = vand.u32 %v72, 4294901760
    %v5491 = vsub.f32 %v72, %v5490
    %v5492 = vand.u32 %v5491, 4294901760
    %5493 = vmatpush1.msra.mxu0 %v5492
    %5494 = vmatprep.subr.mxu0 0.0
    %v5495 = vand.u32 %v73, 4294901760
    %v5496 = vsub.f32 %v73, %v5495
    %v5497 = vand.u32 %v5496, 4294901760
    %5498 = vmatpush1.msra.mxu0 %v5497
    %5499 = vmatprep.subr.mxu0 0.0
    %v5500 = vand.u32 %v74, 4294901760
    %v5501 = vsub.f32 %v74, %v5500
    %v5502 = vand.u32 %v5501, 4294901760
    %5503 = vmatpush1.msra.mxu0 %v5502
    %5504 = vmatprep.subr.mxu0 0.0
    %v5505 = vand.u32 %v75, 4294901760
    %v5506 = vsub.f32 %v75, %v5505
    %v5507 = vand.u32 %v5506, 4294901760
    %5508 = vmatpush1.msra.mxu0 %v5507
    %5509 = vmatprep.subr.mxu0 0.0
    %v5510 = vand.u32 %v76, 4294901760
    %v5511 = vsub.f32 %v76, %v5510
    %v5512 = vand.u32 %v5511, 4294901760
    %5513 = vmatpush1.msra.mxu0 %v5512
    %5514 = vmatprep.subr.mxu0 0.0
    %v5515 = vand.u32 %v77, 4294901760
    %v5516 = vsub.f32 %v77, %v5515
    %v5517 = vand.u32 %v5516, 4294901760
    %5518 = vmatpush1.msra.mxu0 %v5517
    %5519 = vmatprep.subr.mxu0 0.0
    %v5520 = vand.u32 %v78, 4294901760
    %v5521 = vsub.f32 %v78, %v5520
    %v5522 = vand.u32 %v5521, 4294901760
    %5523 = vmatpush1.msra.mxu0 %v5522
    %5524 = vmatprep.subr.mxu0 0.0
    %v5525 = vand.u32 %v79, 4294901760
    %v5526 = vsub.f32 %v79, %v5525
    %v5527 = vand.u32 %v5526, 4294901760
    %5528 = vmatpush1.msra.mxu0 %v5527
    %5529 = vmatprep.subr.mxu0 0.0
    %5530 = vmatpush1.msra.mxu0 0.0
    %5531 = vmatprep.subr.mxu0 0.0
    %5532 = vmatpush1.msra.mxu0 0.0
    %5533 = vmatprep.subr.mxu0 0.0
    %5534 = vmatpush1.msra.mxu0 0.0
    %5535 = vmatprep.subr.mxu0 0.0
    %5536 = vmatpush1.msra.mxu0 0.0
    %5537 = vmatprep.subr.mxu0 0.0
    %5538 = vmatpush1.msra.mxu0 0.0
    %5539 = vmatprep.subr.mxu0 0.0
    %5540 = vmatpush1.msra.mxu0 0.0
    %5541 = vmatprep.subr.mxu0 0.0
    %5542 = vmatpush1.msra.mxu0 0.0
    %5543 = vmatprep.subr.mxu0 0.0
    %5544 = vmatpush1.msra.mxu0 0.0
    %5545 = vmatprep.subr.mxu0 0.0
    %5546 = vmatpush1.msra.mxu0 0.0
    %5547 = vmatprep.subr.mxu0 0.0
    %5548 = vmatpush1.msra.mxu0 0.0
    %5549 = vmatprep.subr.mxu0 0.0
    %5550 = vmatpush1.msra.mxu0 0.0
    %5551 = vmatprep.subr.mxu0 0.0
    %5552 = vmatpush1.msra.mxu0 0.0
    %5553 = vmatprep.subr.mxu0 0.0
    %5554 = vmatpush1.msra.mxu0 0.0
    %5555 = vmatprep.subr.mxu0 0.0
    %5556 = vmatpush1.msra.mxu0 0.0
    %5557 = vmatprep.subr.mxu0 0.0
    %5558 = vmatpush1.msra.mxu0 0.0
    %5559 = vmatprep.subr.mxu0 0.0
    %5560 = vmatpush1.msra.mxu0 0.0
    %5561 = vmatprep.subr.mxu0 0.0
    %5562 = vmatpush1.msra.mxu0 0.0
    %5563 = vmatprep.subr.mxu0 0.0
    %5564 = vmatpush1.msra.mxu0 0.0
    %5565 = vmatprep.subr.mxu0 0.0
    %5566 = vmatpush1.msra.mxu0 0.0
    %5567 = vmatprep.subr.mxu0 0.0
    %5568 = vmatpush1.msra.mxu0 0.0
    %5569 = vmatprep.subr.mxu0 0.0
    %5570 = vmatpush1.msra.mxu0 0.0
    %5571 = vmatprep.subr.mxu0 0.0
    %5572 = vmatpush1.msra.mxu0 0.0
    %5573 = vmatprep.subr.mxu0 0.0
    %5574 = vmatpush1.msra.mxu0 0.0
    %5575 = vmatprep.subr.mxu0 0.0
    %5576 = vmatpush1.msra.mxu0 0.0
    %5577 = vmatprep.mubr.f32.mxu0 0.0
    %v5578 = vand.u32 %v5022, 4294901760
    %5579 = vmatmul.mubr.f32.gmra.mrb[0].mxu0 %v5578
    %v5580 = vpop.f32.mrb[0].mxu0
    %v5581 = vadd.f32 %v5462, %v5580
    %v5582 = vpop.f32.mrb[0].mxu0
    %5583 = vmatprep.mubr.f32.mxu0 0.0
    %v5584 = vand.u32 %v5025, 4294901760
    %5585 = vmatmul.mubr.f32.gmra.mrb[0].mxu0 %v5584
    %v5586 = vpop.f32.mrb[0].mxu0
    %v5587 = vadd.f32 %v5470, %v5586
    %v5588 = vpop.f32.mrb[0].mxu0
    %5589 = vmatprep.mubr.f32.mxu0 0.0
    %v5590 = vand.u32 %v5028, 4294901760
    %5591 = vmatmul.mubr.f32.gmra.mrb[0].mxu0 %v5590
    %v5592 = vpop.f32.mrb[0].mxu0
    %v5593 = vadd.f32 %v5478, %v5592
    %v5594 = vpop.f32.mrb[0].mxu0
    %5595 = vmatprep.mubr.f32.mxu0 0.0
    %v5596 = vand.u32 %v5031, 4294901760
    %5597 = vmatmul.mubr.f32.gmra.mrb[0].mxu0 %v5596
    %v5598 = vpop.f32.mrb[0].mxu0
    %v5599 = vadd.f32 %v5486, %v5598
    %v5600 = vpop.f32.mrb[0].mxu0
    %5601 = vdwg.mxu0
    %5602 = vmatprep.subr.mxu0 0.0
    %v5603 = vand.u32 %v72, 4294901760
    %5604 = vmatpush1.msra.mxu0 %v5603
    %5605 = vmatprep.subr.mxu0 0.0
    %v5606 = vand.u32 %v73, 4294901760
    %5607 = vmatpush1.msra.mxu0 %v5606
    %5608 = vmatprep.subr.mxu0 0.0
    %v5609 = vand.u32 %v74, 4294901760
    %5610 = vmatpush1.msra.mxu0 %v5609
    %5611 = vmatprep.subr.mxu0 0.0
    %v5612 = vand.u32 %v75, 4294901760
    %5613 = vmatpush1.msra.mxu0 %v5612
    %5614 = vmatprep.subr.mxu0 0.0
    %v5615 = vand.u32 %v76, 4294901760
    %5616 = vmatpush1.msra.mxu0 %v5615
    %5617 = vmatprep.subr.mxu0 0.0
    %v5618 = vand.u32 %v77, 4294901760
    %5619 = vmatpush1.msra.mxu0 %v5618
    %5620 = vmatprep.subr.mxu0 0.0
    %v5621 = vand.u32 %v78, 4294901760
    %5622 = vmatpush1.msra.mxu0 %v5621
    %5623 = vmatprep.subr.mxu0 0.0
    %v5624 = vand.u32 %v79, 4294901760
    %5625 = vmatpush1.msra.mxu0 %v5624
    %5626 = vmatprep.subr.mxu0 0.0
    %5627 = vmatpush1.msra.mxu0 0.0
    %5628 = vmatprep.subr.mxu0 0.0
    %5629 = vmatpush1.msra.mxu0 0.0
    %5630 = vmatprep.subr.mxu0 0.0
    %5631 = vmatpush1.msra.mxu0 0.0
    %5632 = vmatprep.subr.mxu0 0.0
    %5633 = vmatpush1.msra.mxu0 0.0
    %5634 = vmatprep.subr.mxu0 0.0
    %5635 = vmatpush1.msra.mxu0 0.0
    %5636 = vmatprep.subr.mxu0 0.0
    %5637 = vmatpush1.msra.mxu0 0.0
    %5638 = vmatprep.subr.mxu0 0.0
    %5639 = vmatpush1.msra.mxu0 0.0
    %5640 = vmatprep.subr.mxu0 0.0
    %5641 = vmatpush1.msra.mxu0 0.0
    %5642 = vmatprep.subr.mxu0 0.0
    %5643 = vmatpush1.msra.mxu0 0.0
    %5644 = vmatprep.subr.mxu0 0.0
    %5645 = vmatpush1.msra.mxu0 0.0
    %5646 = vmatprep.subr.mxu0 0.0
    %5647 = vmatpush1.msra.mxu0 0.0
    %5648 = vmatprep.subr.mxu0 0.0
    %5649 = vmatpush1.msra.mxu0 0.0
    %5650 = vmatprep.subr.mxu0 0.0
    %5651 = vmatpush1.msra.mxu0 0.0
    %5652 = vmatprep.subr.mxu0 0.0
    %5653 = vmatpush1.msra.mxu0 0.0
    %5654 = vmatprep.subr.mxu0 0.0
    %5655 = vmatpush1.msra.mxu0 0.0
    %5656 = vmatprep.subr.mxu0 0.0
    %5657 = vmatpush1.msra.mxu0 0.0
    %5658 = vmatprep.subr.mxu0 0.0
    %5659 = vmatpush1.msra.mxu0 0.0
    %5660 = vmatprep.subr.mxu0 0.0
    %5661 = vmatpush1.msra.mxu0 0.0
    %5662 = vmatprep.subr.mxu0 0.0
    %5663 = vmatpush1.msra.mxu0 0.0
    %5664 = vmatprep.subr.mxu0 0.0
    %5665 = vmatpush1.msra.mxu0 0.0
    %5666 = vmatprep.subr.mxu0 0.0
    %5667 = vmatpush1.msra.mxu0 0.0
    %5668 = vmatprep.subr.mxu0 0.0
    %5669 = vmatpush1.msra.mxu0 0.0
    %5670 = vmatprep.subr.mxu0 0.0
    %5671 = vmatpush1.msra.mxu0 0.0
    %5672 = vmatprep.subr.mxu0 0.0
    %5673 = vmatpush1.msra.mxu0 0.0
    %5674 = vmatprep.mubr.f32.mxu0 0.0
    %v5675 = vand.u32 %v5022, 4294901760
    %5676 = vmatmul.mubr.f32.gmra.mrb[0].mxu0 %v5675
    %v5677 = vpop.f32.mrb[0].mxu0
    %v5678 = vadd.f32 %v5581, %v5677
    %v5679 = vpop.f32.mrb[0].mxu0
    %5680 = vmatprep.mubr.f32.mxu0 0.0
    %v5681 = vand.u32 %v5025, 4294901760
    %5682 = vmatmul.mubr.f32.gmra.mrb[0].mxu0 %v5681
    %v5683 = vpop.f32.mrb[0].mxu0
    %v5684 = vadd.f32 %v5587, %v5683
    %v5685 = vpop.f32.mrb[0].mxu0
    %5686 = vmatprep.mubr.f32.mxu0 0.0
    %v5687 = vand.u32 %v5028, 4294901760
    %5688 = vmatmul.mubr.f32.gmra.mrb[0].mxu0 %v5687
    %v5689 = vpop.f32.mrb[0].mxu0
    %v5690 = vadd.f32 %v5593, %v5689
    %v5691 = vpop.f32.mrb[0].mxu0
    %5692 = vmatprep.mubr.f32.mxu0 0.0
    %v5693 = vand.u32 %v5031, 4294901760
    %5694 = vmatmul.mubr.f32.gmra.mrb[0].mxu0 %v5693
    %v5695 = vpop.f32.mrb[0].mxu0
    %v5696 = vadd.f32 %v5599, %v5695
    %v5697 = vpop.f32.mrb[0].mxu0
    %5698 = vdwg.mxu0
    %v5699 = vadd.f32 %v4374, %v5678
    %v5700 = vadd.f32 %v4375, %v5684
    %v5701 = vadd.f32 %v4376, %v5690
    %v5702 = vadd.f32 %v4377, %v5696
    %v5703 = vlaneseq
    %v5704 = vshrl.u32 %v5703, 7
    %v5705 = vsub.s32 3, %v5704
    %v5706 = vrot.slane %v80, %v5705
    %v5707 = vadd.f32 %v5699, %v5706
    %v5708 = vadd.f32 %v5700, %v5706
    %v5709 = vadd.f32 %v5701, %v5706
    %v5710 = vadd.f32 %v5702, %v5706
    %v5711 = vsel %vm85, %v5707, 0.0
    %5712 = vadd.xlane.f32.xlu0 %v5711
    %v5713 = vpop.xlane.xlu0 %5712
    %v5714 = vsel %vm85, %v5708, 0.0
    %5715 = vadd.xlane.f32.xlu0 %v5714
    %v5716 = vpop.xlane.xlu0 %5715
    %v5717 = vsel %vm85, %v5709, 0.0
    %5718 = vadd.xlane.f32.xlu0 %v5717
    %v5719 = vpop.xlane.xlu0 %5718
    %v5720 = vsel %vm85, %v5710, 0.0
    %5721 = vadd.xlane.f32.xlu0 %v5720
    %v5722 = vpop.xlane.xlu0 %5721
    %v5723 = vmul.f32 %v5713, %v4321
    %v5724 = vmul.f32 %v5716, %v4321
    %v5725 = vmul.f32 %v5719, %v4321
    %v5726 = vmul.f32 %v5722, %v4321
    %v5727 = vsub.f32 %v5707, %v5723
    %v5728 = vsub.f32 %v5708, %v5724
    %v5729 = vsub.f32 %v5709, %v5725
    %v5730 = vsub.f32 %v5710, %v5726
    %v5731 = vmul.f32 %v5727, %v5727
    %v5732 = vmul.f32 %v5728, %v5728
    %v5733 = vmul.f32 %v5729, %v5729
    %v5734 = vmul.f32 %v5730, %v5730
    %v5735 = vsel %vm85, %v5731, 0.0
    %5736 = vadd.xlane.f32.xlu0 %v5735
    %v5737 = vpop.xlane.xlu0 %5736
    %v5738 = vsel %vm85, %v5732, 0.0
    %5739 = vadd.xlane.f32.xlu0 %v5738
    %v5740 = vpop.xlane.xlu0 %5739
    %v5741 = vsel %vm85, %v5733, 0.0
    %5742 = vadd.xlane.f32.xlu0 %v5741
    %v5743 = vpop.xlane.xlu0 %5742
    %v5744 = vsel %vm85, %v5734, 0.0
    %5745 = vadd.xlane.f32.xlu0 %v5744
    %v5746 = vpop.xlane.xlu0 %5745
    %v5747 = vmul.f32 %v5737, %v4321
    %v5748 = vmul.f32 %v5740, %v4321
    %v5749 = vmul.f32 %v5743, %v4321
    %v5750 = vmul.f32 %v5746, %v4321
    %v5751 = vadd.f32 %v5747, 1e-05
    %v5752 = vadd.f32 %v5748, 1e-05
    %v5753 = vadd.f32 %v5749, 1e-05
    %v5754 = vadd.f32 %v5750, 1e-05
    %v5755 = vrsqrt.pop %v5751
    %v5756 = vrsqrt.pop %v5752
    %v5757 = vrsqrt.pop %v5753
    %v5758 = vrsqrt.pop %v5754
    %v5759 = vmul.f32 %v5727, %v5755
    %v5760 = vmul.f32 %v5728, %v5756
    %v5761 = vmul.f32 %v5729, %v5757
    %v5762 = vmul.f32 %v5730, %v5758
    %v5763 = vlaneseq
    %v5764 = vshrl.u32 %v5763, 7
    %v5765 = vsub.s32 6, %v5764
    %v5766 = vrot.slane %v80, %v5765
    %v5767 = vmul.f32 %v5759, %v5766
    %v5768 = vmul.f32 %v5760, %v5766
    %v5769 = vmul.f32 %v5761, %v5766
    %v5770 = vmul.f32 %v5762, %v5766
    %v5771 = vlaneseq
    %v5772 = vshrl.u32 %v5771, 7
    %v5773 = vsub.s32 7, %v5772
    %v5774 = vrot.slane %v80, %v5773
    %v5775 = vadd.f32 %v5767, %v5774
    %v5776 = vadd.f32 %v5768, %v5774
    %v5777 = vadd.f32 %v5769, %v5774
    %v5778 = vadd.f32 %v5770, %v5774
    %5779 = vst.msk [vmem:[#allocation8] sm:$0xff] %vm85, %v5775
    %5780 = vst.msk [vmem:[#allocation8 + $0x8] sm:$0xff] %vm85, %v5776
    %5781 = vst.msk [vmem:[#allocation8 + $0x10] sm:$0xff] %vm85, %v5777
    %5782 = vst.msk [vmem:[#allocation8 + $0x18] sm:$0xff] %vm85, %v5778
    // Predicated region
    $region26: #{tpu_custom_call.1} parent=1 // pred_check
      _
    $region27: #{tpu_custom_call.1} parent=1 // pred_check_branch
      %5784 = sbr.rel (0) target = $region29
    $region28: #{tpu_custom_call.1} parent=1 // pred_region
      %s5786 = ssub.s32 512, 512
      %5787 = vsyncadd [#allocation4], %s5786
      %s5788 = sshll.u32 [#allocation8], 4
      %s5789 = int_to_ptr.vmem [resolvable:$true] %s5788
      %5794 = dma.vmem_to_hbm [thread:$0]  %s5789, 512, %s3, [#allocation4], 128, 128, 8
    $region29: #{tpu_custom_call.1} parent=1 // pred_fallthru
      _
    // Predicated region
    $region30: #{tpu_custom_call.1} parent=1 // pred_check
      _
    $region31: #{tpu_custom_call.1} parent=1 // pred_check_branch
      %5796 = sbr.rel (0) target = $region33
    $region32: #{tpu_custom_call.1} parent=1 // pred_region
      %5797 = dma.done [#allocation4], 512
    $region33: #{tpu_custom_call.1} parent=1 // pred_fallthru
      _
    %5798 = vsyncpa [#allocation3], 1
    %5799 = vsyncpa [#allocation6], 1
    %5800 = vsyncpa [#allocation4], 1

</llo_original>
